<compile_context>
chip_gen: v6e
topology: v6e:2x2x1
jax: 0.10.0
libtpu: 0.0.40
codegen_flags: <defaults>
</compile_context>

<pallas_src>
import functools

import jax
import jax.numpy as jnp
from jax.experimental import pallas as pl
from jax.experimental.pallas import tpu as pltpu

BN_EPS = 1e-5
KW = 9          # temporal kernel width: Conv2d(kernel_size=(1, 9), padding=(0, 4))
PW = KW // 2    # padding 4 along W


# ----------------------------------------------------------------------------
# Kernel 1: 1x9 temporal conv + folded BN + SiLU + SE global-avg-pool partials
# ----------------------------------------------------------------------------
def _conv_bn_silu_gap_kernel(x_ref, w_ref, scale_ref, shift_ref,
                             t_ref, sum_ref, col_ref, *, w_len):
    # x_ref:     (rows, C)    f32   rows hold whole W-lines (rows % w_len == 0)
    # w_ref:     (KW*C, C)    bf16  tap-major flattened conv weight
    # scale_ref: (1, C)  shift_ref: (1, C)   folded BN + conv bias
    # t_ref:     (rows, C)    bf16  SiLU(BN(conv)) output
    # sum_ref:   (1, C)       f32   running per-batch sum for the SE average pool
    # col_ref:   (rows, KW*C) bf16  im2col scratch built with sublane rolls
    rows, c = x_ref.shape
    xt = x_ref[...]
    # w coordinate of every flattened row (row blocks always start on a W-line).
    w_idx = jax.lax.broadcasted_iota(jnp.int32, (rows, c), 0) % w_len

    for dx in range(KW):                         # static unroll: 9 rolls + masks
        s = dx - PW                              # tap offset along W
        if s == 0:
            col_ref[:, dx * c:(dx + 1) * c] = xt.astype(col_ref.dtype)
        else:
            # lhs[r] = x[r + s]; rows whose source crosses a W-line boundary (the
            # conv's zero padding) or wraps around the block are masked to zero.
            shifted = pltpu.roll(xt, (-s) % rows, axis=0)          # XLU sublane rotate
            valid = jnp.logical_and(w_idx >= -s, w_idx < w_len - s)
            col_ref[:, dx * c:(dx + 1) * c] = jnp.where(
                valid, shifted, 0.0).astype(col_ref.dtype)

    # Single MXU contraction over K = KW*C (bf16 x bf16 -> f32 accumulate).
    acc = jnp.dot(col_ref[...], w_ref[...], preferred_element_type=jnp.float32)
    y = acc * scale_ref[...] + shift_ref[...]        # folded BN / bias (VPU)
    y = y * jax.nn.sigmoid(y)                        # SiLU (EUP + VPU)
    t_ref[...] = y.astype(t_ref.dtype)

    # SE global-average-pool partial sums, accumulated across the row-block axis.
    @pl.when(pl.program_id(1) == 0)
    def _zero():
        sum_ref[...] = jnp.zeros_like(sum_ref)

    sum_ref[...] = sum_ref[...] + jnp.sum(y, axis=0, keepdims=True)


# ----------------------------------------------------------------------------
# Kernel 2: element-wise channel gating + residual  (out = t * gate[b] + x)
# ----------------------------------------------------------------------------
def _se_residual_kernel(gate_ref, t_ref, x_ref, o_ref):
    o_ref[...] = t_ref[...].astype(jnp.float32) * gate_ref[...] + x_ref[...]


# ----------------------------------------------------------------------------
# Generation-aware tiling helpers
# ----------------------------------------------------------------------------
def _vmem_limit_bytes():
    cap = 64 * 1024 * 1024                       # conservative default (v7x per-core)
    try:
        cap = int(getattr(pltpu.get_tpu_info(), "vmem_capacity_bytes", cap))
    except Exception:
        pass
    # headroom for double buffering / compiler scratch; ~48 MiB on v7x, 96 MiB on v5e/v6e
    return min(cap * 3 // 4, 96 * 1024 * 1024)


def _pick_block_rows(H, W, per_row_bytes, budget, cap_rows=2048):
    """Largest row block that holds whole W-lines, divides H*W, satisfies the
    sublane rule (multiple of 8 or full extent) and fits the VMEM budget."""
    HW = H * W
    target = max(W, min(HW, cap_rows, budget // max(per_row_bytes, 1)))
    best = HW                                    # full-extent block is always legal
    for k in range(1, H + 1):
        if H % k:
            continue
        r = k * W
        if r <= target and (r % 8 == 0 or r == HW):
            best = r
    return best


# ----------------------------------------------------------------------------
# Forward wrapper
# ----------------------------------------------------------------------------
def temporal_attention_forward(x, params, conv_block_rows=None,
                               se_block_rows=None, data_format="NCHW"):
    """Forward pass of TemporalAttentionModule.

    x: (B, C, H, W) for data_format="NCHW" (PyTorch layout), or (B, H, W, C) for
    "NHWC" (skips the two HBM layout-transpose passes)."""
    if data_format == "NCHW":
        x = jnp.transpose(x, (0, 2, 3, 1))
    x = x.astype(jnp.float32)
    B, H, W, C = x.shape
    HW = H * W
    x_flat = x.reshape(B, HW, C)

    w2d = params["w"].astype(jnp.bfloat16).reshape(KW * C, C)   # tap-major (KW*C, C)

    vmem_limit = _vmem_limit_bytes()
    rows1 = conv_block_rows if conv_block_rows is not None else _pick_block_rows(
        H, W, per_row_bytes=(2 * 4 + 2 * 2 + 2 * KW + 16) * C, budget=vmem_limit // 2)
    rows2 = se_block_rows if se_block_rows is not None else _pick_block_rows(
        H, W, per_row_bytes=2 * (2 + 4 + 4) * C, budget=vmem_limit // 2)
    assert HW % rows1 == 0 and rows1 % W == 0, (rows1, H, W)
    assert HW % rows2 == 0, (rows2, H, W)

    # --- kernel 1: conv + BN + SiLU + GAP partial sums -------------------------------
    conv_kernel = functools.partial(_conv_bn_silu_gap_kernel, w_len=W)
    temporal, pooled_sum = pl.pallas_call(
        conv_kernel,
        grid=(B, HW // rows1),
        in_specs=(
            pl.BlockSpec((None, rows1, C), lambda b, r: (b, r, 0)),
            pl.BlockSpec((KW * C, C), lambda b, r: (0, 0)),
            pl.BlockSpec((1, C), lambda b, r: (0, 0)),
            pl.BlockSpec((1, C), lambda b, r: (0, 0)),
        ),
        out_specs=(
            pl.BlockSpec((None, rows1, C), lambda b, r: (b, r, 0)),
            pl.BlockSpec((None, 1, C), lambda b, r: (b, 0, 0)),
        ),
        out_shape=(
            jax.ShapeDtypeStruct((B, HW, C), jnp.bfloat16),     # temporal stored bf16
            jax.ShapeDtypeStruct((B, 1, C), jnp.float32),       # per-batch spatial sum
        ),
        scratch_shapes=[pltpu.VMEM((rows1, KW * C), jnp.bfloat16)],
        compiler_params=pltpu.CompilerParams(
            dimension_semantics=("parallel", "arbitrary"),
            vmem_limit_bytes=vmem_limit),
    )(x_flat, w2d, params["scale"], params["shift"])

    # --- SE gate MLP: tiny, degenerate-shape matmuls -> plain JAX --------------------
    hp = jax.lax.Precision.HIGHEST
    pooled = pooled_sum[:, 0, :] * (1.0 / float(HW))                       # (B, C)
    hid = jnp.maximum(jnp.dot(pooled, params["w1"], precision=hp), 0.0)    # (B, mid)
    gate = jax.nn.sigmoid(jnp.dot(hid, params["w2"], precision=hp))        # (B, C)
    gate = gate.reshape(B, 1, C).astype(jnp.float32)

    # --- kernel 2: gated residual (mem-bound, fully parallel, x aliased to output) ---
    out_flat = pl.pallas_call(
        _se_residual_kernel,
        grid=(B, HW // rows2),
        in_specs=(
            pl.BlockSpec((None, 1, C), lambda b, r: (b, 0, 0)),
            pl.BlockSpec((None, rows2, C), lambda b, r: (b, r, 0)),
            pl.BlockSpec((None, rows2, C), lambda b, r: (b, r, 0)),
        ),
        out_specs=pl.BlockSpec((None, rows2, C), lambda b, r: (b, r, 0)),
        out_shape=jax.ShapeDtypeStruct((B, HW, C), jnp.float32),
        input_output_aliases={2: 0},            # write the result over the x_flat buffer
        compiler_params=pltpu.CompilerParams(
            dimension_semantics=("parallel", "parallel"),
            vmem_limit_bytes=vmem_limit),
    )(gate, temporal, x_flat)

    out = out_flat.reshape(B, H, W, C)
    if data_format == "NCHW":
        out = jnp.transpose(out, (0, 3, 1, 2))
    return out


# ----------------------------------------------------------------------------
# Deterministic parameters (eval-mode BN + conv bias folded into scale/shift)
# TODO(synk): training-mode BatchNorm (batch statistics) is not implemented.
# ----------------------------------------------------------------------------
def init_params(key, channels, reduction=16):
    ks = jax.random.split(key, 8)
    mid = max(channels // reduction, 1)
    w = jax.random.normal(ks[0], (KW, channels, channels), jnp.float32) / jnp.sqrt(KW * channels)
    b = 0.02 * jax.random.normal(ks[1], (channels,), jnp.float32)
    gamma = 1.0 + 0.1 * jax.random.normal(ks[2], (channels,), jnp.float32)
    beta = 0.02 * jax.random.normal(ks[3], (channels,), jnp.float32)
    mean = 0.01 * jax.random.normal(ks[4], (channels,), jnp.float32)
    var = 1.0 + 0.05 * jnp.abs(jax.random.normal(ks[5], (channels,), jnp.float32))
    scale = gamma / jnp.sqrt(var + BN_EPS)
    shift = (b - mean) * scale + beta
    w1 = jax.random.normal(ks[6], (channels, mid), jnp.float32) / jnp.sqrt(channels)
    w2 = jax.random.normal(ks[7], (mid, channels), jnp.float32) / jnp.sqrt(mid)
    return {"w": w,
            "scale": scale.reshape(1, channels),
            "shift": shift.reshape(1, channels),
            "w1": w1, "w2": w2}


# ----------------------------------------------------------------------------
# Pure-JAX reference (same math, no Pallas) for a sanity check
# ----------------------------------------------------------------------------
def reference_forward(x_nchw, params):
    x = jnp.transpose(x_nchw, (0, 2, 3, 1)).astype(jnp.float32)
    B, H, W, C = x.shape
    xp = jnp.pad(x, ((0, 0), (0, 0), (PW, PW), (0, 0)))
    hp = jax.lax.Precision.HIGHEST
    y = sum(jnp.einsum("bhwc,co->bhwo", xp[:, :, dx:dx + W, :], params["w"][dx],
                       precision=hp) for dx in range(KW))
    y = y * params["scale"][0] + params["shift"][0]
    t = y * jax.nn.sigmoid(y)                                          # SiLU
    pooled = jnp.mean(t, axis=(1, 2))                                  # (B, C)
    g = jax.nn.sigmoid(jnp.maximum(pooled @ params["w1"], 0.0) @ params["w2"])
    out = t * g[:, None, None, :] + x
    return jnp.transpose(out, (0, 3, 1, 2))


# ----------------------------------------------------------------------------
if __name__ == "__main__":
    key = jax.random.PRNGKey(0)
    kx, kp = jax.random.split(key)
    B, C, H, W = 2, 128, 16, 16                    # channels=128 -> SE hidden = 8
    x = jax.random.normal(kx, (B, C, H, W), jnp.float32)   # PyTorch NCHW layout
    params = init_params(kp, C)

    # Explicit small row blocks (128 / 64 rows) so the cross-block GAP accumulation
    # and the decoupled kernel-2 blocking are both exercised at these tiny shapes.
    fwd = jax.jit(functools.partial(temporal_attention_forward,
                                    conv_block_rows=128, se_block_rows=64))
    out = fwd(x, params)
    jax.block_until_ready(out)

    assert out.shape == (B, C, H, W), out.shape
    assert bool(jnp.all(jnp.isfinite(out)))

    ref = reference_forward(x, params)
    max_err = float(jnp.max(jnp.abs(out - ref)))
    # bf16 MXU operands + bf16 `temporal` storage vs. the f32 reference.
    assert max_err < 1e-1, f"max abs err vs reference: {max_err}"

    print("KERNEL_OK")
</pallas_src>

<mosaic_0001>
module attributes {stable_mosaic.version = 11 : i64} {
  func.func @_conv_bn_silu_gap_kernel(%arg0: i32, %arg1: i32, %arg2: memref<1x128x128xf32, #tpu.memory_space<vmem>>, %arg3: memref<1152x128xbf16, #tpu.memory_space<vmem>>, %arg4: memref<1x128xf32, #tpu.memory_space<vmem>>, %arg5: memref<1x128xf32, #tpu.memory_space<vmem>>, %arg6: memref<1x128x128xbf16, #tpu.memory_space<vmem>>, %arg7: memref<1x1x128xf32, #tpu.memory_space<vmem>>, %arg8: memref<128x1152xbf16, #tpu.memory_space<vmem>>) attributes {dimension_semantics = [#tpu.dimension_semantics<parallel>, #tpu.dimension_semantics<arbitrary>], iteration_bounds = array<i64: 2, 2>, scalar_prefetch = 0 : i64, scratch_operands = 1 : i64, tpu.core_type = #tpu.core_type<tc>, window_params = [{transform_indices = @transform_0, window_bounds = array<i64: 1, 128, 128>}, {pipeline_mode = #tpu.pipeline_mode<synchronous>, transform_indices = @transform_1, window_bounds = array<i64: 1152, 128>}, {pipeline_mode = #tpu.pipeline_mode<synchronous>, transform_indices = @transform_2, window_bounds = array<i64: 1, 128>}, {pipeline_mode = #tpu.pipeline_mode<synchronous>, transform_indices = @transform_3, window_bounds = array<i64: 1, 128>}, {transform_indices = @transform_4, window_bounds = array<i64: 1, 128, 128>}, {transform_indices = @transform_5, window_bounds = array<i64: 1, 1, 128>}]} {
    %c0 = arith.constant 0 : index
    %c0_0 = arith.constant 0 : index
    %c0_1 = arith.constant 0 : index
    %0 = vector.load %arg2[%c0, %c0_0, %c0_1] : memref<1x128x128xf32, #tpu.memory_space<vmem>>, vector<1x128x128xf32>
    %1 = vector.shape_cast %0 : vector<1x128x128xf32> to vector<128x128xf32>
    %2 = tpu.iota {dimensions = array<i32: 0>} : vector<128x128xi32>
    %c16_i32 = arith.constant 16 : i32
    %c0_i32 = arith.constant 0 : i32
    %3 = arith.cmpi eq, %c16_i32, %c0_i32 : i32
    %c1_i32 = arith.constant 1 : i32
    %4 = arith.select %3, %c1_i32, %c16_i32 : i32
    %5 = vector.broadcast %4 : i32 to vector<128x128xi32>
    %6 = arith.remsi %2, %5 : vector<128x128xi32>
    %c0_i32_2 = arith.constant 0 : i32
    %7 = vector.broadcast %c0_i32_2 : i32 to vector<128x128xi32>
    %8 = arith.cmpi ne, %6, %7 : vector<128x128xi32>
    %c0_i32_3 = arith.constant 0 : i32
    %9 = vector.broadcast %c0_i32_3 : i32 to vector<128x128xi32>
    %10 = arith.cmpi slt, %6, %9 : vector<128x128xi32>
    %c0_i32_4 = arith.constant 0 : i32
    %11 = arith.cmpi slt, %4, %c0_i32_4 : i32
    %12 = vector.broadcast %11 : i1 to vector<128x128xi1>
    %13 = vector.broadcast %12 : vector<128x128xi1> to vector<128x128xi1>
    %14 = arith.xori %10, %13 : vector<128x128xi1>
    %15 = arith.andi %14, %8 : vector<128x128xi1>
    %16 = vector.broadcast %4 : i32 to vector<128x128xi32>
    %17 = arith.addi %6, %16 : vector<128x128xi32>
    %18 = arith.select %15, %17, %6 : vector<128x128xi1>, vector<128x128xi32>
    %c4_i32 = arith.constant 4 : i32
    %19 = tpu.dynamic_rotate %1 by %c4_i32 dim 0 : vector<128x128xf32>, i32 -> vector<128x128xf32>
    %c4_i32_5 = arith.constant 4 : i32
    %20 = vector.broadcast %c4_i32_5 : i32 to vector<128x128xi32>
    %21 = arith.cmpi sge, %18, %20 : vector<128x128xi32>
    %c20_i32 = arith.constant 20 : i32
    %22 = vector.broadcast %c20_i32 : i32 to vector<128x128xi32>
    %23 = arith.cmpi slt, %18, %22 : vector<128x128xi32>
    %24 = arith.andi %21, %23 : vector<128x128xi1>
    %cst = arith.constant 0.000000e+00 : f32
    %25 = vector.broadcast %cst : f32 to vector<128x128xf32>
    %26 = arith.select %24, %19, %25 : vector<128x128xi1>, vector<128x128xf32>
    %27 = arith.truncf %26 : vector<128x128xf32> to vector<128x128xbf16>
    %c0_6 = arith.constant 0 : index
    %c0_7 = arith.constant 0 : index
    %28 = vector.load %arg8[%c0_6, %c0_7] : memref<128x1152xbf16, #tpu.memory_space<vmem>>, vector<128x128xbf16>
    tpu.vector_store %arg8[%c0_6, %c0_7], %27 {strides = array<i32>} : memref<128x1152xbf16, #tpu.memory_space<vmem>>, vector<128x128xbf16>,
    %c3_i32 = arith.constant 3 : i32
    %29 = tpu.dynamic_rotate %1 by %c3_i32 dim 0 : vector<128x128xf32>, i32 -> vector<128x128xf32>
    %c3_i32_8 = arith.constant 3 : i32
    %30 = vector.broadcast %c3_i32_8 : i32 to vector<128x128xi32>
    %31 = arith.cmpi sge, %18, %30 : vector<128x128xi32>
    %c19_i32 = arith.constant 19 : i32
    %32 = vector.broadcast %c19_i32 : i32 to vector<128x128xi32>
    %33 = arith.cmpi slt, %18, %32 : vector<128x128xi32>
    %34 = arith.andi %31, %33 : vector<128x128xi1>
    %cst_9 = arith.constant 0.000000e+00 : f32
    %35 = vector.broadcast %cst_9 : f32 to vector<128x128xf32>
    %36 = arith.select %34, %29, %35 : vector<128x128xi1>, vector<128x128xf32>
    %37 = arith.truncf %36 : vector<128x128xf32> to vector<128x128xbf16>
    %c0_10 = arith.constant 0 : index
    %c128 = arith.constant 128 : index
    %38 = vector.load %arg8[%c0_10, %c128] : memref<128x1152xbf16, #tpu.memory_space<vmem>>, vector<128x128xbf16>
    tpu.vector_store %arg8[%c0_10, %c128], %37 {strides = array<i32>} : memref<128x1152xbf16, #tpu.memory_space<vmem>>, vector<128x128xbf16>,
    %c2_i32 = arith.constant 2 : i32
    %39 = tpu.dynamic_rotate %1 by %c2_i32 dim 0 : vector<128x128xf32>, i32 -> vector<128x128xf32>
    %c2_i32_11 = arith.constant 2 : i32
    %40 = vector.broadcast %c2_i32_11 : i32 to vector<128x128xi32>
    %41 = arith.cmpi sge, %18, %40 : vector<128x128xi32>
    %c18_i32 = arith.constant 18 : i32
    %42 = vector.broadcast %c18_i32 : i32 to vector<128x128xi32>
    %43 = arith.cmpi slt, %18, %42 : vector<128x128xi32>
    %44 = arith.andi %41, %43 : vector<128x128xi1>
    %cst_12 = arith.constant 0.000000e+00 : f32
    %45 = vector.broadcast %cst_12 : f32 to vector<128x128xf32>
    %46 = arith.select %44, %39, %45 : vector<128x128xi1>, vector<128x128xf32>
    %47 = arith.truncf %46 : vector<128x128xf32> to vector<128x128xbf16>
    %c0_13 = arith.constant 0 : index
    %c256 = arith.constant 256 : index
    %48 = vector.load %arg8[%c0_13, %c256] : memref<128x1152xbf16, #tpu.memory_space<vmem>>, vector<128x128xbf16>
    tpu.vector_store %arg8[%c0_13, %c256], %47 {strides = array<i32>} : memref<128x1152xbf16, #tpu.memory_space<vmem>>, vector<128x128xbf16>,
    %c1_i32_14 = arith.constant 1 : i32
    %49 = tpu.dynamic_rotate %1 by %c1_i32_14 dim 0 : vector<128x128xf32>, i32 -> vector<128x128xf32>
    %c1_i32_15 = arith.constant 1 : i32
    %50 = vector.broadcast %c1_i32_15 : i32 to vector<128x128xi32>
    %51 = arith.cmpi sge, %18, %50 : vector<128x128xi32>
    %c17_i32 = arith.constant 17 : i32
    %52 = vector.broadcast %c17_i32 : i32 to vector<128x128xi32>
    %53 = arith.cmpi slt, %18, %52 : vector<128x128xi32>
    %54 = arith.andi %51, %53 : vector<128x128xi1>
    %cst_16 = arith.constant 0.000000e+00 : f32
    %55 = vector.broadcast %cst_16 : f32 to vector<128x128xf32>
    %56 = arith.select %54, %49, %55 : vector<128x128xi1>, vector<128x128xf32>
    %57 = arith.truncf %56 : vector<128x128xf32> to vector<128x128xbf16>
    %c0_17 = arith.constant 0 : index
    %c384 = arith.constant 384 : index
    %58 = vector.load %arg8[%c0_17, %c384] : memref<128x1152xbf16, #tpu.memory_space<vmem>>, vector<128x128xbf16>
    tpu.vector_store %arg8[%c0_17, %c384], %57 {strides = array<i32>} : memref<128x1152xbf16, #tpu.memory_space<vmem>>, vector<128x128xbf16>,
    %59 = arith.truncf %1 : vector<128x128xf32> to vector<128x128xbf16>
    %c0_18 = arith.constant 0 : index
    %c512 = arith.constant 512 : index
    %60 = vector.load %arg8[%c0_18, %c512] : memref<128x1152xbf16, #tpu.memory_space<vmem>>, vector<128x128xbf16>
    tpu.vector_store %arg8[%c0_18, %c512], %59 {strides = array<i32>} : memref<128x1152xbf16, #tpu.memory_space<vmem>>, vector<128x128xbf16>,
    %c127_i32 = arith.constant 127 : i32
    %61 = tpu.dynamic_rotate %1 by %c127_i32 dim 0 : vector<128x128xf32>, i32 -> vector<128x128xf32>
    %c-1_i32 = arith.constant -1 : i32
    %62 = vector.broadcast %c-1_i32 : i32 to vector<128x128xi32>
    %63 = arith.cmpi sge, %18, %62 : vector<128x128xi32>
    %c15_i32 = arith.constant 15 : i32
    %64 = vector.broadcast %c15_i32 : i32 to vector<128x128xi32>
    %65 = arith.cmpi slt, %18, %64 : vector<128x128xi32>
    %66 = arith.andi %63, %65 : vector<128x128xi1>
    %cst_19 = arith.constant 0.000000e+00 : f32
    %67 = vector.broadcast %cst_19 : f32 to vector<128x128xf32>
    %68 = arith.select %66, %61, %67 : vector<128x128xi1>, vector<128x128xf32>
    %69 = arith.truncf %68 : vector<128x128xf32> to vector<128x128xbf16>
    %c0_20 = arith.constant 0 : index
    %c640 = arith.constant 640 : index
    %70 = vector.load %arg8[%c0_20, %c640] : memref<128x1152xbf16, #tpu.memory_space<vmem>>, vector<128x128xbf16>
    tpu.vector_store %arg8[%c0_20, %c640], %69 {strides = array<i32>} : memref<128x1152xbf16, #tpu.memory_space<vmem>>, vector<128x128xbf16>,
    %c126_i32 = arith.constant 126 : i32
    %71 = tpu.dynamic_rotate %1 by %c126_i32 dim 0 : vector<128x128xf32>, i32 -> vector<128x128xf32>
    %c-2_i32 = arith.constant -2 : i32
    %72 = vector.broadcast %c-2_i32 : i32 to vector<128x128xi32>
    %73 = arith.cmpi sge, %18, %72 : vector<128x128xi32>
    %c14_i32 = arith.constant 14 : i32
    %74 = vector.broadcast %c14_i32 : i32 to vector<128x128xi32>
    %75 = arith.cmpi slt, %18, %74 : vector<128x128xi32>
    %76 = arith.andi %73, %75 : vector<128x128xi1>
    %cst_21 = arith.constant 0.000000e+00 : f32
    %77 = vector.broadcast %cst_21 : f32 to vector<128x128xf32>
    %78 = arith.select %76, %71, %77 : vector<128x128xi1>, vector<128x128xf32>
    %79 = arith.truncf %78 : vector<128x128xf32> to vector<128x128xbf16>
    %c0_22 = arith.constant 0 : index
    %c768 = arith.constant 768 : index
    %80 = vector.load %arg8[%c0_22, %c768] : memref<128x1152xbf16, #tpu.memory_space<vmem>>, vector<128x128xbf16>
    tpu.vector_store %arg8[%c0_22, %c768], %79 {strides = array<i32>} : memref<128x1152xbf16, #tpu.memory_space<vmem>>, vector<128x128xbf16>,
    %c125_i32 = arith.constant 125 : i32
    %81 = tpu.dynamic_rotate %1 by %c125_i32 dim 0 : vector<128x128xf32>, i32 -> vector<128x128xf32>
    %c-3_i32 = arith.constant -3 : i32
    %82 = vector.broadcast %c-3_i32 : i32 to vector<128x128xi32>
    %83 = arith.cmpi sge, %18, %82 : vector<128x128xi32>
    %c13_i32 = arith.constant 13 : i32
    %84 = vector.broadcast %c13_i32 : i32 to vector<128x128xi32>
    %85 = arith.cmpi slt, %18, %84 : vector<128x128xi32>
    %86 = arith.andi %83, %85 : vector<128x128xi1>
    %cst_23 = arith.constant 0.000000e+00 : f32
    %87 = vector.broadcast %cst_23 : f32 to vector<128x128xf32>
    %88 = arith.select %86, %81, %87 : vector<128x128xi1>, vector<128x128xf32>
    %89 = arith.truncf %88 : vector<128x128xf32> to vector<128x128xbf16>
    %c0_24 = arith.constant 0 : index
    %c896 = arith.constant 896 : index
    %90 = vector.load %arg8[%c0_24, %c896] : memref<128x1152xbf16, #tpu.memory_space<vmem>>, vector<128x128xbf16>
    tpu.vector_store %arg8[%c0_24, %c896], %89 {strides = array<i32>} : memref<128x1152xbf16, #tpu.memory_space<vmem>>, vector<128x128xbf16>,
    %c124_i32 = arith.constant 124 : i32
    %91 = tpu.dynamic_rotate %1 by %c124_i32 dim 0 : vector<128x128xf32>, i32 -> vector<128x128xf32>
    %c-4_i32 = arith.constant -4 : i32
    %92 = vector.broadcast %c-4_i32 : i32 to vector<128x128xi32>
    %93 = arith.cmpi sge, %18, %92 : vector<128x128xi32>
    %c12_i32 = arith.constant 12 : i32
    %94 = vector.broadcast %c12_i32 : i32 to vector<128x128xi32>
    %95 = arith.cmpi slt, %18, %94 : vector<128x128xi32>
    %96 = arith.andi %93, %95 : vector<128x128xi1>
    %cst_25 = arith.constant 0.000000e+00 : f32
    %97 = vector.broadcast %cst_25 : f32 to vector<128x128xf32>
    %98 = arith.select %96, %91, %97 : vector<128x128xi1>, vector<128x128xf32>
    %99 = arith.truncf %98 : vector<128x128xf32> to vector<128x128xbf16>
    %c0_26 = arith.constant 0 : index
    %c1024 = arith.constant 1024 : index
    %100 = vector.load %arg8[%c0_26, %c1024] : memref<128x1152xbf16, #tpu.memory_space<vmem>>, vector<128x128xbf16>
    tpu.vector_store %arg8[%c0_26, %c1024], %99 {strides = array<i32>} : memref<128x1152xbf16, #tpu.memory_space<vmem>>, vector<128x128xbf16>,
    %c0_27 = arith.constant 0 : index
    %c0_28 = arith.constant 0 : index
    %101 = vector.load %arg8[%c0_27, %c0_28] : memref<128x1152xbf16, #tpu.memory_space<vmem>>, vector<128x1152xbf16>
    %c0_29 = arith.constant 0 : index
    %c0_30 = arith.constant 0 : index
    %102 = vector.load %arg3[%c0_29, %c0_30] : memref<1152x128xbf16, #tpu.memory_space<vmem>>, vector<1152x128xbf16>
    %cst_31 = arith.constant dense<0.000000e+00> : vector<128x128xf32>
    %103 = tpu.matmul %101, %102, %cst_31 {dimension_numbers = #tpu.dot_dimension_numbers<[1], [0], [0], [1], [0, 0, 1, 1], [], []>} : vector<128x1152xbf16>, vector<1152x128xbf16>, vector<128x128xf32> -> vector<128x128xf32>
    %c0_32 = arith.constant 0 : index
    %c0_33 = arith.constant 0 : index
    %104 = vector.load %arg4[%c0_32, %c0_33] : memref<1x128xf32, #tpu.memory_space<vmem>>, vector<1x128xf32>
    %105 = vector.broadcast %104 : vector<1x128xf32> to vector<128x128xf32>
    %106 = arith.mulf %103, %105 : vector<128x128xf32>
    %c0_34 = arith.constant 0 : index
    %c0_35 = arith.constant 0 : index
    %107 = vector.load %arg5[%c0_34, %c0_35] : memref<1x128xf32, #tpu.memory_space<vmem>>, vector<1x128xf32>
    %108 = vector.broadcast %107 : vector<1x128xf32> to vector<128x128xf32>
    %109 = arith.addf %106, %108 : vector<128x128xf32>
    %110 = arith.negf %109 : vector<128x128xf32>
    %111 = math.exp %110 : vector<128x128xf32>
    %cst_36 = arith.constant 1.000000e+00 : f32
    %112 = vector.broadcast %cst_36 : f32 to vector<128x128xf32>
    %113 = arith.addf %112, %111 : vector<128x128xf32>
    %114 = arith.divf %112, %113 : vector<128x128xf32>
    %115 = arith.mulf %109, %114 : vector<128x128xf32>
    %116 = arith.truncf %115 : vector<128x128xf32> to vector<128x128xbf16>
    %c0_37 = arith.constant 0 : index
    %c0_38 = arith.constant 0 : index
    %c0_39 = arith.constant 0 : index
    %117 = vector.load %arg6[%c0_37, %c0_38, %c0_39] : memref<1x128x128xbf16, #tpu.memory_space<vmem>>, vector<1x128x128xbf16>
    %118 = vector.shape_cast %117 : vector<1x128x128xbf16> to vector<128x128xbf16>
    %119 = vector.shape_cast %116 : vector<128x128xbf16> to vector<1x128x128xbf16>
    tpu.vector_store %arg6[%c0_37, %c0_38, %c0_39], %119 {strides = array<i32>} : memref<1x128x128xbf16, #tpu.memory_space<vmem>>, vector<1x128x128xbf16>,
    %c0_i32_40 = arith.constant 0 : i32
    %120 = arith.cmpi eq, %arg1, %c0_i32_40 : i32
    %121 = arith.extui %120 : i1 to i32
    %c0_i32_41 = arith.constant 0 : i32
    %122 = arith.cmpi ne, %121, %c0_i32_41 : i32
    scf.if %122 {
      %cst_49 = arith.constant 0.000000e+00 : f32
      %131 = vector.broadcast %cst_49 : f32 to vector<1x128xf32>
      %c0_50 = arith.constant 0 : index
      %c0_51 = arith.constant 0 : index
      %c0_52 = arith.constant 0 : index
      %132 = vector.load %arg7[%c0_50, %c0_51, %c0_52] : memref<1x1x128xf32, #tpu.memory_space<vmem>>, vector<1x1x128xf32>
      %133 = vector.shape_cast %132 : vector<1x1x128xf32> to vector<1x128xf32>
      %134 = vector.shape_cast %131 : vector<1x128xf32> to vector<1x1x128xf32>
      tpu.vector_store %arg7[%c0_50, %c0_51, %c0_52], %134 {strides = array<i32>} : memref<1x1x128xf32, #tpu.memory_space<vmem>>, vector<1x1x128xf32>,
    } else {
    }
    %c0_42 = arith.constant 0 : index
    %c0_43 = arith.constant 0 : index
    %c0_44 = arith.constant 0 : index
    %123 = vector.load %arg7[%c0_42, %c0_43, %c0_44] : memref<1x1x128xf32, #tpu.memory_space<vmem>>, vector<1x1x128xf32>
    %124 = vector.shape_cast %123 : vector<1x1x128xf32> to vector<1x128xf32>
    %cst_45 = arith.constant dense<0.000000e+00> : vector<128xf32>
    %125 = vector.multi_reduction <add>, %115, %cst_45 [0] : vector<128x128xf32> to vector<128xf32>
    %126 = vector.shape_cast %125 : vector<128xf32> to vector<1x128xf32>
    %127 = arith.addf %124, %126 : vector<1x128xf32>
    %c0_46 = arith.constant 0 : index
    %c0_47 = arith.constant 0 : index
    %c0_48 = arith.constant 0 : index
    %128 = vector.load %arg7[%c0_46, %c0_47, %c0_48] : memref<1x1x128xf32, #tpu.memory_space<vmem>>, vector<1x1x128xf32>
    %129 = vector.shape_cast %128 : vector<1x1x128xf32> to vector<1x128xf32>
    %130 = vector.shape_cast %127 : vector<1x128xf32> to vector<1x1x128xf32>
    tpu.vector_store %arg7[%c0_46, %c0_47, %c0_48], %130 {strides = array<i32>} : memref<1x1x128xf32, #tpu.memory_space<vmem>>, vector<1x1x128xf32>,
    return
  }
  func.func @transform_0(%arg0: i32, %arg1: i32) -> (i32, i32, i32) {
    %c0_i32 = arith.constant 0 : i32
    %c0_i32_0 = arith.constant 0 : i32
    return %arg0, %arg1, %c0_i32 : i32, i32, i32
  }
  func.func @transform_1(%arg0: i32, %arg1: i32) -> (i32, i32) {
    %c0_i32 = arith.constant 0 : i32
    %c0_i32_0 = arith.constant 0 : i32
    %c0_i32_1 = arith.constant 0 : i32
    return %c0_i32, %c0_i32_0 : i32, i32
  }
  func.func @transform_2(%arg0: i32, %arg1: i32) -> (i32, i32) {
    %c0_i32 = arith.constant 0 : i32
    %c0_i32_0 = arith.constant 0 : i32
    %c0_i32_1 = arith.constant 0 : i32
    return %c0_i32, %c0_i32_0 : i32, i32
  }
  func.func @transform_3(%arg0: i32, %arg1: i32) -> (i32, i32) {
    %c0_i32 = arith.constant 0 : i32
    %c0_i32_0 = arith.constant 0 : i32
    %c0_i32_1 = arith.constant 0 : i32
    return %c0_i32, %c0_i32_0 : i32, i32
  }
  func.func @transform_4(%arg0: i32, %arg1: i32) -> (i32, i32, i32) {
    %c0_i32 = arith.constant 0 : i32
    %c0_i32_0 = arith.constant 0 : i32
    return %arg0, %arg1, %c0_i32 : i32, i32, i32
  }
  func.func @transform_5(%arg0: i32, %arg1: i32) -> (i32, i32, i32) {
    %c0_i32 = arith.constant 0 : i32
    %c0_i32_0 = arith.constant 0 : i32
    %c0_i32_1 = arith.constant 0 : i32
    return %arg0, %c0_i32, %c0_i32_0 : i32, i32, i32
  }
}

module attributes {stable_mosaic.version = 11 : i64} {
  func.func @_se_residual_kernel(%arg0: i32, %arg1: i32, %arg2: memref<1x1x128xf32, #tpu.memory_space<vmem>>, %arg3: memref<1x64x128xbf16, #tpu.memory_space<vmem>>, %arg4: memref<1x64x128xf32, #tpu.memory_space<vmem>>, %arg5: memref<1x64x128xf32, #tpu.memory_space<vmem>>) attributes {dimension_semantics = [#tpu.dimension_semantics<parallel>, #tpu.dimension_semantics<parallel>], iteration_bounds = array<i64: 2, 4>, scalar_prefetch = 0 : i64, scratch_operands = 0 : i64, tpu.core_type = #tpu.core_type<tc>, window_params = [{transform_indices = @transform_0, window_bounds = array<i64: 1, 1, 128>}, {transform_indices = @transform_1, window_bounds = array<i64: 1, 64, 128>}, {transform_indices = @transform_2, window_bounds = array<i64: 1, 64, 128>}, {transform_indices = @transform_3, window_bounds = array<i64: 1, 64, 128>}]} {
    %c0 = arith.constant 0 : index
    %c0_0 = arith.constant 0 : index
    %c0_1 = arith.constant 0 : index
    %0 = vector.load %arg3[%c0, %c0_0, %c0_1] : memref<1x64x128xbf16, #tpu.memory_space<vmem>>, vector<1x64x128xbf16>
    %1 = vector.shape_cast %0 : vector<1x64x128xbf16> to vector<64x128xbf16>
    %2 = arith.extf %1 : vector<64x128xbf16> to vector<64x128xf32>
    %c0_2 = arith.constant 0 : index
    %c0_3 = arith.constant 0 : index
    %c0_4 = arith.constant 0 : index
    %3 = vector.load %arg2[%c0_2, %c0_3, %c0_4] : memref<1x1x128xf32, #tpu.memory_space<vmem>>, vector<1x1x128xf32>
    %4 = vector.shape_cast %3 : vector<1x1x128xf32> to vector<1x128xf32>
    %5 = vector.broadcast %4 : vector<1x128xf32> to vector<64x128xf32>
    %6 = arith.mulf %2, %5 : vector<64x128xf32>
    %c0_5 = arith.constant 0 : index
    %c0_6 = arith.constant 0 : index
    %c0_7 = arith.constant 0 : index
    %7 = vector.load %arg4[%c0_5, %c0_6, %c0_7] : memref<1x64x128xf32, #tpu.memory_space<vmem>>, vector<1x64x128xf32>
    %8 = vector.shape_cast %7 : vector<1x64x128xf32> to vector<64x128xf32>
    %9 = arith.addf %6, %8 : vector<64x128xf32>
    %c0_8 = arith.constant 0 : index
    %c0_9 = arith.constant 0 : index
    %c0_10 = arith.constant 0 : index
    %10 = vector.load %arg5[%c0_8, %c0_9, %c0_10] : memref<1x64x128xf32, #tpu.memory_space<vmem>>, vector<1x64x128xf32>
    %11 = vector.shape_cast %10 : vector<1x64x128xf32> to vector<64x128xf32>
    %12 = vector.shape_cast %9 : vector<64x128xf32> to vector<1x64x128xf32>
    tpu.vector_store %arg5[%c0_8, %c0_9, %c0_10], %12 {strides = array<i32>} : memref<1x64x128xf32, #tpu.memory_space<vmem>>, vector<1x64x128xf32>,
    return
  }
  func.func @transform_0(%arg0: i32, %arg1: i32) -> (i32, i32, i32) {
    %c0_i32 = arith.constant 0 : i32
    %c0_i32_0 = arith.constant 0 : i32
    %c0_i32_1 = arith.constant 0 : i32
    return %arg0, %c0_i32, %c0_i32_0 : i32, i32, i32
  }
  func.func @transform_1(%arg0: i32, %arg1: i32) -> (i32, i32, i32) {
    %c0_i32 = arith.constant 0 : i32
    %c0_i32_0 = arith.constant 0 : i32
    return %arg0, %arg1, %c0_i32 : i32, i32, i32
  }
  func.func @transform_2(%arg0: i32, %arg1: i32) -> (i32, i32, i32) {
    %c0_i32 = arith.constant 0 : i32
    %c0_i32_0 = arith.constant 0 : i32
    return %arg0, %arg1, %c0_i32 : i32, i32, i32
  }
  func.func @transform_3(%arg0: i32, %arg1: i32) -> (i32, i32, i32) {
    %c0_i32 = arith.constant 0 : i32
    %c0_i32_0 = arith.constant 0 : i32
    return %arg0, %arg1, %c0_i32 : i32, i32, i32
  }
}

</mosaic_0001>

<llo_original>
// kernel: temporal_attention_forward.3
$region0: #{temporal_attention_forward.3}
  #allocation0 [shape = 'u32[]', space=smem, size = 0x4, offset = 0x4, fixed_abs, tag = 'smem constant byte address 0x4 - core index']
  #allocation1 [shape = 'u32[144,128]{1,0:T(1,128)}', space=vmem, size = 0x12000, scoped, tag = 'internal scratch']
  %s0 = inlined_call_operand.vmem [shape: f32[2,1,128], index: 0, kind: input, shape index: {}]
  %s1 = inlined_call_operand.vmem [shape: bf16[2,256,128], index: 1, kind: input, shape index: {}]
  %s2 = inlined_call_operand.vmem [shape: f32[2,256,128], index: 2, kind: input, shape index: {}, may-alias: {2,3}]
  %s3 = inlined_call_operand.vmem [shape: f32[2,256,128], index: 3, kind: output, shape index: {}, may-alias: {2,3}]
  %s4 = sld [smem:[#allocation0]]
  $region45: #{temporal_attention_forward.3} parent=0
    _
  %s6 = ssub.s32 1, %s4
  %s7 = scalar_select 0, %s6, %s4
  loop: start=0, step=1, limit=10
  $region2: #{temporal_attention_forward.3} parent=0 // loop_pre_header
    _
  $region3: #{temporal_attention_forward.3} parent=0 // loop_header
    %s9 = sphi 0, %s13
    %p10 = scmp.ge.s32.totalorder %s9, 10
    %s16 = sphi 0, %s28
    %s17 = sphi 0, %s24
    %s18 = sphi 0, %s16
    %s19 = sphi 0, %s17
    %s20 = sphi 0, %s18
    %s21 = sphi 0, %s19
    %s31 = sphi 0, %s33
    %s34 = sphi 0, %s31
    %s35 = sphi 0, %s34
    %s51 = sphi 0, %s35
    %s59 = sphi 0, %s61
    %s62 = sphi 0, %s59
    %s63 = sphi 0, %s62
    %s79 = sphi 0, %s63
    %s87 = sphi 0, %s89
    %s90 = sphi 0, %s87
    %s91 = sphi 0, %s90
    %s107 = sphi 0, %s91
    %s115 = sphi 0, %s117
    %s118 = sphi 0, %s115
    %s119 = sphi 0, %s118
    %s135 = sphi 0, %s119
  $region4: #{temporal_attention_forward.3} parent=0 // loop_header_branch
    %12 = sbr.rel (%p10) target = $region8
  $region5: #{temporal_attention_forward.3} parent=0 // loop_body
    %s14 = ssub.s32 %s9, 1
    %s15 = ssub.s32 %s9, 2
    %s22 = sadd.s32 1, %s17
    %p23 = scmp.ge.s32.totalorder %s22, 4
    %s24 = scalar_select %p23, 0, %s22
    %s25 = sadd.s32 1, %s16
    %s26 = scalar_select %p23, %s25, %s16
    %p27 = scmp.ge.s32.totalorder %s26, 2
    %s28 = scalar_select %p27, 0, %s26
    %s29 = ssub.s32 %s16, %s28
    %p30 = scmp.eq.s32.totalorder %s29, 0
    %s32 = sadd.s32 %s31, 1
    %s33 = scalar_select %p30, %s31, %s32
    %p36 = pneg %p30
    %p37 = scmp.eq.s32.totalorder %s9, 7
    %p38 = por %p36, %p37
    %p39 = scmp.ne.s32.totalorder %s31, %s34
    %p40 = scmp.eq.s32.totalorder %s9, 0
    %p41 = por %p39, %p40
    %p42 = scmp.ne.s32.totalorder %s31, %s34
    %p43 = scmp.eq.s32.totalorder %s14, 7
    %p44 = por %p42, %p43
    %p45 = scmp.ne.s32.totalorder %s34, %s35
    %p46 = scmp.eq.s32.totalorder %s14, 0
    %p47 = por %p45, %p46
    %p48 = scmp.ne.s32.totalorder %s34, %s35
    %p49 = scmp.eq.s32.totalorder %s15, 7
    %p50 = por %p48, %p49
    %p52 = scmp.ne.s32.totalorder %s35, %s51
    %p53 = scmp.eq.s32.totalorder %s15, 0
    %p54 = por %p52, %p53
    %s55 = ssub.s32 %s16, %s28
    %s56 = ssub.s32 %s17, %s24
    %s57 = sor.u32 %s55, %s56
    %p58 = scmp.eq.s32.totalorder %s57, 0
    %s60 = sadd.s32 %s59, 1
    %s61 = scalar_select %p58, %s59, %s60
    %p64 = pneg %p58
    %p65 = scmp.eq.s32.totalorder %s9, 7
    %p66 = por %p64, %p65
    %p67 = scmp.ne.s32.totalorder %s59, %s62
    %p68 = scmp.eq.s32.totalorder %s9, 0
    %p69 = por %p67, %p68
    %p70 = scmp.ne.s32.totalorder %s59, %s62
    %p71 = scmp.eq.s32.totalorder %s14, 7
    %p72 = por %p70, %p71
    %p73 = scmp.ne.s32.totalorder %s62, %s63
    %p74 = scmp.eq.s32.totalorder %s14, 0
    %p75 = por %p73, %p74
    %p76 = scmp.ne.s32.totalorder %s62, %s63
    %p77 = scmp.eq.s32.totalorder %s15, 7
    %p78 = por %p76, %p77
    %p80 = scmp.ne.s32.totalorder %s63, %s79
    %p81 = scmp.eq.s32.totalorder %s15, 0
    %p82 = por %p80, %p81
    %s83 = ssub.s32 %s16, %s28
    %s84 = ssub.s32 %s17, %s24
    %s85 = sor.u32 %s83, %s84
    %p86 = scmp.eq.s32.totalorder %s85, 0
    %s88 = sadd.s32 %s87, 1
    %s89 = scalar_select %p86, %s87, %s88
    %p92 = pneg %p86
    %p93 = scmp.eq.s32.totalorder %s9, 7
    %p94 = por %p92, %p93
    %p95 = scmp.ne.s32.totalorder %s87, %s90
    %p96 = scmp.eq.s32.totalorder %s9, 0
    %p97 = por %p95, %p96
    %p98 = scmp.ne.s32.totalorder %s87, %s90
    %p99 = scmp.eq.s32.totalorder %s14, 7
    %p100 = por %p98, %p99
    %p101 = scmp.ne.s32.totalorder %s90, %s91
    %p102 = scmp.eq.s32.totalorder %s14, 0
    %p103 = por %p101, %p102
    %p104 = scmp.ne.s32.totalorder %s90, %s91
    %p105 = scmp.eq.s32.totalorder %s15, 7
    %p106 = por %p104, %p105
    %p108 = scmp.ne.s32.totalorder %s91, %s107
    %p109 = scmp.eq.s32.totalorder %s15, 0
    %p110 = por %p108, %p109
    %s111 = ssub.s32 %s16, %s28
    %s112 = ssub.s32 %s17, %s24
    %s113 = sor.u32 %s111, %s112
    %p114 = scmp.eq.s32.totalorder %s113, 0
    %s116 = sadd.s32 %s115, 1
    %s117 = scalar_select %p114, %s115, %s116
    %p120 = pneg %p114
    %p121 = scmp.eq.s32.totalorder %s9, 7
    %p122 = por %p120, %p121
    %p123 = scmp.ne.s32.totalorder %s115, %s118
    %p124 = scmp.eq.s32.totalorder %s9, 0
    %p125 = por %p123, %p124
    %p126 = scmp.ne.s32.totalorder %s115, %s118
    %p127 = scmp.eq.s32.totalorder %s14, 7
    %p128 = por %p126, %p127
    %p129 = scmp.ne.s32.totalorder %s118, %s119
    %p130 = scmp.eq.s32.totalorder %s14, 0
    %p131 = por %p129, %p130
    %p132 = scmp.ne.s32.totalorder %s118, %s119
    %p133 = scmp.eq.s32.totalorder %s15, 7
    %p134 = por %p132, %p133
    %p136 = scmp.ne.s32.totalorder %s119, %s135
    %p137 = scmp.eq.s32.totalorder %s15, 0
    %p138 = por %p136, %p137
    %p139 = scmp.le.s32.totalorder 1, %s9
    %p140 = scmp.lt.s32.totalorder %s9, 9
    %p141 = pnand %p139, %p140
    %p142 = pneg %p141
    // Predicated region
    $region9: #{temporal_attention_forward.3} parent=5 // pred_check
      _
    $region10: #{temporal_attention_forward.3} parent=5 // pred_check_branch
      %144 = sbr.rel (%p141) target = $region12
    $region11: #{temporal_attention_forward.3} parent=5 // pred_region
      %s145 = ssub.s32 %s9, 1
    $region12: #{temporal_attention_forward.3} parent=5 // pred_fallthru
      _
    %p146 = scmp.lt.s32.totalorder %s9, 8
    // Predicated region
    $region13: #{temporal_attention_forward.3} parent=5 // pred_check
      %p147 = pneg %p146
    $region14: #{temporal_attention_forward.3} parent=5 // pred_check_branch
      %149 = sbr.rel (%p147) target = $region16
    $region15: #{temporal_attention_forward.3} parent=5 // pred_region
      // Predicated region
      $region17: #{temporal_attention_forward.3} parent=15 // pred_check
        %p150 = pneg %p41
      $region18: #{temporal_attention_forward.3} parent=15 // pred_check_branch
        %152 = sbr.rel (%p150) target = $region20
      $region19: #{temporal_attention_forward.3} parent=15 // pred_region
        %p153 = scmp.lt.s32.totalorder %s16, 1
        %s154 = scalar_select %p153, %s16, 1
        %s155 = scalar_lea.vmem %s0, %s154
      $region20: #{temporal_attention_forward.3} parent=15 // pred_fallthru
        _
      // Predicated region
      $region21: #{temporal_attention_forward.3} parent=15 // pred_check
        %p156 = pneg %p69
      $region22: #{temporal_attention_forward.3} parent=15 // pred_check_branch
        %158 = sbr.rel (%p156) target = $region24
      $region23: #{temporal_attention_forward.3} parent=15 // pred_region
        %s159 = smul.u32 8, %s17
        %p160 = scmp.lt.s32.totalorder %s16, 1
        %s161 = scalar_select %p160, %s16, 1
        %p162 = scmp.lt.s32.totalorder %s159, 31
        %s163 = scalar_select %p162, %s159, 31
        %s164 = smul.addr %s161, 32
        %s165 = sadd.s32 %s163, %s164
        %s166 = smul.addr %s165, 4
        %s167 = scalar_lea.vmem %s1, %s166
        %s168 = smul.u32 8, %s17
      $region24: #{temporal_attention_forward.3} parent=15 // pred_fallthru
        _
      // Predicated region
      $region25: #{temporal_attention_forward.3} parent=15 // pred_check
        %p169 = pneg %p97
      $region26: #{temporal_attention_forward.3} parent=15 // pred_check_branch
        %171 = sbr.rel (%p169) target = $region28
      $region27: #{temporal_attention_forward.3} parent=15 // pred_region
        %s172 = smul.u32 8, %s17
        %p173 = scmp.lt.s32.totalorder %s16, 1
        %s174 = scalar_select %p173, %s16, 1
        %p175 = scmp.lt.s32.totalorder %s172, 31
        %s176 = scalar_select %p175, %s172, 31
        %s177 = smul.addr %s174, 32
        %s178 = sadd.s32 %s176, %s177
        %s179 = smul.addr %s178, 8
        %s180 = scalar_lea.vmem %s2, %s179
        %s181 = smul.u32 8, %s17
      $region28: #{temporal_attention_forward.3} parent=15 // pred_fallthru
        _
    $region16: #{temporal_attention_forward.3} parent=5 // pred_fallthru
      _
    %p182 = scmp.le.s32.totalorder 1, %s9
    %p183 = scmp.lt.s32.totalorder %s9, 9
    %p184 = pnand %p182, %p183
    %p185 = pneg %p184
    // Predicated region
    $region29: #{temporal_attention_forward.3} parent=5 // pred_check
      _
    $region30: #{temporal_attention_forward.3} parent=5 // pred_check_branch
      %187 = sbr.rel (%p184) target = $region32
    $region31: #{temporal_attention_forward.3} parent=5 // pred_region
      %s188 = ssub.s32 %s9, 1
      %p189 = scmp.lt.s32.totalorder %s18, 1
      %s190 = scalar_select %p189, %s18, 1
      %s191 = scalar_lea.vmem %s0, %s190
      %p192 = pneg %p47
      %p193 = pneg %p44
      %s194 = smul.u32 8, %s19
      %p195 = scmp.lt.s32.totalorder %s18, 1
      %s196 = scalar_select %p195, %s18, 1
      %p197 = scmp.lt.s32.totalorder %s194, 31
      %s198 = scalar_select %p197, %s194, 31
      %s199 = smul.addr %s196, 32
      %s200 = sadd.s32 %s198, %s199
      %s201 = smul.addr %s200, 4
      %s202 = scalar_lea.vmem %s1, %s201
      %p203 = pneg %p75
      %p204 = pneg %p72
      %s205 = smul.u32 8, %s19
      %p206 = scmp.lt.s32.totalorder %s18, 1
      %s207 = scalar_select %p206, %s18, 1
      %p208 = scmp.lt.s32.totalorder %s205, 31
      %s209 = scalar_select %p208, %s205, 31
      %s210 = smul.addr %s207, 32
      %s211 = sadd.s32 %s209, %s210
      %s212 = smul.addr %s211, 8
      %s213 = scalar_lea.vmem %s2, %s212
      %p214 = pneg %p103
      %p215 = pneg %p100
      %p216 = pneg %p131
      %p217 = pneg %p128
      %s218 = smul.u32 8, %s19
      %p219 = scmp.lt.s32.totalorder %s18, 1
      %s220 = scalar_select %p219, %s18, 1
      %p221 = scmp.lt.s32.totalorder %s218, 31
      %s222 = scalar_select %p221, %s218, 31
      %s223 = smul.addr %s220, 32
      %s224 = sadd.s32 %s222, %s223
      %s225 = smul.addr %s224, 8
      %s226 = scalar_lea.vmem %s3, %s225
      %p227 = scmp.lt.s32.totalorder %s18, 1
      %s228 = scalar_select %p227, %s18, 1
      %s229 = scalar_lea.vmem %s0, %s228
      %s230 = smul.u32 8, %s19
      %p231 = scmp.lt.s32.totalorder %s18, 1
      %s232 = scalar_select %p231, %s18, 1
      %p233 = scmp.lt.s32.totalorder %s230, 31
      %s234 = scalar_select %p233, %s230, 31
      %s235 = smul.addr %s232, 32
      %s236 = sadd.s32 %s234, %s235
      %s237 = smul.addr %s236, 4
      %s238 = scalar_lea.vmem %s1, %s237
      %s239 = smul.u32 8, %s19
      %s240 = smul.u32 8, %s19
      %p241 = scmp.lt.s32.totalorder %s18, 1
      %s242 = scalar_select %p241, %s18, 1
      %p243 = scmp.lt.s32.totalorder %s240, 31
      %s244 = scalar_select %p243, %s240, 31
      %s245 = smul.addr %s242, 32
      %s246 = sadd.s32 %s244, %s245
      %s247 = smul.addr %s246, 8
      %s248 = scalar_lea.vmem %s2, %s247
      %s249 = smul.u32 8, %s19
      %s250 = smul.u32 8, %s19
      %p251 = scmp.lt.s32.totalorder %s18, 1
      %s252 = scalar_select %p251, %s18, 1
      %p253 = scmp.lt.s32.totalorder %s250, 31
      %s254 = scalar_select %p253, %s250, 31
      %s255 = smul.addr %s252, 32
      %s256 = sadd.s32 %s254, %s255
      %s257 = smul.addr %s256, 8
      %s258 = scalar_lea.vmem %s3, %s257
      %s259 = smul.u32 8, %s19
      %v260 = vld [vmem:[%s238] sm:$0xf]
      %v261 = vld [vmem:[%s238 + $0x4] sm:$0xf]
      %v262 = vld [vmem:[%s238 + $0x8] sm:$0xf]
      %v263 = vld [vmem:[%s238 + $0xc] sm:$0xf]
      %v264 = vld [vmem:[%s238 + $0x10] sm:$0xf]
      %v265 = vld [vmem:[%s238 + $0x14] sm:$0xf]
      %v266 = vld [vmem:[%s238 + $0x18] sm:$0xf]
      %v267 = vld [vmem:[%s238 + $0x1c] sm:$0xf]
      %v268 = vunpack.c.l.bf16 %v260
      %v269 = vunpack.c.l.bf16 %v261
      %v270 = vunpack.c.l.bf16 %v262
      %v271 = vunpack.c.l.bf16 %v263
      %v272 = vunpack.c.l.bf16 %v264
      %v273 = vunpack.c.l.bf16 %v265
      %v274 = vunpack.c.l.bf16 %v266
      %v275 = vunpack.c.l.bf16 %v267
      %v276 = vld [vmem:[%s229] sm:$0x1]
      %v278 = vlaneseq
      %v279 = vshrl.u32 %v278, 7
      %v280 = vsub.s32 0, %v279
      %v281 = vrot.slane %v276, %v280
      %v283 = vmul.f32 %v268, %v281
      %v284 = vmul.f32 %v269, %v281
      %v285 = vmul.f32 %v270, %v281
      %v286 = vmul.f32 %v271, %v281
      %v287 = vmul.f32 %v272, %v281
      %v288 = vmul.f32 %v273, %v281
      %v289 = vmul.f32 %v274, %v281
      %v290 = vmul.f32 %v275, %v281
      %v291 = vld [vmem:[%s248] sm:$0xff]
      %v292 = vld [vmem:[%s248 + $0x8] sm:$0xff]
      %v293 = vld [vmem:[%s248 + $0x10] sm:$0xff]
      %v294 = vld [vmem:[%s248 + $0x18] sm:$0xff]
      %v295 = vld [vmem:[%s248 + $0x20] sm:$0xff]
      %v296 = vld [vmem:[%s248 + $0x28] sm:$0xff]
      %v297 = vld [vmem:[%s248 + $0x30] sm:$0xff]
      %v298 = vld [vmem:[%s248 + $0x38] sm:$0xff]
      %v299 = vadd.f32 %v283, %v291
      %v300 = vadd.f32 %v284, %v292
      %v301 = vadd.f32 %v285, %v293
      %v302 = vadd.f32 %v286, %v294
      %v303 = vadd.f32 %v287, %v295
      %v304 = vadd.f32 %v288, %v296
      %v305 = vadd.f32 %v289, %v297
      %v306 = vadd.f32 %v290, %v298
      %307 = vst [vmem:[%s258] sm:$0xff] %v299
      %308 = vst [vmem:[%s258 + $0x8] sm:$0xff] %v300
      %309 = vst [vmem:[%s258 + $0x10] sm:$0xff] %v301
      %310 = vst [vmem:[%s258 + $0x18] sm:$0xff] %v302
      %311 = vst [vmem:[%s258 + $0x20] sm:$0xff] %v303
      %312 = vst [vmem:[%s258 + $0x28] sm:$0xff] %v304
      %313 = vst [vmem:[%s258 + $0x30] sm:$0xff] %v305
      %314 = vst [vmem:[%s258 + $0x38] sm:$0xff] %v306
      %s315 = smul.u32 8, %s19
      %p316 = scmp.lt.s32.totalorder %s18, 1
      %s317 = scalar_select %p316, %s18, 1
      %p318 = scmp.lt.s32.totalorder %s315, 31
      %s319 = scalar_select %p318, %s315, 31
      %s320 = smul.addr %s317, 32
      %s321 = sadd.s32 %s319, %s320
      %s322 = smul.addr %s321, 8
      %s323 = scalar_lea.vmem %s3, %s322
      // Predicated region
      $region33: #{temporal_attention_forward.3} parent=31 // pred_check
        %p324 = pneg %p128
      $region34: #{temporal_attention_forward.3} parent=31 // pred_check_branch
        %326 = sbr.rel (%p324) target = $region36
      $region35: #{temporal_attention_forward.3} parent=31 // pred_region
        %s327 = smul.u32 8, %s19
      $region36: #{temporal_attention_forward.3} parent=31 // pred_fallthru
        _
    $region32: #{temporal_attention_forward.3} parent=5 // pred_fallthru
      _
    %p328 = scmp.le.s32.totalorder 2, %s9
    // Predicated region
    $region37: #{temporal_attention_forward.3} parent=5 // pred_check
      %p329 = pneg %p328
    $region38: #{temporal_attention_forward.3} parent=5 // pred_check_branch
      %331 = sbr.rel (%p329) target = $region40
    $region39: #{temporal_attention_forward.3} parent=5 // pred_region
      %s332 = ssub.s32 %s9, 2
      // Predicated region
      $region41: #{temporal_attention_forward.3} parent=39 // pred_check
        %p333 = pneg %p134
      $region42: #{temporal_attention_forward.3} parent=39 // pred_check_branch
        %335 = sbr.rel (%p333) target = $region44
      $region43: #{temporal_attention_forward.3} parent=39 // pred_region
        %s336 = smul.u32 8, %s21
        %p337 = scmp.lt.s32.totalorder %s20, 1
        %s338 = scalar_select %p337, %s20, 1
        %p339 = scmp.lt.s32.totalorder %s336, 31
        %s340 = scalar_select %p339, %s336, 31
        %s341 = smul.addr %s338, 32
        %s342 = sadd.s32 %s340, %s341
        %s343 = smul.addr %s342, 8
        %s344 = scalar_lea.vmem %s3, %s343
      $region44: #{temporal_attention_forward.3} parent=39 // pred_fallthru
        _
    $region40: #{temporal_attention_forward.3} parent=5 // pred_fallthru
      _
  $region6: #{temporal_attention_forward.3} parent=0 // loop_footer
    %s13 = sadd.s32 1, %s9
  $region7: #{temporal_attention_forward.3} parent=0 // loop_footer_branch
    %8 = sbr.rel target = $region3
  $region8: #{temporal_attention_forward.3} parent=0 // loop_exit
    _

// kernel: temporal_attention_forward.2
$region0: #{temporal_attention_forward.2}
  #allocation0 [shape = 'u32[]', space=smem, size = 0x4, offset = 0x4, fixed_abs, tag = 'smem constant byte address 0x4 - core index']
  #allocation1 [shape = 'u32[144,128]{1,0:T(1,128)}', space=vmem, size = 0x12000, scoped, tag = 'internal scratch']
  #allocation2 [shape = 'bf16[128,1152]{1,0:T(8,128)(2,1)}', space=vmem, size = 0x48000, scoped, tag = 'scratch operand']
  %s0 = inlined_call_operand.vmem [shape: f32[2,256,128], index: 0, kind: input, shape index: {}]
  %s1 = inlined_call_operand.vmem [shape: bf16[1152,128], index: 1, kind: input, shape index: {}]
  %s2 = inlined_call_operand.vmem [shape: f32[1,128], index: 2, kind: input, shape index: {}]
  %s3 = inlined_call_operand.vmem [shape: f32[1,128], index: 3, kind: input, shape index: {}]
  %s4 = inlined_call_operand.vmem [shape: bf16[2,256,128], index: 4, kind: output, shape index: {0}]
  %s5 = inlined_call_operand.vmem [shape: f32[2,1,128], index: 5, kind: output, shape index: {1}]
  %6 = xla_tuple %s4, %s5
  %s7 = sld [smem:[#allocation0]]
  $region61: #{temporal_attention_forward.2} parent=0
    _
  %s9 = ssub.s32 1, %s7
  %s10 = scalar_select 0, %s9, %s7
  loop: start=0, step=1, limit=6
  $region2: #{temporal_attention_forward.2} parent=0 // loop_pre_header
    _
  $region3: #{temporal_attention_forward.2} parent=0 // loop_header
    %s12 = sphi 0, %s16
    %p13 = scmp.ge.s32.totalorder %s12, 6
    %s19 = sphi 0, %s31
    %s20 = sphi 0, %s27
    %s21 = sphi 0, %s19
    %s22 = sphi 0, %s20
    %s23 = sphi 0, %s21
    %s24 = sphi 0, %s22
    %s36 = sphi 0, %s38
    %s39 = sphi 0, %s36
    %s40 = sphi 0, %s39
    %s56 = sphi 0, %s40
    %s60 = sphi 0, %s60
    %s62 = sphi 0, %s60
    %s63 = sphi 0, %s62
    %s77 = sphi 0, %s63
    %s81 = sphi 0, %s81
    %s83 = sphi 0, %s81
    %s84 = sphi 0, %s83
    %s98 = sphi 0, %s84
    %s102 = sphi 0, %s102
    %s104 = sphi 0, %s102
    %s105 = sphi 0, %s104
    %s119 = sphi 0, %s105
    %s127 = sphi 0, %s129
    %s130 = sphi 0, %s127
    %s131 = sphi 0, %s130
    %s147 = sphi 0, %s131
    %s153 = sphi 0, %s155
    %s156 = sphi 0, %s153
    %s157 = sphi 0, %s156
    %s173 = sphi 0, %s157
  $region4: #{temporal_attention_forward.2} parent=0 // loop_header_branch
    %15 = sbr.rel (%p13) target = $region8
  $region5: #{temporal_attention_forward.2} parent=0 // loop_body
    %s17 = ssub.s32 %s12, 1
    %s18 = ssub.s32 %s12, 2
    %s25 = sadd.s32 1, %s20
    %p26 = scmp.ge.s32.totalorder %s25, 2
    %s27 = scalar_select %p26, 0, %s25
    %s28 = sadd.s32 1, %s19
    %s29 = scalar_select %p26, %s28, %s19
    %p30 = scmp.ge.s32.totalorder %s29, 2
    %s31 = scalar_select %p30, 0, %s29
    %s32 = ssub.s32 %s19, %s31
    %s33 = ssub.s32 %s20, %s27
    %s34 = sor.u32 %s32, %s33
    %p35 = scmp.eq.s32.totalorder %s34, 0
    %s37 = sadd.s32 %s36, 1
    %s38 = scalar_select %p35, %s36, %s37
    %p41 = pneg %p35
    %p42 = scmp.eq.s32.totalorder %s12, 3
    %p43 = por %p41, %p42
    %p44 = scmp.ne.s32.totalorder %s36, %s39
    %p45 = scmp.eq.s32.totalorder %s12, 0
    %p46 = por %p44, %p45
    %p47 = scmp.ne.s32.totalorder %s36, %s39
    %p48 = scmp.eq.s32.totalorder %s17, 3
    %p49 = por %p47, %p48
    %p50 = scmp.ne.s32.totalorder %s39, %s40
    %p51 = scmp.eq.s32.totalorder %s17, 0
    %p52 = por %p50, %p51
    %p53 = scmp.ne.s32.totalorder %s39, %s40
    %p54 = scmp.eq.s32.totalorder %s18, 3
    %p55 = por %p53, %p54
    %p57 = scmp.ne.s32.totalorder %s40, %s56
    %p58 = scmp.eq.s32.totalorder %s18, 0
    %p59 = por %p57, %p58
    %s61 = sadd.s32 %s60, 1
    %p64 = scmp.eq.s32.totalorder %s12, 3
    %p65 = scmp.ne.s32.totalorder %s60, %s62
    %p66 = scmp.eq.s32.totalorder %s12, 0
    %p67 = por %p65, %p66
    %p68 = scmp.ne.s32.totalorder %s60, %s62
    %p69 = scmp.eq.s32.totalorder %s17, 3
    %p70 = por %p68, %p69
    %p71 = scmp.ne.s32.totalorder %s62, %s63
    %p72 = scmp.eq.s32.totalorder %s17, 0
    %p73 = por %p71, %p72
    %p74 = scmp.ne.s32.totalorder %s62, %s63
    %p75 = scmp.eq.s32.totalorder %s18, 3
    %p76 = por %p74, %p75
    %p78 = scmp.ne.s32.totalorder %s63, %s77
    %p79 = scmp.eq.s32.totalorder %s18, 0
    %p80 = por %p78, %p79
    %s82 = sadd.s32 %s81, 1
    %p85 = scmp.eq.s32.totalorder %s12, 3
    %p86 = scmp.ne.s32.totalorder %s81, %s83
    %p87 = scmp.eq.s32.totalorder %s12, 0
    %p88 = por %p86, %p87
    %p89 = scmp.ne.s32.totalorder %s81, %s83
    %p90 = scmp.eq.s32.totalorder %s17, 3
    %p91 = por %p89, %p90
    %p92 = scmp.ne.s32.totalorder %s83, %s84
    %p93 = scmp.eq.s32.totalorder %s17, 0
    %p94 = por %p92, %p93
    %p95 = scmp.ne.s32.totalorder %s83, %s84
    %p96 = scmp.eq.s32.totalorder %s18, 3
    %p97 = por %p95, %p96
    %p99 = scmp.ne.s32.totalorder %s84, %s98
    %p100 = scmp.eq.s32.totalorder %s18, 0
    %p101 = por %p99, %p100
    %s103 = sadd.s32 %s102, 1
    %p106 = scmp.eq.s32.totalorder %s12, 3
    %p107 = scmp.ne.s32.totalorder %s102, %s104
    %p108 = scmp.eq.s32.totalorder %s12, 0
    %p109 = por %p107, %p108
    %p110 = scmp.ne.s32.totalorder %s102, %s104
    %p111 = scmp.eq.s32.totalorder %s17, 3
    %p112 = por %p110, %p111
    %p113 = scmp.ne.s32.totalorder %s104, %s105
    %p114 = scmp.eq.s32.totalorder %s17, 0
    %p115 = por %p113, %p114
    %p116 = scmp.ne.s32.totalorder %s104, %s105
    %p117 = scmp.eq.s32.totalorder %s18, 3
    %p118 = por %p116, %p117
    %p120 = scmp.ne.s32.totalorder %s105, %s119
    %p121 = scmp.eq.s32.totalorder %s18, 0
    %p122 = por %p120, %p121
    %s123 = ssub.s32 %s19, %s31
    %s124 = ssub.s32 %s20, %s27
    %s125 = sor.u32 %s123, %s124
    %p126 = scmp.eq.s32.totalorder %s125, 0
    %s128 = sadd.s32 %s127, 1
    %s129 = scalar_select %p126, %s127, %s128
    %p132 = pneg %p126
    %p133 = scmp.eq.s32.totalorder %s12, 3
    %p134 = por %p132, %p133
    %p135 = scmp.ne.s32.totalorder %s127, %s130
    %p136 = scmp.eq.s32.totalorder %s12, 0
    %p137 = por %p135, %p136
    %p138 = scmp.ne.s32.totalorder %s127, %s130
    %p139 = scmp.eq.s32.totalorder %s17, 3
    %p140 = por %p138, %p139
    %p141 = scmp.ne.s32.totalorder %s130, %s131
    %p142 = scmp.eq.s32.totalorder %s17, 0
    %p143 = por %p141, %p142
    %p144 = scmp.ne.s32.totalorder %s130, %s131
    %p145 = scmp.eq.s32.totalorder %s18, 3
    %p146 = por %p144, %p145
    %p148 = scmp.ne.s32.totalorder %s131, %s147
    %p149 = scmp.eq.s32.totalorder %s18, 0
    %p150 = por %p148, %p149
    %s151 = ssub.s32 %s19, %s31
    %p152 = scmp.eq.s32.totalorder %s151, 0
    %s154 = sadd.s32 %s153, 1
    %s155 = scalar_select %p152, %s153, %s154
    %p158 = pneg %p152
    %p159 = scmp.eq.s32.totalorder %s12, 3
    %p160 = por %p158, %p159
    %p161 = scmp.ne.s32.totalorder %s153, %s156
    %p162 = scmp.eq.s32.totalorder %s12, 0
    %p163 = por %p161, %p162
    %p164 = scmp.ne.s32.totalorder %s153, %s156
    %p165 = scmp.eq.s32.totalorder %s17, 3
    %p166 = por %p164, %p165
    %p167 = scmp.ne.s32.totalorder %s156, %s157
    %p168 = scmp.eq.s32.totalorder %s17, 0
    %p169 = por %p167, %p168
    %p170 = scmp.ne.s32.totalorder %s156, %s157
    %p171 = scmp.eq.s32.totalorder %s18, 3
    %p172 = por %p170, %p171
    %p174 = scmp.ne.s32.totalorder %s157, %s173
    %p175 = scmp.eq.s32.totalorder %s18, 0
    %p176 = por %p174, %p175
    %p177 = scmp.le.s32.totalorder 1, %s12
    %p178 = scmp.lt.s32.totalorder %s12, 5
    %p179 = pnand %p177, %p178
    %p180 = pneg %p179
    // Predicated region
    $region9: #{temporal_attention_forward.2} parent=5 // pred_check
      _
    $region10: #{temporal_attention_forward.2} parent=5 // pred_check_branch
      %182 = sbr.rel (%p179) target = $region12
    $region11: #{temporal_attention_forward.2} parent=5 // pred_region
      %s183 = ssub.s32 %s12, 1
      // Predicated region
      $region13: #{temporal_attention_forward.2} parent=11 // pred_check
        %p184 = pneg %p73
      $region14: #{temporal_attention_forward.2} parent=11 // pred_check_branch
        %186 = sbr.rel (%p184) target = $region16
      $region15: #{temporal_attention_forward.2} parent=11 // pred_region
        _
      $region16: #{temporal_attention_forward.2} parent=11 // pred_fallthru
        _
      // Predicated region
      $region17: #{temporal_attention_forward.2} parent=11 // pred_check
        %p187 = pneg %p94
      $region18: #{temporal_attention_forward.2} parent=11 // pred_check_branch
        %189 = sbr.rel (%p187) target = $region20
      $region19: #{temporal_attention_forward.2} parent=11 // pred_region
        _
      $region20: #{temporal_attention_forward.2} parent=11 // pred_fallthru
        _
      // Predicated region
      $region21: #{temporal_attention_forward.2} parent=11 // pred_check
        %p190 = pneg %p115
      $region22: #{temporal_attention_forward.2} parent=11 // pred_check_branch
        %192 = sbr.rel (%p190) target = $region24
      $region23: #{temporal_attention_forward.2} parent=11 // pred_region
        _
      $region24: #{temporal_attention_forward.2} parent=11 // pred_fallthru
        _
    $region12: #{temporal_attention_forward.2} parent=5 // pred_fallthru
      _
    %p193 = scmp.lt.s32.totalorder %s12, 4
    // Predicated region
    $region25: #{temporal_attention_forward.2} parent=5 // pred_check
      %p194 = pneg %p193
    $region26: #{temporal_attention_forward.2} parent=5 // pred_check_branch
      %196 = sbr.rel (%p194) target = $region28
    $region27: #{temporal_attention_forward.2} parent=5 // pred_region
      // Predicated region
      $region29: #{temporal_attention_forward.2} parent=27 // pred_check
        %p197 = pneg %p46
      $region30: #{temporal_attention_forward.2} parent=27 // pred_check_branch
        %199 = sbr.rel (%p197) target = $region32
      $region31: #{temporal_attention_forward.2} parent=27 // pred_region
        %s200 = smul.u32 16, %s20
        %p201 = scmp.lt.s32.totalorder %s19, 1
        %s202 = scalar_select %p201, %s19, 1
        %p203 = scmp.lt.s32.totalorder %s200, 31
        %s204 = scalar_select %p203, %s200, 31
        %s205 = smul.addr %s202, 32
        %s206 = sadd.s32 %s204, %s205
        %s207 = smul.addr %s206, 8
        %s208 = scalar_lea.vmem %s0, %s207
        %s209 = smul.u32 16, %s20
      $region32: #{temporal_attention_forward.2} parent=27 // pred_fallthru
        _
    $region28: #{temporal_attention_forward.2} parent=5 // pred_fallthru
      _
    %p210 = scmp.le.s32.totalorder 1, %s12
    %p211 = scmp.lt.s32.totalorder %s12, 5
    %p212 = pnand %p210, %p211
    %p213 = pneg %p212
    // Predicated region
    $region33: #{temporal_attention_forward.2} parent=5 // pred_check
      _
    $region34: #{temporal_attention_forward.2} parent=5 // pred_check_branch
      %215 = sbr.rel (%p212) target = $region36
    $region35: #{temporal_attention_forward.2} parent=5 // pred_region
      %s216 = ssub.s32 %s12, 1
      %s217 = smul.u32 16, %s22
      %p218 = scmp.lt.s32.totalorder %s21, 1
      %s219 = scalar_select %p218, %s21, 1
      %p220 = scmp.lt.s32.totalorder %s217, 31
      %s221 = scalar_select %p220, %s217, 31
      %s222 = smul.addr %s219, 32
      %s223 = sadd.s32 %s221, %s222
      %s224 = smul.addr %s223, 8
      %s225 = scalar_lea.vmem %s0, %s224
      %p226 = pneg %p52
      %p227 = pneg %p49
      %p228 = pneg %p73
      %p229 = pneg %p70
      %p230 = pneg %p94
      %p231 = pneg %p91
      %p232 = pneg %p115
      %p233 = pneg %p112
      %p234 = pneg %p143
      %p235 = pneg %p140
      %s236 = smul.u32 16, %s22
      %p237 = scmp.lt.s32.totalorder %s21, 1
      %s238 = scalar_select %p237, %s21, 1
      %p239 = scmp.lt.s32.totalorder %s236, 31
      %s240 = scalar_select %p239, %s236, 31
      %s241 = smul.addr %s238, 32
      %s242 = sadd.s32 %s240, %s241
      %s243 = smul.addr %s242, 4
      %s244 = scalar_lea.vmem %s4, %s243
      %p245 = pneg %p169
      %p246 = pneg %p166
      %p247 = scmp.lt.s32.totalorder %s21, 1
      %s248 = scalar_select %p247, %s21, 1
      %s249 = scalar_lea.vmem %s5, %s248
      %s250 = smul.u32 16, %s22
      %p251 = scmp.lt.s32.totalorder %s21, 1
      %s252 = scalar_select %p251, %s21, 1
      %p253 = scmp.lt.s32.totalorder %s250, 31
      %s254 = scalar_select %p253, %s250, 31
      %s255 = smul.addr %s252, 32
      %s256 = sadd.s32 %s254, %s255
      %s257 = smul.addr %s256, 8
      %s258 = scalar_lea.vmem %s0, %s257
      %s259 = smul.u32 16, %s22
      %s260 = smul.u32 16, %s22
      %p261 = scmp.lt.s32.totalorder %s21, 1
      %s262 = scalar_select %p261, %s21, 1
      %p263 = scmp.lt.s32.totalorder %s260, 31
      %s264 = scalar_select %p263, %s260, 31
      %s265 = smul.addr %s262, 32
      %s266 = sadd.s32 %s264, %s265
      %s267 = smul.addr %s266, 4
      %s268 = scalar_lea.vmem %s4, %s267
      %s269 = smul.u32 16, %s22
      %p270 = scmp.lt.s32.totalorder %s21, 1
      %s271 = scalar_select %p270, %s21, 1
      %s272 = scalar_lea.vmem %s5, %s271
      %v274 = vld [vmem:[%s258] sm:$0xff]
      %v275 = vld [vmem:[%s258 + $0x8] sm:$0xff]
      %v276 = vld [vmem:[%s258 + $0x10] sm:$0xff]
      %v277 = vld [vmem:[%s258 + $0x18] sm:$0xff]
      %v278 = vld [vmem:[%s258 + $0x20] sm:$0xff]
      %v279 = vld [vmem:[%s258 + $0x28] sm:$0xff]
      %v280 = vld [vmem:[%s258 + $0x30] sm:$0xff]
      %v281 = vld [vmem:[%s258 + $0x38] sm:$0xff]
      %v282 = vld [vmem:[%s258 + $0x40] sm:$0xff]
      %v283 = vld [vmem:[%s258 + $0x48] sm:$0xff]
      %v284 = vld [vmem:[%s258 + $0x50] sm:$0xff]
      %v285 = vld [vmem:[%s258 + $0x58] sm:$0xff]
      %v286 = vld [vmem:[%s258 + $0x60] sm:$0xff]
      %v287 = vld [vmem:[%s258 + $0x68] sm:$0xff]
      %v288 = vld [vmem:[%s258 + $0x70] sm:$0xff]
      %v289 = vld [vmem:[%s258 + $0x78] sm:$0xff]
      %v290 = vlaneseq
      %v291 = vshrl.u32 %v290, 7
      %v292 = vadd.s32 %v291, 8
      %v293 = vadd.s32 %v291, 16
      %v294 = vadd.s32 %v291, 24
      %v295 = vadd.s32 %v291, 32
      %v296 = vadd.s32 %v291, 40
      %v297 = vadd.s32 %v291, 48
      %v298 = vadd.s32 %v291, 56
      %v299 = vadd.s32 %v291, 64
      %v300 = vadd.s32 %v291, 72
      %v301 = vadd.s32 %v291, 80
      %v302 = vadd.s32 %v291, 88
      %v303 = vadd.s32 %v291, 96
      %v304 = vadd.s32 %v291, 104
      %v305 = vadd.s32 %v291, 112
      %v306 = vadd.s32 %v291, 120
      %vm307 = vcmp.lt.s32.totalorder %v291, 0
      %v308 = vsub.s32 0, %v291
      %v309 = vsel %vm307, %v308, %v291
      %v310 = vshrl.u32 %v309, 4
      %v311 = vand.u32 %v309, 15
      %v312 = vsub.s32 0, %v311
      %v313 = vsel %vm307, %v312, %v311
      %vm314 = vcmp.lt.s32.totalorder %v292, 0
      %v315 = vsub.s32 0, %v292
      %v316 = vsel %vm314, %v315, %v292
      %v317 = vshrl.u32 %v316, 4
      %v318 = vand.u32 %v316, 15
      %v319 = vsub.s32 0, %v318
      %v320 = vsel %vm314, %v319, %v318
      %vm321 = vcmp.lt.s32.totalorder %v293, 0
      %v322 = vsub.s32 0, %v293
      %v323 = vsel %vm321, %v322, %v293
      %v324 = vshrl.u32 %v323, 4
      %v325 = vand.u32 %v323, 15
      %v326 = vsub.s32 0, %v325
      %v327 = vsel %vm321, %v326, %v325
      %vm328 = vcmp.lt.s32.totalorder %v294, 0
      %v329 = vsub.s32 0, %v294
      %v330 = vsel %vm328, %v329, %v294
      %v331 = vshrl.u32 %v330, 4
      %v332 = vand.u32 %v330, 15
      %v333 = vsub.s32 0, %v332
      %v334 = vsel %vm328, %v333, %v332
      %vm335 = vcmp.lt.s32.totalorder %v295, 0
      %v336 = vsub.s32 0, %v295
      %v337 = vsel %vm335, %v336, %v295
      %v338 = vshrl.u32 %v337, 4
      %v339 = vand.u32 %v337, 15
      %v340 = vsub.s32 0, %v339
      %v341 = vsel %vm335, %v340, %v339
      %vm342 = vcmp.lt.s32.totalorder %v296, 0
      %v343 = vsub.s32 0, %v296
      %v344 = vsel %vm342, %v343, %v296
      %v345 = vshrl.u32 %v344, 4
      %v346 = vand.u32 %v344, 15
      %v347 = vsub.s32 0, %v346
      %v348 = vsel %vm342, %v347, %v346
      %vm349 = vcmp.lt.s32.totalorder %v297, 0
      %v350 = vsub.s32 0, %v297
      %v351 = vsel %vm349, %v350, %v297
      %v352 = vshrl.u32 %v351, 4
      %v353 = vand.u32 %v351, 15
      %v354 = vsub.s32 0, %v353
      %v355 = vsel %vm349, %v354, %v353
      %vm356 = vcmp.lt.s32.totalorder %v298, 0
      %v357 = vsub.s32 0, %v298
      %v358 = vsel %vm356, %v357, %v298
      %v359 = vshrl.u32 %v358, 4
      %v360 = vand.u32 %v358, 15
      %v361 = vsub.s32 0, %v360
      %v362 = vsel %vm356, %v361, %v360
      %vm363 = vcmp.lt.s32.totalorder %v299, 0
      %v364 = vsub.s32 0, %v299
      %v365 = vsel %vm363, %v364, %v299
      %v366 = vshrl.u32 %v365, 4
      %v367 = vand.u32 %v365, 15
      %v368 = vsub.s32 0, %v367
      %v369 = vsel %vm363, %v368, %v367
      %vm370 = vcmp.lt.s32.totalorder %v300, 0
      %v371 = vsub.s32 0, %v300
      %v372 = vsel %vm370, %v371, %v300
      %v373 = vshrl.u32 %v372, 4
      %v374 = vand.u32 %v372, 15
      %v375 = vsub.s32 0, %v374
      %v376 = vsel %vm370, %v375, %v374
      %vm377 = vcmp.lt.s32.totalorder %v301, 0
      %v378 = vsub.s32 0, %v301
      %v379 = vsel %vm377, %v378, %v301
      %v380 = vshrl.u32 %v379, 4
      %v381 = vand.u32 %v379, 15
      %v382 = vsub.s32 0, %v381
      %v383 = vsel %vm377, %v382, %v381
      %vm384 = vcmp.lt.s32.totalorder %v302, 0
      %v385 = vsub.s32 0, %v302
      %v386 = vsel %vm384, %v385, %v302
      %v387 = vshrl.u32 %v386, 4
      %v388 = vand.u32 %v386, 15
      %v389 = vsub.s32 0, %v388
      %v390 = vsel %vm384, %v389, %v388
      %vm391 = vcmp.lt.s32.totalorder %v303, 0
      %v392 = vsub.s32 0, %v303
      %v393 = vsel %vm391, %v392, %v303
      %v394 = vshrl.u32 %v393, 4
      %v395 = vand.u32 %v393, 15
      %v396 = vsub.s32 0, %v395
      %v397 = vsel %vm391, %v396, %v395
      %vm398 = vcmp.lt.s32.totalorder %v304, 0
      %v399 = vsub.s32 0, %v304
      %v400 = vsel %vm398, %v399, %v304
      %v401 = vshrl.u32 %v400, 4
      %v402 = vand.u32 %v400, 15
      %v403 = vsub.s32 0, %v402
      %v404 = vsel %vm398, %v403, %v402
      %vm405 = vcmp.lt.s32.totalorder %v305, 0
      %v406 = vsub.s32 0, %v305
      %v407 = vsel %vm405, %v406, %v305
      %v408 = vshrl.u32 %v407, 4
      %v409 = vand.u32 %v407, 15
      %v410 = vsub.s32 0, %v409
      %v411 = vsel %vm405, %v410, %v409
      %vm412 = vcmp.lt.s32.totalorder %v306, 0
      %v413 = vsub.s32 0, %v306
      %v414 = vsel %vm412, %v413, %v306
      %v415 = vshrl.u32 %v414, 4
      %v416 = vand.u32 %v414, 15
      %v417 = vsub.s32 0, %v416
      %v418 = vsel %vm412, %v417, %v416
      %vm419 = vcmp.ne.s32.totalorder %v313, 0
      %vm420 = vcmp.ne.s32.totalorder %v320, 0
      %vm421 = vcmp.ne.s32.totalorder %v327, 0
      %vm422 = vcmp.ne.s32.totalorder %v334, 0
      %vm423 = vcmp.ne.s32.totalorder %v341, 0
      %vm424 = vcmp.ne.s32.totalorder %v348, 0
      %vm425 = vcmp.ne.s32.totalorder %v355, 0
      %vm426 = vcmp.ne.s32.totalorder %v362, 0
      %vm427 = vcmp.ne.s32.totalorder %v369, 0
      %vm428 = vcmp.ne.s32.totalorder %v376, 0
      %vm429 = vcmp.ne.s32.totalorder %v383, 0
      %vm430 = vcmp.ne.s32.totalorder %v390, 0
      %vm431 = vcmp.ne.s32.totalorder %v397, 0
      %vm432 = vcmp.ne.s32.totalorder %v404, 0
      %vm433 = vcmp.ne.s32.totalorder %v411, 0
      %vm434 = vcmp.ne.s32.totalorder %v418, 0
      %vm435 = vcmp.lt.s32.totalorder %v313, 0
      %vm436 = vcmp.lt.s32.totalorder %v320, 0
      %vm437 = vcmp.lt.s32.totalorder %v327, 0
      %vm438 = vcmp.lt.s32.totalorder %v334, 0
      %vm439 = vcmp.lt.s32.totalorder %v341, 0
      %vm440 = vcmp.lt.s32.totalorder %v348, 0
      %vm441 = vcmp.lt.s32.totalorder %v355, 0
      %vm442 = vcmp.lt.s32.totalorder %v362, 0
      %vm443 = vcmp.lt.s32.totalorder %v369, 0
      %vm444 = vcmp.lt.s32.totalorder %v376, 0
      %vm445 = vcmp.lt.s32.totalorder %v383, 0
      %vm446 = vcmp.lt.s32.totalorder %v390, 0
      %vm447 = vcmp.lt.s32.totalorder %v397, 0
      %vm448 = vcmp.lt.s32.totalorder %v404, 0
      %vm449 = vcmp.lt.s32.totalorder %v411, 0
      %vm450 = vcmp.lt.s32.totalorder %v418, 0
      %vm451 = vmand %vm435, %vm419
      %vm452 = vmand %vm436, %vm420
      %vm453 = vmand %vm437, %vm421
      %vm454 = vmand %vm438, %vm422
      %vm455 = vmand %vm439, %vm423
      %vm456 = vmand %vm440, %vm424
      %vm457 = vmand %vm441, %vm425
      %vm458 = vmand %vm442, %vm426
      %vm459 = vmand %vm443, %vm427
      %vm460 = vmand %vm444, %vm428
      %vm461 = vmand %vm445, %vm429
      %vm462 = vmand %vm446, %vm430
      %vm463 = vmand %vm447, %vm431
      %vm464 = vmand %vm448, %vm432
      %vm465 = vmand %vm449, %vm433
      %vm466 = vmand %vm450, %vm434
      %v467 = vadd.s32 %v313, 16
      %v468 = vadd.s32 %v320, 16
      %v469 = vadd.s32 %v327, 16
      %v470 = vadd.s32 %v334, 16
      %v471 = vadd.s32 %v341, 16
      %v472 = vadd.s32 %v348, 16
      %v473 = vadd.s32 %v355, 16
      %v474 = vadd.s32 %v362, 16
      %v475 = vadd.s32 %v369, 16
      %v476 = vadd.s32 %v376, 16
      %v477 = vadd.s32 %v383, 16
      %v478 = vadd.s32 %v390, 16
      %v479 = vadd.s32 %v397, 16
      %v480 = vadd.s32 %v404, 16
      %v481 = vadd.s32 %v411, 16
      %v482 = vadd.s32 %v418, 16
      %v483 = vsel %vm451, %v467, %v313
      %v484 = vsel %vm452, %v468, %v320
      %v485 = vsel %vm453, %v469, %v327
      %v486 = vsel %vm454, %v470, %v334
      %v487 = vsel %vm455, %v471, %v341
      %v488 = vsel %vm456, %v472, %v348
      %v489 = vsel %vm457, %v473, %v355
      %v490 = vsel %vm458, %v474, %v362
      %v491 = vsel %vm459, %v475, %v369
      %v492 = vsel %vm460, %v476, %v376
      %v493 = vsel %vm461, %v477, %v383
      %v494 = vsel %vm462, %v478, %v390
      %v495 = vsel %vm463, %v479, %v397
      %v496 = vsel %vm464, %v480, %v404
      %v497 = vsel %vm465, %v481, %v411
      %v498 = vsel %vm466, %v482, %v418
      %v499 = vrot.slane %v274, 4
      %v500 = vrot.slane %v275, 4
      %v501 = vrot.slane %v276, 4
      %v502 = vrot.slane %v277, 4
      %v503 = vrot.slane %v278, 4
      %v504 = vrot.slane %v279, 4
      %v505 = vrot.slane %v280, 4
      %v506 = vrot.slane %v281, 4
      %v507 = vrot.slane %v282, 4
      %v508 = vrot.slane %v283, 4
      %v509 = vrot.slane %v284, 4
      %v510 = vrot.slane %v285, 4
      %v511 = vrot.slane %v286, 4
      %v512 = vrot.slane %v287, 4
      %v513 = vrot.slane %v288, 4
      %v514 = vrot.slane %v289, 4
      %vm515 = vcmp.lt.s32.totalorder %v291, 4
      %v516 = vsel %vm515, %v513, %v514
      %v517 = vsel %vm515, %v512, %v513
      %v518 = vsel %vm515, %v511, %v512
      %v519 = vsel %vm515, %v510, %v511
      %v520 = vsel %vm515, %v509, %v510
      %v521 = vsel %vm515, %v508, %v509
      %v522 = vsel %vm515, %v507, %v508
      %v523 = vsel %vm515, %v506, %v507
      %v524 = vsel %vm515, %v505, %v506
      %v525 = vsel %vm515, %v504, %v505
      %v526 = vsel %vm515, %v503, %v504
      %v527 = vsel %vm515, %v502, %v503
      %v528 = vsel %vm515, %v501, %v502
      %v529 = vsel %vm515, %v500, %v501
      %v530 = vsel %vm515, %v499, %v500
      %v531 = vsel %vm515, %v514, %v499
      %vm532 = vcmp.ge.s32.totalorder %v483, 4
      %vm533 = vcmp.ge.s32.totalorder %v484, 4
      %vm534 = vcmp.ge.s32.totalorder %v485, 4
      %vm535 = vcmp.ge.s32.totalorder %v486, 4
      %vm536 = vcmp.ge.s32.totalorder %v487, 4
      %vm537 = vcmp.ge.s32.totalorder %v488, 4
      %vm538 = vcmp.ge.s32.totalorder %v489, 4
      %vm539 = vcmp.ge.s32.totalorder %v490, 4
      %vm540 = vcmp.ge.s32.totalorder %v491, 4
      %vm541 = vcmp.ge.s32.totalorder %v492, 4
      %vm542 = vcmp.ge.s32.totalorder %v493, 4
      %vm543 = vcmp.ge.s32.totalorder %v494, 4
      %vm544 = vcmp.ge.s32.totalorder %v495, 4
      %vm545 = vcmp.ge.s32.totalorder %v496, 4
      %vm546 = vcmp.ge.s32.totalorder %v497, 4
      %vm547 = vcmp.ge.s32.totalorder %v498, 4
      %vm548 = vcmp.lt.s32.totalorder %v483, 20
      %vm549 = vcmp.lt.s32.totalorder %v484, 20
      %vm550 = vcmp.lt.s32.totalorder %v485, 20
      %vm551 = vcmp.lt.s32.totalorder %v486, 20
      %vm552 = vcmp.lt.s32.totalorder %v487, 20
      %vm553 = vcmp.lt.s32.totalorder %v488, 20
      %vm554 = vcmp.lt.s32.totalorder %v489, 20
      %vm555 = vcmp.lt.s32.totalorder %v490, 20
      %vm556 = vcmp.lt.s32.totalorder %v491, 20
      %vm557 = vcmp.lt.s32.totalorder %v492, 20
      %vm558 = vcmp.lt.s32.totalorder %v493, 20
      %vm559 = vcmp.lt.s32.totalorder %v494, 20
      %vm560 = vcmp.lt.s32.totalorder %v495, 20
      %vm561 = vcmp.lt.s32.totalorder %v496, 20
      %vm562 = vcmp.lt.s32.totalorder %v497, 20
      %vm563 = vcmp.lt.s32.totalorder %v498, 20
      %vm564 = vmand %vm532, %vm548
      %vm565 = vmand %vm533, %vm549
      %vm566 = vmand %vm534, %vm550
      %vm567 = vmand %vm535, %vm551
      %vm568 = vmand %vm536, %vm552
      %vm569 = vmand %vm537, %vm553
      %vm570 = vmand %vm538, %vm554
      %vm571 = vmand %vm539, %vm555
      %vm572 = vmand %vm540, %vm556
      %vm573 = vmand %vm541, %vm557
      %vm574 = vmand %vm542, %vm558
      %vm575 = vmand %vm543, %vm559
      %vm576 = vmand %vm544, %vm560
      %vm577 = vmand %vm545, %vm561
      %vm578 = vmand %vm546, %vm562
      %vm579 = vmand %vm547, %vm563
      %v580 = vsel %vm564, %v531, 0.0
      %v581 = vsel %vm565, %v530, 0.0
      %v582 = vsel %vm566, %v529, 0.0
      %v583 = vsel %vm567, %v528, 0.0
      %v584 = vsel %vm568, %v527, 0.0
      %v585 = vsel %vm569, %v526, 0.0
      %v586 = vsel %vm570, %v525, 0.0
      %v587 = vsel %vm571, %v524, 0.0
      %v588 = vsel %vm572, %v523, 0.0
      %v589 = vsel %vm573, %v522, 0.0
      %v590 = vsel %vm574, %v521, 0.0
      %v591 = vsel %vm575, %v520, 0.0
      %v592 = vsel %vm576, %v519, 0.0
      %v593 = vsel %vm577, %v518, 0.0
      %v594 = vsel %vm578, %v517, 0.0
      %v595 = vsel %vm579, %v516, 0.0
      %v596 = vpack.c.bf16 %v581, %v580
      %v597 = vpack.c.bf16 %v583, %v582
      %v598 = vpack.c.bf16 %v585, %v584
      %v599 = vpack.c.bf16 %v587, %v586
      %v600 = vpack.c.bf16 %v589, %v588
      %v601 = vpack.c.bf16 %v591, %v590
      %v602 = vpack.c.bf16 %v593, %v592
      %v603 = vpack.c.bf16 %v595, %v594
      %v612 = vunpack.c.l.b16 %v596
      %v613 = vunpack.c.h.b16 %v596
      %v614 = vunpack.c.l.b16 %v597
      %v615 = vunpack.c.h.b16 %v597
      %v616 = vunpack.c.l.b16 %v598
      %v617 = vunpack.c.h.b16 %v598
      %v618 = vunpack.c.l.b16 %v599
      %v619 = vunpack.c.h.b16 %v599
      %v620 = vunpack.c.l.b16 %v600
      %v621 = vunpack.c.h.b16 %v600
      %v622 = vunpack.c.l.b16 %v601
      %v623 = vunpack.c.h.b16 %v601
      %v624 = vunpack.c.l.b16 %v602
      %v625 = vunpack.c.h.b16 %v602
      %v626 = vunpack.c.l.b16 %v603
      %v627 = vunpack.c.h.b16 %v603
      %v628 = vpack.c.b16 %v612, %v612
      %v629 = vpack.c.b16 %v613, %v613
      %v630 = vpack.c.b16 %v614, %v614
      %v631 = vpack.c.b16 %v615, %v615
      %v632 = vpack.c.b16 %v616, %v616
      %v633 = vpack.c.b16 %v617, %v617
      %v634 = vpack.c.b16 %v618, %v618
      %v635 = vpack.c.b16 %v619, %v619
      %v636 = vpack.c.b16 %v620, %v620
      %v637 = vpack.c.b16 %v621, %v621
      %v638 = vpack.c.b16 %v622, %v622
      %v639 = vpack.c.b16 %v623, %v623
      %v640 = vpack.c.b16 %v624, %v624
      %v641 = vpack.c.b16 %v625, %v625
      %v642 = vpack.c.b16 %v626, %v626
      %v643 = vpack.c.b16 %v627, %v627
      %660 = vst [vmem:[#allocation2] sm:$0xf] %v628
      %661 = vst [vmem:[#allocation2 + $0x24] sm:$0xf] %v629
      %662 = vst [vmem:[#allocation2 + $0x48] sm:$0xf] %v630
      %663 = vst [vmem:[#allocation2 + $0x6c] sm:$0xf] %v631
      %664 = vst [vmem:[#allocation2 + $0x90] sm:$0xf] %v632
      %665 = vst [vmem:[#allocation2 + $0xb4] sm:$0xf] %v633
      %666 = vst [vmem:[#allocation2 + $0xd8] sm:$0xf] %v634
      %667 = vst [vmem:[#allocation2 + $0xfc] sm:$0xf] %v635
      %668 = vst [vmem:[#allocation2 + $0x120] sm:$0xf] %v636
      %669 = vst [vmem:[#allocation2 + $0x144] sm:$0xf] %v637
      %670 = vst [vmem:[#allocation2 + $0x168] sm:$0xf] %v638
      %671 = vst [vmem:[#allocation2 + $0x18c] sm:$0xf] %v639
      %672 = vst [vmem:[#allocation2 + $0x1b0] sm:$0xf] %v640
      %673 = vst [vmem:[#allocation2 + $0x1d4] sm:$0xf] %v641
      %674 = vst [vmem:[#allocation2 + $0x1f8] sm:$0xf] %v642
      %675 = vst [vmem:[#allocation2 + $0x21c] sm:$0xf] %v643
      %v676 = vrot.slane %v274, 5
      %v677 = vrot.slane %v275, 5
      %v678 = vrot.slane %v276, 5
      %v679 = vrot.slane %v277, 5
      %v680 = vrot.slane %v278, 5
      %v681 = vrot.slane %v279, 5
      %v682 = vrot.slane %v280, 5
      %v683 = vrot.slane %v281, 5
      %v684 = vrot.slane %v282, 5
      %v685 = vrot.slane %v283, 5
      %v686 = vrot.slane %v284, 5
      %v687 = vrot.slane %v285, 5
      %v688 = vrot.slane %v286, 5
      %v689 = vrot.slane %v287, 5
      %v690 = vrot.slane %v288, 5
      %v691 = vrot.slane %v289, 5
      %vm692 = vcmp.lt.s32.totalorder %v291, 3
      %v693 = vsel %vm692, %v690, %v691
      %v694 = vsel %vm692, %v689, %v690
      %v695 = vsel %vm692, %v688, %v689
      %v696 = vsel %vm692, %v687, %v688
      %v697 = vsel %vm692, %v686, %v687
      %v698 = vsel %vm692, %v685, %v686
      %v699 = vsel %vm692, %v684, %v685
      %v700 = vsel %vm692, %v683, %v684
      %v701 = vsel %vm692, %v682, %v683
      %v702 = vsel %vm692, %v681, %v682
      %v703 = vsel %vm692, %v680, %v681
      %v704 = vsel %vm692, %v679, %v680
      %v705 = vsel %vm692, %v678, %v679
      %v706 = vsel %vm692, %v677, %v678
      %v707 = vsel %vm692, %v676, %v677
      %v708 = vsel %vm692, %v691, %v676
      %vm709 = vcmp.ge.s32.totalorder %v483, 3
      %vm710 = vcmp.ge.s32.totalorder %v484, 3
      %vm711 = vcmp.ge.s32.totalorder %v485, 3
      %vm712 = vcmp.ge.s32.totalorder %v486, 3
      %vm713 = vcmp.ge.s32.totalorder %v487, 3
      %vm714 = vcmp.ge.s32.totalorder %v488, 3
      %vm715 = vcmp.ge.s32.totalorder %v489, 3
      %vm716 = vcmp.ge.s32.totalorder %v490, 3
      %vm717 = vcmp.ge.s32.totalorder %v491, 3
      %vm718 = vcmp.ge.s32.totalorder %v492, 3
      %vm719 = vcmp.ge.s32.totalorder %v493, 3
      %vm720 = vcmp.ge.s32.totalorder %v494, 3
      %vm721 = vcmp.ge.s32.totalorder %v495, 3
      %vm722 = vcmp.ge.s32.totalorder %v496, 3
      %vm723 = vcmp.ge.s32.totalorder %v497, 3
      %vm724 = vcmp.ge.s32.totalorder %v498, 3
      %vm725 = vcmp.lt.s32.totalorder %v483, 19
      %vm726 = vcmp.lt.s32.totalorder %v484, 19
      %vm727 = vcmp.lt.s32.totalorder %v485, 19
      %vm728 = vcmp.lt.s32.totalorder %v486, 19
      %vm729 = vcmp.lt.s32.totalorder %v487, 19
      %vm730 = vcmp.lt.s32.totalorder %v488, 19
      %vm731 = vcmp.lt.s32.totalorder %v489, 19
      %vm732 = vcmp.lt.s32.totalorder %v490, 19
      %vm733 = vcmp.lt.s32.totalorder %v491, 19
      %vm734 = vcmp.lt.s32.totalorder %v492, 19
      %vm735 = vcmp.lt.s32.totalorder %v493, 19
      %vm736 = vcmp.lt.s32.totalorder %v494, 19
      %vm737 = vcmp.lt.s32.totalorder %v495, 19
      %vm738 = vcmp.lt.s32.totalorder %v496, 19
      %vm739 = vcmp.lt.s32.totalorder %v497, 19
      %vm740 = vcmp.lt.s32.totalorder %v498, 19
      %vm741 = vmand %vm709, %vm725
      %vm742 = vmand %vm710, %vm726
      %vm743 = vmand %vm711, %vm727
      %vm744 = vmand %vm712, %vm728
      %vm745 = vmand %vm713, %vm729
      %vm746 = vmand %vm714, %vm730
      %vm747 = vmand %vm715, %vm731
      %vm748 = vmand %vm716, %vm732
      %vm749 = vmand %vm717, %vm733
      %vm750 = vmand %vm718, %vm734
      %vm751 = vmand %vm719, %vm735
      %vm752 = vmand %vm720, %vm736
      %vm753 = vmand %vm721, %vm737
      %vm754 = vmand %vm722, %vm738
      %vm755 = vmand %vm723, %vm739
      %vm756 = vmand %vm724, %vm740
      %v757 = vsel %vm741, %v708, 0.0
      %v758 = vsel %vm742, %v707, 0.0
      %v759 = vsel %vm743, %v706, 0.0
      %v760 = vsel %vm744, %v705, 0.0
      %v761 = vsel %vm745, %v704, 0.0
      %v762 = vsel %vm746, %v703, 0.0
      %v763 = vsel %vm747, %v702, 0.0
      %v764 = vsel %vm748, %v701, 0.0
      %v765 = vsel %vm749, %v700, 0.0
      %v766 = vsel %vm750, %v699, 0.0
      %v767 = vsel %vm751, %v698, 0.0
      %v768 = vsel %vm752, %v697, 0.0
      %v769 = vsel %vm753, %v696, 0.0
      %v770 = vsel %vm754, %v695, 0.0
      %v771 = vsel %vm755, %v694, 0.0
      %v772 = vsel %vm756, %v693, 0.0
      %v773 = vpack.c.bf16 %v758, %v757
      %v774 = vpack.c.bf16 %v760, %v759
      %v775 = vpack.c.bf16 %v762, %v761
      %v776 = vpack.c.bf16 %v764, %v763
      %v777 = vpack.c.bf16 %v766, %v765
      %v778 = vpack.c.bf16 %v768, %v767
      %v779 = vpack.c.bf16 %v770, %v769
      %v780 = vpack.c.bf16 %v772, %v771
      %v789 = vunpack.c.l.b16 %v773
      %v790 = vunpack.c.h.b16 %v773
      %v791 = vunpack.c.l.b16 %v774
      %v792 = vunpack.c.h.b16 %v774
      %v793 = vunpack.c.l.b16 %v775
      %v794 = vunpack.c.h.b16 %v775
      %v795 = vunpack.c.l.b16 %v776
      %v796 = vunpack.c.h.b16 %v776
      %v797 = vunpack.c.l.b16 %v777
      %v798 = vunpack.c.h.b16 %v777
      %v799 = vunpack.c.l.b16 %v778
      %v800 = vunpack.c.h.b16 %v778
      %v801 = vunpack.c.l.b16 %v779
      %v802 = vunpack.c.h.b16 %v779
      %v803 = vunpack.c.l.b16 %v780
      %v804 = vunpack.c.h.b16 %v780
      %v805 = vpack.c.b16 %v789, %v789
      %v806 = vpack.c.b16 %v790, %v790
      %v807 = vpack.c.b16 %v791, %v791
      %v808 = vpack.c.b16 %v792, %v792
      %v809 = vpack.c.b16 %v793, %v793
      %v810 = vpack.c.b16 %v794, %v794
      %v811 = vpack.c.b16 %v795, %v795
      %v812 = vpack.c.b16 %v796, %v796
      %v813 = vpack.c.b16 %v797, %v797
      %v814 = vpack.c.b16 %v798, %v798
      %v815 = vpack.c.b16 %v799, %v799
      %v816 = vpack.c.b16 %v800, %v800
      %v817 = vpack.c.b16 %v801, %v801
      %v818 = vpack.c.b16 %v802, %v802
      %v819 = vpack.c.b16 %v803, %v803
      %v820 = vpack.c.b16 %v804, %v804
      %837 = vst [vmem:[#allocation2 + $0x4] sm:$0xf] %v805
      %838 = vst [vmem:[#allocation2 + $0x28] sm:$0xf] %v806
      %839 = vst [vmem:[#allocation2 + $0x4c] sm:$0xf] %v807
      %840 = vst [vmem:[#allocation2 + $0x70] sm:$0xf] %v808
      %841 = vst [vmem:[#allocation2 + $0x94] sm:$0xf] %v809
      %842 = vst [vmem:[#allocation2 + $0xb8] sm:$0xf] %v810
      %843 = vst [vmem:[#allocation2 + $0xdc] sm:$0xf] %v811
      %844 = vst [vmem:[#allocation2 + $0x100] sm:$0xf] %v812
      %845 = vst [vmem:[#allocation2 + $0x124] sm:$0xf] %v813
      %846 = vst [vmem:[#allocation2 + $0x148] sm:$0xf] %v814
      %847 = vst [vmem:[#allocation2 + $0x16c] sm:$0xf] %v815
      %848 = vst [vmem:[#allocation2 + $0x190] sm:$0xf] %v816
      %849 = vst [vmem:[#allocation2 + $0x1b4] sm:$0xf] %v817
      %850 = vst [vmem:[#allocation2 + $0x1d8] sm:$0xf] %v818
      %851 = vst [vmem:[#allocation2 + $0x1fc] sm:$0xf] %v819
      %852 = vst [vmem:[#allocation2 + $0x220] sm:$0xf] %v820
      %v853 = vrot.slane %v274, 6
      %v854 = vrot.slane %v275, 6
      %v855 = vrot.slane %v276, 6
      %v856 = vrot.slane %v277, 6
      %v857 = vrot.slane %v278, 6
      %v858 = vrot.slane %v279, 6
      %v859 = vrot.slane %v280, 6
      %v860 = vrot.slane %v281, 6
      %v861 = vrot.slane %v282, 6
      %v862 = vrot.slane %v283, 6
      %v863 = vrot.slane %v284, 6
      %v864 = vrot.slane %v285, 6
      %v865 = vrot.slane %v286, 6
      %v866 = vrot.slane %v287, 6
      %v867 = vrot.slane %v288, 6
      %v868 = vrot.slane %v289, 6
      %vm869 = vcmp.lt.s32.totalorder %v291, 2
      %v870 = vsel %vm869, %v867, %v868
      %v871 = vsel %vm869, %v866, %v867
      %v872 = vsel %vm869, %v865, %v866
      %v873 = vsel %vm869, %v864, %v865
      %v874 = vsel %vm869, %v863, %v864
      %v875 = vsel %vm869, %v862, %v863
      %v876 = vsel %vm869, %v861, %v862
      %v877 = vsel %vm869, %v860, %v861
      %v878 = vsel %vm869, %v859, %v860
      %v879 = vsel %vm869, %v858, %v859
      %v880 = vsel %vm869, %v857, %v858
      %v881 = vsel %vm869, %v856, %v857
      %v882 = vsel %vm869, %v855, %v856
      %v883 = vsel %vm869, %v854, %v855
      %v884 = vsel %vm869, %v853, %v854
      %v885 = vsel %vm869, %v868, %v853
      %vm886 = vcmp.ge.s32.totalorder %v483, 2
      %vm887 = vcmp.ge.s32.totalorder %v484, 2
      %vm888 = vcmp.ge.s32.totalorder %v485, 2
      %vm889 = vcmp.ge.s32.totalorder %v486, 2
      %vm890 = vcmp.ge.s32.totalorder %v487, 2
      %vm891 = vcmp.ge.s32.totalorder %v488, 2
      %vm892 = vcmp.ge.s32.totalorder %v489, 2
      %vm893 = vcmp.ge.s32.totalorder %v490, 2
      %vm894 = vcmp.ge.s32.totalorder %v491, 2
      %vm895 = vcmp.ge.s32.totalorder %v492, 2
      %vm896 = vcmp.ge.s32.totalorder %v493, 2
      %vm897 = vcmp.ge.s32.totalorder %v494, 2
      %vm898 = vcmp.ge.s32.totalorder %v495, 2
      %vm899 = vcmp.ge.s32.totalorder %v496, 2
      %vm900 = vcmp.ge.s32.totalorder %v497, 2
      %vm901 = vcmp.ge.s32.totalorder %v498, 2
      %vm902 = vcmp.lt.s32.totalorder %v483, 18
      %vm903 = vcmp.lt.s32.totalorder %v484, 18
      %vm904 = vcmp.lt.s32.totalorder %v485, 18
      %vm905 = vcmp.lt.s32.totalorder %v486, 18
      %vm906 = vcmp.lt.s32.totalorder %v487, 18
      %vm907 = vcmp.lt.s32.totalorder %v488, 18
      %vm908 = vcmp.lt.s32.totalorder %v489, 18
      %vm909 = vcmp.lt.s32.totalorder %v490, 18
      %vm910 = vcmp.lt.s32.totalorder %v491, 18
      %vm911 = vcmp.lt.s32.totalorder %v492, 18
      %vm912 = vcmp.lt.s32.totalorder %v493, 18
      %vm913 = vcmp.lt.s32.totalorder %v494, 18
      %vm914 = vcmp.lt.s32.totalorder %v495, 18
      %vm915 = vcmp.lt.s32.totalorder %v496, 18
      %vm916 = vcmp.lt.s32.totalorder %v497, 18
      %vm917 = vcmp.lt.s32.totalorder %v498, 18
      %vm918 = vmand %vm886, %vm902
      %vm919 = vmand %vm887, %vm903
      %vm920 = vmand %vm888, %vm904
      %vm921 = vmand %vm889, %vm905
      %vm922 = vmand %vm890, %vm906
      %vm923 = vmand %vm891, %vm907
      %vm924 = vmand %vm892, %vm908
      %vm925 = vmand %vm893, %vm909
      %vm926 = vmand %vm894, %vm910
      %vm927 = vmand %vm895, %vm911
      %vm928 = vmand %vm896, %vm912
      %vm929 = vmand %vm897, %vm913
      %vm930 = vmand %vm898, %vm914
      %vm931 = vmand %vm899, %vm915
      %vm932 = vmand %vm900, %vm916
      %vm933 = vmand %vm901, %vm917
      %v934 = vsel %vm918, %v885, 0.0
      %v935 = vsel %vm919, %v884, 0.0
      %v936 = vsel %vm920, %v883, 0.0
      %v937 = vsel %vm921, %v882, 0.0
      %v938 = vsel %vm922, %v881, 0.0
      %v939 = vsel %vm923, %v880, 0.0
      %v940 = vsel %vm924, %v879, 0.0
      %v941 = vsel %vm925, %v878, 0.0
      %v942 = vsel %vm926, %v877, 0.0
      %v943 = vsel %vm927, %v876, 0.0
      %v944 = vsel %vm928, %v875, 0.0
      %v945 = vsel %vm929, %v874, 0.0
      %v946 = vsel %vm930, %v873, 0.0
      %v947 = vsel %vm931, %v872, 0.0
      %v948 = vsel %vm932, %v871, 0.0
      %v949 = vsel %vm933, %v870, 0.0
      %v950 = vpack.c.bf16 %v935, %v934
      %v951 = vpack.c.bf16 %v937, %v936
      %v952 = vpack.c.bf16 %v939, %v938
      %v953 = vpack.c.bf16 %v941, %v940
      %v954 = vpack.c.bf16 %v943, %v942
      %v955 = vpack.c.bf16 %v945, %v944
      %v956 = vpack.c.bf16 %v947, %v946
      %v957 = vpack.c.bf16 %v949, %v948
      %v966 = vunpack.c.l.b16 %v950
      %v967 = vunpack.c.h.b16 %v950
      %v968 = vunpack.c.l.b16 %v951
      %v969 = vunpack.c.h.b16 %v951
      %v970 = vunpack.c.l.b16 %v952
      %v971 = vunpack.c.h.b16 %v952
      %v972 = vunpack.c.l.b16 %v953
      %v973 = vunpack.c.h.b16 %v953
      %v974 = vunpack.c.l.b16 %v954
      %v975 = vunpack.c.h.b16 %v954
      %v976 = vunpack.c.l.b16 %v955
      %v977 = vunpack.c.h.b16 %v955
      %v978 = vunpack.c.l.b16 %v956
      %v979 = vunpack.c.h.b16 %v956
      %v980 = vunpack.c.l.b16 %v957
      %v981 = vunpack.c.h.b16 %v957
      %v982 = vpack.c.b16 %v966, %v966
      %v983 = vpack.c.b16 %v967, %v967
      %v984 = vpack.c.b16 %v968, %v968
      %v985 = vpack.c.b16 %v969, %v969
      %v986 = vpack.c.b16 %v970, %v970
      %v987 = vpack.c.b16 %v971, %v971
      %v988 = vpack.c.b16 %v972, %v972
      %v989 = vpack.c.b16 %v973, %v973
      %v990 = vpack.c.b16 %v974, %v974
      %v991 = vpack.c.b16 %v975, %v975
      %v992 = vpack.c.b16 %v976, %v976
      %v993 = vpack.c.b16 %v977, %v977
      %v994 = vpack.c.b16 %v978, %v978
      %v995 = vpack.c.b16 %v979, %v979
      %v996 = vpack.c.b16 %v980, %v980
      %v997 = vpack.c.b16 %v981, %v981
      %1014 = vst [vmem:[#allocation2 + $0x8] sm:$0xf] %v982
      %1015 = vst [vmem:[#allocation2 + $0x2c] sm:$0xf] %v983
      %1016 = vst [vmem:[#allocation2 + $0x50] sm:$0xf] %v984
      %1017 = vst [vmem:[#allocation2 + $0x74] sm:$0xf] %v985
      %1018 = vst [vmem:[#allocation2 + $0x98] sm:$0xf] %v986
      %1019 = vst [vmem:[#allocation2 + $0xbc] sm:$0xf] %v987
      %1020 = vst [vmem:[#allocation2 + $0xe0] sm:$0xf] %v988
      %1021 = vst [vmem:[#allocation2 + $0x104] sm:$0xf] %v989
      %1022 = vst [vmem:[#allocation2 + $0x128] sm:$0xf] %v990
      %1023 = vst [vmem:[#allocation2 + $0x14c] sm:$0xf] %v991
      %1024 = vst [vmem:[#allocation2 + $0x170] sm:$0xf] %v992
      %1025 = vst [vmem:[#allocation2 + $0x194] sm:$0xf] %v993
      %1026 = vst [vmem:[#allocation2 + $0x1b8] sm:$0xf] %v994
      %1027 = vst [vmem:[#allocation2 + $0x1dc] sm:$0xf] %v995
      %1028 = vst [vmem:[#allocation2 + $0x200] sm:$0xf] %v996
      %1029 = vst [vmem:[#allocation2 + $0x224] sm:$0xf] %v997
      %v1030 = vrot.slane %v274, 7
      %v1031 = vrot.slane %v275, 7
      %v1032 = vrot.slane %v276, 7
      %v1033 = vrot.slane %v277, 7
      %v1034 = vrot.slane %v278, 7
      %v1035 = vrot.slane %v279, 7
      %v1036 = vrot.slane %v280, 7
      %v1037 = vrot.slane %v281, 7
      %v1038 = vrot.slane %v282, 7
      %v1039 = vrot.slane %v283, 7
      %v1040 = vrot.slane %v284, 7
      %v1041 = vrot.slane %v285, 7
      %v1042 = vrot.slane %v286, 7
      %v1043 = vrot.slane %v287, 7
      %v1044 = vrot.slane %v288, 7
      %v1045 = vrot.slane %v289, 7
      %vm1046 = vcmp.lt.s32.totalorder %v291, 1
      %v1047 = vsel %vm1046, %v1044, %v1045
      %v1048 = vsel %vm1046, %v1043, %v1044
      %v1049 = vsel %vm1046, %v1042, %v1043
      %v1050 = vsel %vm1046, %v1041, %v1042
      %v1051 = vsel %vm1046, %v1040, %v1041
      %v1052 = vsel %vm1046, %v1039, %v1040
      %v1053 = vsel %vm1046, %v1038, %v1039
      %v1054 = vsel %vm1046, %v1037, %v1038
      %v1055 = vsel %vm1046, %v1036, %v1037
      %v1056 = vsel %vm1046, %v1035, %v1036
      %v1057 = vsel %vm1046, %v1034, %v1035
      %v1058 = vsel %vm1046, %v1033, %v1034
      %v1059 = vsel %vm1046, %v1032, %v1033
      %v1060 = vsel %vm1046, %v1031, %v1032
      %v1061 = vsel %vm1046, %v1030, %v1031
      %v1062 = vsel %vm1046, %v1045, %v1030
      %vm1063 = vcmp.ge.s32.totalorder %v483, 1
      %vm1064 = vcmp.ge.s32.totalorder %v484, 1
      %vm1065 = vcmp.ge.s32.totalorder %v485, 1
      %vm1066 = vcmp.ge.s32.totalorder %v486, 1
      %vm1067 = vcmp.ge.s32.totalorder %v487, 1
      %vm1068 = vcmp.ge.s32.totalorder %v488, 1
      %vm1069 = vcmp.ge.s32.totalorder %v489, 1
      %vm1070 = vcmp.ge.s32.totalorder %v490, 1
      %vm1071 = vcmp.ge.s32.totalorder %v491, 1
      %vm1072 = vcmp.ge.s32.totalorder %v492, 1
      %vm1073 = vcmp.ge.s32.totalorder %v493, 1
      %vm1074 = vcmp.ge.s32.totalorder %v494, 1
      %vm1075 = vcmp.ge.s32.totalorder %v495, 1
      %vm1076 = vcmp.ge.s32.totalorder %v496, 1
      %vm1077 = vcmp.ge.s32.totalorder %v497, 1
      %vm1078 = vcmp.ge.s32.totalorder %v498, 1
      %vm1079 = vcmp.lt.s32.totalorder %v483, 17
      %vm1080 = vcmp.lt.s32.totalorder %v484, 17
      %vm1081 = vcmp.lt.s32.totalorder %v485, 17
      %vm1082 = vcmp.lt.s32.totalorder %v486, 17
      %vm1083 = vcmp.lt.s32.totalorder %v487, 17
      %vm1084 = vcmp.lt.s32.totalorder %v488, 17
      %vm1085 = vcmp.lt.s32.totalorder %v489, 17
      %vm1086 = vcmp.lt.s32.totalorder %v490, 17
      %vm1087 = vcmp.lt.s32.totalorder %v491, 17
      %vm1088 = vcmp.lt.s32.totalorder %v492, 17
      %vm1089 = vcmp.lt.s32.totalorder %v493, 17
      %vm1090 = vcmp.lt.s32.totalorder %v494, 17
      %vm1091 = vcmp.lt.s32.totalorder %v495, 17
      %vm1092 = vcmp.lt.s32.totalorder %v496, 17
      %vm1093 = vcmp.lt.s32.totalorder %v497, 17
      %vm1094 = vcmp.lt.s32.totalorder %v498, 17
      %vm1095 = vmand %vm1063, %vm1079
      %vm1096 = vmand %vm1064, %vm1080
      %vm1097 = vmand %vm1065, %vm1081
      %vm1098 = vmand %vm1066, %vm1082
      %vm1099 = vmand %vm1067, %vm1083
      %vm1100 = vmand %vm1068, %vm1084
      %vm1101 = vmand %vm1069, %vm1085
      %vm1102 = vmand %vm1070, %vm1086
      %vm1103 = vmand %vm1071, %vm1087
      %vm1104 = vmand %vm1072, %vm1088
      %vm1105 = vmand %vm1073, %vm1089
      %vm1106 = vmand %vm1074, %vm1090
      %vm1107 = vmand %vm1075, %vm1091
      %vm1108 = vmand %vm1076, %vm1092
      %vm1109 = vmand %vm1077, %vm1093
      %vm1110 = vmand %vm1078, %vm1094
      %v1111 = vsel %vm1095, %v1062, 0.0
      %v1112 = vsel %vm1096, %v1061, 0.0
      %v1113 = vsel %vm1097, %v1060, 0.0
      %v1114 = vsel %vm1098, %v1059, 0.0
      %v1115 = vsel %vm1099, %v1058, 0.0
      %v1116 = vsel %vm1100, %v1057, 0.0
      %v1117 = vsel %vm1101, %v1056, 0.0
      %v1118 = vsel %vm1102, %v1055, 0.0
      %v1119 = vsel %vm1103, %v1054, 0.0
      %v1120 = vsel %vm1104, %v1053, 0.0
      %v1121 = vsel %vm1105, %v1052, 0.0
      %v1122 = vsel %vm1106, %v1051, 0.0
      %v1123 = vsel %vm1107, %v1050, 0.0
      %v1124 = vsel %vm1108, %v1049, 0.0
      %v1125 = vsel %vm1109, %v1048, 0.0
      %v1126 = vsel %vm1110, %v1047, 0.0
      %v1127 = vpack.c.bf16 %v1112, %v1111
      %v1128 = vpack.c.bf16 %v1114, %v1113
      %v1129 = vpack.c.bf16 %v1116, %v1115
      %v1130 = vpack.c.bf16 %v1118, %v1117
      %v1131 = vpack.c.bf16 %v1120, %v1119
      %v1132 = vpack.c.bf16 %v1122, %v1121
      %v1133 = vpack.c.bf16 %v1124, %v1123
      %v1134 = vpack.c.bf16 %v1126, %v1125
      %v1143 = vunpack.c.l.b16 %v1127
      %v1144 = vunpack.c.h.b16 %v1127
      %v1145 = vunpack.c.l.b16 %v1128
      %v1146 = vunpack.c.h.b16 %v1128
      %v1147 = vunpack.c.l.b16 %v1129
      %v1148 = vunpack.c.h.b16 %v1129
      %v1149 = vunpack.c.l.b16 %v1130
      %v1150 = vunpack.c.h.b16 %v1130
      %v1151 = vunpack.c.l.b16 %v1131
      %v1152 = vunpack.c.h.b16 %v1131
      %v1153 = vunpack.c.l.b16 %v1132
      %v1154 = vunpack.c.h.b16 %v1132
      %v1155 = vunpack.c.l.b16 %v1133
      %v1156 = vunpack.c.h.b16 %v1133
      %v1157 = vunpack.c.l.b16 %v1134
      %v1158 = vunpack.c.h.b16 %v1134
      %v1159 = vpack.c.b16 %v1143, %v1143
      %v1160 = vpack.c.b16 %v1144, %v1144
      %v1161 = vpack.c.b16 %v1145, %v1145
      %v1162 = vpack.c.b16 %v1146, %v1146
      %v1163 = vpack.c.b16 %v1147, %v1147
      %v1164 = vpack.c.b16 %v1148, %v1148
      %v1165 = vpack.c.b16 %v1149, %v1149
      %v1166 = vpack.c.b16 %v1150, %v1150
      %v1167 = vpack.c.b16 %v1151, %v1151
      %v1168 = vpack.c.b16 %v1152, %v1152
      %v1169 = vpack.c.b16 %v1153, %v1153
      %v1170 = vpack.c.b16 %v1154, %v1154
      %v1171 = vpack.c.b16 %v1155, %v1155
      %v1172 = vpack.c.b16 %v1156, %v1156
      %v1173 = vpack.c.b16 %v1157, %v1157
      %v1174 = vpack.c.b16 %v1158, %v1158
      %1191 = vst [vmem:[#allocation2 + $0xc] sm:$0xf] %v1159
      %1192 = vst [vmem:[#allocation2 + $0x30] sm:$0xf] %v1160
      %1193 = vst [vmem:[#allocation2 + $0x54] sm:$0xf] %v1161
      %1194 = vst [vmem:[#allocation2 + $0x78] sm:$0xf] %v1162
      %1195 = vst [vmem:[#allocation2 + $0x9c] sm:$0xf] %v1163
      %1196 = vst [vmem:[#allocation2 + $0xc0] sm:$0xf] %v1164
      %1197 = vst [vmem:[#allocation2 + $0xe4] sm:$0xf] %v1165
      %1198 = vst [vmem:[#allocation2 + $0x108] sm:$0xf] %v1166
      %1199 = vst [vmem:[#allocation2 + $0x12c] sm:$0xf] %v1167
      %1200 = vst [vmem:[#allocation2 + $0x150] sm:$0xf] %v1168
      %1201 = vst [vmem:[#allocation2 + $0x174] sm:$0xf] %v1169
      %1202 = vst [vmem:[#allocation2 + $0x198] sm:$0xf] %v1170
      %1203 = vst [vmem:[#allocation2 + $0x1bc] sm:$0xf] %v1171
      %1204 = vst [vmem:[#allocation2 + $0x1e0] sm:$0xf] %v1172
      %1205 = vst [vmem:[#allocation2 + $0x204] sm:$0xf] %v1173
      %1206 = vst [vmem:[#allocation2 + $0x228] sm:$0xf] %v1174
      %v1207 = vpack.c.bf16 %v275, %v274
      %v1208 = vpack.c.bf16 %v277, %v276
      %v1209 = vpack.c.bf16 %v279, %v278
      %v1210 = vpack.c.bf16 %v281, %v280
      %v1211 = vpack.c.bf16 %v283, %v282
      %v1212 = vpack.c.bf16 %v285, %v284
      %v1213 = vpack.c.bf16 %v287, %v286
      %v1214 = vpack.c.bf16 %v289, %v288
      %v1223 = vunpack.c.l.b16 %v1207
      %v1224 = vunpack.c.h.b16 %v1207
      %v1225 = vunpack.c.l.b16 %v1208
      %v1226 = vunpack.c.h.b16 %v1208
      %v1227 = vunpack.c.l.b16 %v1209
      %v1228 = vunpack.c.h.b16 %v1209
      %v1229 = vunpack.c.l.b16 %v1210
      %v1230 = vunpack.c.h.b16 %v1210
      %v1231 = vunpack.c.l.b16 %v1211
      %v1232 = vunpack.c.h.b16 %v1211
      %v1233 = vunpack.c.l.b16 %v1212
      %v1234 = vunpack.c.h.b16 %v1212
      %v1235 = vunpack.c.l.b16 %v1213
      %v1236 = vunpack.c.h.b16 %v1213
      %v1237 = vunpack.c.l.b16 %v1214
      %v1238 = vunpack.c.h.b16 %v1214
      %v1239 = vpack.c.b16 %v1223, %v1223
      %v1240 = vpack.c.b16 %v1224, %v1224
      %v1241 = vpack.c.b16 %v1225, %v1225
      %v1242 = vpack.c.b16 %v1226, %v1226
      %v1243 = vpack.c.b16 %v1227, %v1227
      %v1244 = vpack.c.b16 %v1228, %v1228
      %v1245 = vpack.c.b16 %v1229, %v1229
      %v1246 = vpack.c.b16 %v1230, %v1230
      %v1247 = vpack.c.b16 %v1231, %v1231
      %v1248 = vpack.c.b16 %v1232, %v1232
      %v1249 = vpack.c.b16 %v1233, %v1233
      %v1250 = vpack.c.b16 %v1234, %v1234
      %v1251 = vpack.c.b16 %v1235, %v1235
      %v1252 = vpack.c.b16 %v1236, %v1236
      %v1253 = vpack.c.b16 %v1237, %v1237
      %v1254 = vpack.c.b16 %v1238, %v1238
      %1271 = vst [vmem:[#allocation2 + $0x10] sm:$0xf] %v1239
      %1272 = vst [vmem:[#allocation2 + $0x34] sm:$0xf] %v1240
      %1273 = vst [vmem:[#allocation2 + $0x58] sm:$0xf] %v1241
      %1274 = vst [vmem:[#allocation2 + $0x7c] sm:$0xf] %v1242
      %1275 = vst [vmem:[#allocation2 + $0xa0] sm:$0xf] %v1243
      %1276 = vst [vmem:[#allocation2 + $0xc4] sm:$0xf] %v1244
      %1277 = vst [vmem:[#allocation2 + $0xe8] sm:$0xf] %v1245
      %1278 = vst [vmem:[#allocation2 + $0x10c] sm:$0xf] %v1246
      %1279 = vst [vmem:[#allocation2 + $0x130] sm:$0xf] %v1247
      %1280 = vst [vmem:[#allocation2 + $0x154] sm:$0xf] %v1248
      %1281 = vst [vmem:[#allocation2 + $0x178] sm:$0xf] %v1249
      %1282 = vst [vmem:[#allocation2 + $0x19c] sm:$0xf] %v1250
      %1283 = vst [vmem:[#allocation2 + $0x1c0] sm:$0xf] %v1251
      %1284 = vst [vmem:[#allocation2 + $0x1e4] sm:$0xf] %v1252
      %1285 = vst [vmem:[#allocation2 + $0x208] sm:$0xf] %v1253
      %1286 = vst [vmem:[#allocation2 + $0x22c] sm:$0xf] %v1254
      %v1287 = vrot.slane %v274, 1
      %v1288 = vrot.slane %v275, 1
      %v1289 = vrot.slane %v276, 1
      %v1290 = vrot.slane %v277, 1
      %v1291 = vrot.slane %v278, 1
      %v1292 = vrot.slane %v279, 1
      %v1293 = vrot.slane %v280, 1
      %v1294 = vrot.slane %v281, 1
      %v1295 = vrot.slane %v282, 1
      %v1296 = vrot.slane %v283, 1
      %v1297 = vrot.slane %v284, 1
      %v1298 = vrot.slane %v285, 1
      %v1299 = vrot.slane %v286, 1
      %v1300 = vrot.slane %v287, 1
      %v1301 = vrot.slane %v288, 1
      %v1302 = vrot.slane %v289, 1
      %vm1303 = vcmp.lt.s32.totalorder %v291, 7
      %v1304 = vsel %vm1303, %v1301, %v1302
      %v1305 = vsel %vm1303, %v1300, %v1301
      %v1306 = vsel %vm1303, %v1299, %v1300
      %v1307 = vsel %vm1303, %v1298, %v1299
      %v1308 = vsel %vm1303, %v1297, %v1298
      %v1309 = vsel %vm1303, %v1296, %v1297
      %v1310 = vsel %vm1303, %v1295, %v1296
      %v1311 = vsel %vm1303, %v1294, %v1295
      %v1312 = vsel %vm1303, %v1293, %v1294
      %v1313 = vsel %vm1303, %v1292, %v1293
      %v1314 = vsel %vm1303, %v1291, %v1292
      %v1315 = vsel %vm1303, %v1290, %v1291
      %v1316 = vsel %vm1303, %v1289, %v1290
      %v1317 = vsel %vm1303, %v1288, %v1289
      %v1318 = vsel %vm1303, %v1287, %v1288
      %v1319 = vsel %vm1303, %v1302, %v1287
      %vm1320 = vcmp.ge.s32.totalorder %v483, 4294967295
      %vm1321 = vcmp.ge.s32.totalorder %v484, 4294967295
      %vm1322 = vcmp.ge.s32.totalorder %v485, 4294967295
      %vm1323 = vcmp.ge.s32.totalorder %v486, 4294967295
      %vm1324 = vcmp.ge.s32.totalorder %v487, 4294967295
      %vm1325 = vcmp.ge.s32.totalorder %v488, 4294967295
      %vm1326 = vcmp.ge.s32.totalorder %v489, 4294967295
      %vm1327 = vcmp.ge.s32.totalorder %v490, 4294967295
      %vm1328 = vcmp.ge.s32.totalorder %v491, 4294967295
      %vm1329 = vcmp.ge.s32.totalorder %v492, 4294967295
      %vm1330 = vcmp.ge.s32.totalorder %v493, 4294967295
      %vm1331 = vcmp.ge.s32.totalorder %v494, 4294967295
      %vm1332 = vcmp.ge.s32.totalorder %v495, 4294967295
      %vm1333 = vcmp.ge.s32.totalorder %v496, 4294967295
      %vm1334 = vcmp.ge.s32.totalorder %v497, 4294967295
      %vm1335 = vcmp.ge.s32.totalorder %v498, 4294967295
      %vm1336 = vcmp.lt.s32.totalorder %v483, 15
      %vm1337 = vcmp.lt.s32.totalorder %v484, 15
      %vm1338 = vcmp.lt.s32.totalorder %v485, 15
      %vm1339 = vcmp.lt.s32.totalorder %v486, 15
      %vm1340 = vcmp.lt.s32.totalorder %v487, 15
      %vm1341 = vcmp.lt.s32.totalorder %v488, 15
      %vm1342 = vcmp.lt.s32.totalorder %v489, 15
      %vm1343 = vcmp.lt.s32.totalorder %v490, 15
      %vm1344 = vcmp.lt.s32.totalorder %v491, 15
      %vm1345 = vcmp.lt.s32.totalorder %v492, 15
      %vm1346 = vcmp.lt.s32.totalorder %v493, 15
      %vm1347 = vcmp.lt.s32.totalorder %v494, 15
      %vm1348 = vcmp.lt.s32.totalorder %v495, 15
      %vm1349 = vcmp.lt.s32.totalorder %v496, 15
      %vm1350 = vcmp.lt.s32.totalorder %v497, 15
      %vm1351 = vcmp.lt.s32.totalorder %v498, 15
      %vm1352 = vmand %vm1320, %vm1336
      %vm1353 = vmand %vm1321, %vm1337
      %vm1354 = vmand %vm1322, %vm1338
      %vm1355 = vmand %vm1323, %vm1339
      %vm1356 = vmand %vm1324, %vm1340
      %vm1357 = vmand %vm1325, %vm1341
      %vm1358 = vmand %vm1326, %vm1342
      %vm1359 = vmand %vm1327, %vm1343
      %vm1360 = vmand %vm1328, %vm1344
      %vm1361 = vmand %vm1329, %vm1345
      %vm1362 = vmand %vm1330, %vm1346
      %vm1363 = vmand %vm1331, %vm1347
      %vm1364 = vmand %vm1332, %vm1348
      %vm1365 = vmand %vm1333, %vm1349
      %vm1366 = vmand %vm1334, %vm1350
      %vm1367 = vmand %vm1335, %vm1351
      %v1368 = vsel %vm1352, %v1318, 0.0
      %v1369 = vsel %vm1353, %v1317, 0.0
      %v1370 = vsel %vm1354, %v1316, 0.0
      %v1371 = vsel %vm1355, %v1315, 0.0
      %v1372 = vsel %vm1356, %v1314, 0.0
      %v1373 = vsel %vm1357, %v1313, 0.0
      %v1374 = vsel %vm1358, %v1312, 0.0
      %v1375 = vsel %vm1359, %v1311, 0.0
      %v1376 = vsel %vm1360, %v1310, 0.0
      %v1377 = vsel %vm1361, %v1309, 0.0
      %v1378 = vsel %vm1362, %v1308, 0.0
      %v1379 = vsel %vm1363, %v1307, 0.0
      %v1380 = vsel %vm1364, %v1306, 0.0
      %v1381 = vsel %vm1365, %v1305, 0.0
      %v1382 = vsel %vm1366, %v1304, 0.0
      %v1383 = vsel %vm1367, %v1319, 0.0
      %v1384 = vpack.c.bf16 %v1369, %v1368
      %v1385 = vpack.c.bf16 %v1371, %v1370
      %v1386 = vpack.c.bf16 %v1373, %v1372
      %v1387 = vpack.c.bf16 %v1375, %v1374
      %v1388 = vpack.c.bf16 %v1377, %v1376
      %v1389 = vpack.c.bf16 %v1379, %v1378
      %v1390 = vpack.c.bf16 %v1381, %v1380
      %v1391 = vpack.c.bf16 %v1383, %v1382
      %v1400 = vunpack.c.l.b16 %v1384
      %v1401 = vunpack.c.h.b16 %v1384
      %v1402 = vunpack.c.l.b16 %v1385
      %v1403 = vunpack.c.h.b16 %v1385
      %v1404 = vunpack.c.l.b16 %v1386
      %v1405 = vunpack.c.h.b16 %v1386
      %v1406 = vunpack.c.l.b16 %v1387
      %v1407 = vunpack.c.h.b16 %v1387
      %v1408 = vunpack.c.l.b16 %v1388
      %v1409 = vunpack.c.h.b16 %v1388
      %v1410 = vunpack.c.l.b16 %v1389
      %v1411 = vunpack.c.h.b16 %v1389
      %v1412 = vunpack.c.l.b16 %v1390
      %v1413 = vunpack.c.h.b16 %v1390
      %v1414 = vunpack.c.l.b16 %v1391
      %v1415 = vunpack.c.h.b16 %v1391
      %v1416 = vpack.c.b16 %v1400, %v1400
      %v1417 = vpack.c.b16 %v1401, %v1401
      %v1418 = vpack.c.b16 %v1402, %v1402
      %v1419 = vpack.c.b16 %v1403, %v1403
      %v1420 = vpack.c.b16 %v1404, %v1404
      %v1421 = vpack.c.b16 %v1405, %v1405
      %v1422 = vpack.c.b16 %v1406, %v1406
      %v1423 = vpack.c.b16 %v1407, %v1407
      %v1424 = vpack.c.b16 %v1408, %v1408
      %v1425 = vpack.c.b16 %v1409, %v1409
      %v1426 = vpack.c.b16 %v1410, %v1410
      %v1427 = vpack.c.b16 %v1411, %v1411
      %v1428 = vpack.c.b16 %v1412, %v1412
      %v1429 = vpack.c.b16 %v1413, %v1413
      %v1430 = vpack.c.b16 %v1414, %v1414
      %v1431 = vpack.c.b16 %v1415, %v1415
      %1448 = vst [vmem:[#allocation2 + $0x14] sm:$0xf] %v1416
      %1449 = vst [vmem:[#allocation2 + $0x38] sm:$0xf] %v1417
      %1450 = vst [vmem:[#allocation2 + $0x5c] sm:$0xf] %v1418
      %1451 = vst [vmem:[#allocation2 + $0x80] sm:$0xf] %v1419
      %1452 = vst [vmem:[#allocation2 + $0xa4] sm:$0xf] %v1420
      %1453 = vst [vmem:[#allocation2 + $0xc8] sm:$0xf] %v1421
      %1454 = vst [vmem:[#allocation2 + $0xec] sm:$0xf] %v1422
      %1455 = vst [vmem:[#allocation2 + $0x110] sm:$0xf] %v1423
      %1456 = vst [vmem:[#allocation2 + $0x134] sm:$0xf] %v1424
      %1457 = vst [vmem:[#allocation2 + $0x158] sm:$0xf] %v1425
      %1458 = vst [vmem:[#allocation2 + $0x17c] sm:$0xf] %v1426
      %1459 = vst [vmem:[#allocation2 + $0x1a0] sm:$0xf] %v1427
      %1460 = vst [vmem:[#allocation2 + $0x1c4] sm:$0xf] %v1428
      %1461 = vst [vmem:[#allocation2 + $0x1e8] sm:$0xf] %v1429
      %1462 = vst [vmem:[#allocation2 + $0x20c] sm:$0xf] %v1430
      %1463 = vst [vmem:[#allocation2 + $0x230] sm:$0xf] %v1431
      %v1464 = vrot.slane %v274, 2
      %v1465 = vrot.slane %v275, 2
      %v1466 = vrot.slane %v276, 2
      %v1467 = vrot.slane %v277, 2
      %v1468 = vrot.slane %v278, 2
      %v1469 = vrot.slane %v279, 2
      %v1470 = vrot.slane %v280, 2
      %v1471 = vrot.slane %v281, 2
      %v1472 = vrot.slane %v282, 2
      %v1473 = vrot.slane %v283, 2
      %v1474 = vrot.slane %v284, 2
      %v1475 = vrot.slane %v285, 2
      %v1476 = vrot.slane %v286, 2
      %v1477 = vrot.slane %v287, 2
      %v1478 = vrot.slane %v288, 2
      %v1479 = vrot.slane %v289, 2
      %vm1480 = vcmp.lt.s32.totalorder %v291, 6
      %v1481 = vsel %vm1480, %v1478, %v1479
      %v1482 = vsel %vm1480, %v1477, %v1478
      %v1483 = vsel %vm1480, %v1476, %v1477
      %v1484 = vsel %vm1480, %v1475, %v1476
      %v1485 = vsel %vm1480, %v1474, %v1475
      %v1486 = vsel %vm1480, %v1473, %v1474
      %v1487 = vsel %vm1480, %v1472, %v1473
      %v1488 = vsel %vm1480, %v1471, %v1472
      %v1489 = vsel %vm1480, %v1470, %v1471
      %v1490 = vsel %vm1480, %v1469, %v1470
      %v1491 = vsel %vm1480, %v1468, %v1469
      %v1492 = vsel %vm1480, %v1467, %v1468
      %v1493 = vsel %vm1480, %v1466, %v1467
      %v1494 = vsel %vm1480, %v1465, %v1466
      %v1495 = vsel %vm1480, %v1464, %v1465
      %v1496 = vsel %vm1480, %v1479, %v1464
      %vm1497 = vcmp.ge.s32.totalorder %v483, 4294967294
      %vm1498 = vcmp.ge.s32.totalorder %v484, 4294967294
      %vm1499 = vcmp.ge.s32.totalorder %v485, 4294967294
      %vm1500 = vcmp.ge.s32.totalorder %v486, 4294967294
      %vm1501 = vcmp.ge.s32.totalorder %v487, 4294967294
      %vm1502 = vcmp.ge.s32.totalorder %v488, 4294967294
      %vm1503 = vcmp.ge.s32.totalorder %v489, 4294967294
      %vm1504 = vcmp.ge.s32.totalorder %v490, 4294967294
      %vm1505 = vcmp.ge.s32.totalorder %v491, 4294967294
      %vm1506 = vcmp.ge.s32.totalorder %v492, 4294967294
      %vm1507 = vcmp.ge.s32.totalorder %v493, 4294967294
      %vm1508 = vcmp.ge.s32.totalorder %v494, 4294967294
      %vm1509 = vcmp.ge.s32.totalorder %v495, 4294967294
      %vm1510 = vcmp.ge.s32.totalorder %v496, 4294967294
      %vm1511 = vcmp.ge.s32.totalorder %v497, 4294967294
      %vm1512 = vcmp.ge.s32.totalorder %v498, 4294967294
      %vm1513 = vcmp.lt.s32.totalorder %v483, 14
      %vm1514 = vcmp.lt.s32.totalorder %v484, 14
      %vm1515 = vcmp.lt.s32.totalorder %v485, 14
      %vm1516 = vcmp.lt.s32.totalorder %v486, 14
      %vm1517 = vcmp.lt.s32.totalorder %v487, 14
      %vm1518 = vcmp.lt.s32.totalorder %v488, 14
      %vm1519 = vcmp.lt.s32.totalorder %v489, 14
      %vm1520 = vcmp.lt.s32.totalorder %v490, 14
      %vm1521 = vcmp.lt.s32.totalorder %v491, 14
      %vm1522 = vcmp.lt.s32.totalorder %v492, 14
      %vm1523 = vcmp.lt.s32.totalorder %v493, 14
      %vm1524 = vcmp.lt.s32.totalorder %v494, 14
      %vm1525 = vcmp.lt.s32.totalorder %v495, 14
      %vm1526 = vcmp.lt.s32.totalorder %v496, 14
      %vm1527 = vcmp.lt.s32.totalorder %v497, 14
      %vm1528 = vcmp.lt.s32.totalorder %v498, 14
      %vm1529 = vmand %vm1497, %vm1513
      %vm1530 = vmand %vm1498, %vm1514
      %vm1531 = vmand %vm1499, %vm1515
      %vm1532 = vmand %vm1500, %vm1516
      %vm1533 = vmand %vm1501, %vm1517
      %vm1534 = vmand %vm1502, %vm1518
      %vm1535 = vmand %vm1503, %vm1519
      %vm1536 = vmand %vm1504, %vm1520
      %vm1537 = vmand %vm1505, %vm1521
      %vm1538 = vmand %vm1506, %vm1522
      %vm1539 = vmand %vm1507, %vm1523
      %vm1540 = vmand %vm1508, %vm1524
      %vm1541 = vmand %vm1509, %vm1525
      %vm1542 = vmand %vm1510, %vm1526
      %vm1543 = vmand %vm1511, %vm1527
      %vm1544 = vmand %vm1512, %vm1528
      %v1545 = vsel %vm1529, %v1495, 0.0
      %v1546 = vsel %vm1530, %v1494, 0.0
      %v1547 = vsel %vm1531, %v1493, 0.0
      %v1548 = vsel %vm1532, %v1492, 0.0
      %v1549 = vsel %vm1533, %v1491, 0.0
      %v1550 = vsel %vm1534, %v1490, 0.0
      %v1551 = vsel %vm1535, %v1489, 0.0
      %v1552 = vsel %vm1536, %v1488, 0.0
      %v1553 = vsel %vm1537, %v1487, 0.0
      %v1554 = vsel %vm1538, %v1486, 0.0
      %v1555 = vsel %vm1539, %v1485, 0.0
      %v1556 = vsel %vm1540, %v1484, 0.0
      %v1557 = vsel %vm1541, %v1483, 0.0
      %v1558 = vsel %vm1542, %v1482, 0.0
      %v1559 = vsel %vm1543, %v1481, 0.0
      %v1560 = vsel %vm1544, %v1496, 0.0
      %v1561 = vpack.c.bf16 %v1546, %v1545
      %v1562 = vpack.c.bf16 %v1548, %v1547
      %v1563 = vpack.c.bf16 %v1550, %v1549
      %v1564 = vpack.c.bf16 %v1552, %v1551
      %v1565 = vpack.c.bf16 %v1554, %v1553
      %v1566 = vpack.c.bf16 %v1556, %v1555
      %v1567 = vpack.c.bf16 %v1558, %v1557
      %v1568 = vpack.c.bf16 %v1560, %v1559
      %v1577 = vunpack.c.l.b16 %v1561
      %v1578 = vunpack.c.h.b16 %v1561
      %v1579 = vunpack.c.l.b16 %v1562
      %v1580 = vunpack.c.h.b16 %v1562
      %v1581 = vunpack.c.l.b16 %v1563
      %v1582 = vunpack.c.h.b16 %v1563
      %v1583 = vunpack.c.l.b16 %v1564
      %v1584 = vunpack.c.h.b16 %v1564
      %v1585 = vunpack.c.l.b16 %v1565
      %v1586 = vunpack.c.h.b16 %v1565
      %v1587 = vunpack.c.l.b16 %v1566
      %v1588 = vunpack.c.h.b16 %v1566
      %v1589 = vunpack.c.l.b16 %v1567
      %v1590 = vunpack.c.h.b16 %v1567
      %v1591 = vunpack.c.l.b16 %v1568
      %v1592 = vunpack.c.h.b16 %v1568
      %v1593 = vpack.c.b16 %v1577, %v1577
      %v1594 = vpack.c.b16 %v1578, %v1578
      %v1595 = vpack.c.b16 %v1579, %v1579
      %v1596 = vpack.c.b16 %v1580, %v1580
      %v1597 = vpack.c.b16 %v1581, %v1581
      %v1598 = vpack.c.b16 %v1582, %v1582
      %v1599 = vpack.c.b16 %v1583, %v1583
      %v1600 = vpack.c.b16 %v1584, %v1584
      %v1601 = vpack.c.b16 %v1585, %v1585
      %v1602 = vpack.c.b16 %v1586, %v1586
      %v1603 = vpack.c.b16 %v1587, %v1587
      %v1604 = vpack.c.b16 %v1588, %v1588
      %v1605 = vpack.c.b16 %v1589, %v1589
      %v1606 = vpack.c.b16 %v1590, %v1590
      %v1607 = vpack.c.b16 %v1591, %v1591
      %v1608 = vpack.c.b16 %v1592, %v1592
      %1625 = vst [vmem:[#allocation2 + $0x18] sm:$0xf] %v1593
      %1626 = vst [vmem:[#allocation2 + $0x3c] sm:$0xf] %v1594
      %1627 = vst [vmem:[#allocation2 + $0x60] sm:$0xf] %v1595
      %1628 = vst [vmem:[#allocation2 + $0x84] sm:$0xf] %v1596
      %1629 = vst [vmem:[#allocation2 + $0xa8] sm:$0xf] %v1597
      %1630 = vst [vmem:[#allocation2 + $0xcc] sm:$0xf] %v1598
      %1631 = vst [vmem:[#allocation2 + $0xf0] sm:$0xf] %v1599
      %1632 = vst [vmem:[#allocation2 + $0x114] sm:$0xf] %v1600
      %1633 = vst [vmem:[#allocation2 + $0x138] sm:$0xf] %v1601
      %1634 = vst [vmem:[#allocation2 + $0x15c] sm:$0xf] %v1602
      %1635 = vst [vmem:[#allocation2 + $0x180] sm:$0xf] %v1603
      %1636 = vst [vmem:[#allocation2 + $0x1a4] sm:$0xf] %v1604
      %1637 = vst [vmem:[#allocation2 + $0x1c8] sm:$0xf] %v1605
      %1638 = vst [vmem:[#allocation2 + $0x1ec] sm:$0xf] %v1606
      %1639 = vst [vmem:[#allocation2 + $0x210] sm:$0xf] %v1607
      %1640 = vst [vmem:[#allocation2 + $0x234] sm:$0xf] %v1608
      %v1641 = vrot.slane %v274, 3
      %v1642 = vrot.slane %v275, 3
      %v1643 = vrot.slane %v276, 3
      %v1644 = vrot.slane %v277, 3
      %v1645 = vrot.slane %v278, 3
      %v1646 = vrot.slane %v279, 3
      %v1647 = vrot.slane %v280, 3
      %v1648 = vrot.slane %v281, 3
      %v1649 = vrot.slane %v282, 3
      %v1650 = vrot.slane %v283, 3
      %v1651 = vrot.slane %v284, 3
      %v1652 = vrot.slane %v285, 3
      %v1653 = vrot.slane %v286, 3
      %v1654 = vrot.slane %v287, 3
      %v1655 = vrot.slane %v288, 3
      %v1656 = vrot.slane %v289, 3
      %vm1657 = vcmp.lt.s32.totalorder %v291, 5
      %v1658 = vsel %vm1657, %v1655, %v1656
      %v1659 = vsel %vm1657, %v1654, %v1655
      %v1660 = vsel %vm1657, %v1653, %v1654
      %v1661 = vsel %vm1657, %v1652, %v1653
      %v1662 = vsel %vm1657, %v1651, %v1652
      %v1663 = vsel %vm1657, %v1650, %v1651
      %v1664 = vsel %vm1657, %v1649, %v1650
      %v1665 = vsel %vm1657, %v1648, %v1649
      %v1666 = vsel %vm1657, %v1647, %v1648
      %v1667 = vsel %vm1657, %v1646, %v1647
      %v1668 = vsel %vm1657, %v1645, %v1646
      %v1669 = vsel %vm1657, %v1644, %v1645
      %v1670 = vsel %vm1657, %v1643, %v1644
      %v1671 = vsel %vm1657, %v1642, %v1643
      %v1672 = vsel %vm1657, %v1641, %v1642
      %v1673 = vsel %vm1657, %v1656, %v1641
      %vm1674 = vcmp.ge.s32.totalorder %v483, 4294967293
      %vm1675 = vcmp.ge.s32.totalorder %v484, 4294967293
      %vm1676 = vcmp.ge.s32.totalorder %v485, 4294967293
      %vm1677 = vcmp.ge.s32.totalorder %v486, 4294967293
      %vm1678 = vcmp.ge.s32.totalorder %v487, 4294967293
      %vm1679 = vcmp.ge.s32.totalorder %v488, 4294967293
      %vm1680 = vcmp.ge.s32.totalorder %v489, 4294967293
      %vm1681 = vcmp.ge.s32.totalorder %v490, 4294967293
      %vm1682 = vcmp.ge.s32.totalorder %v491, 4294967293
      %vm1683 = vcmp.ge.s32.totalorder %v492, 4294967293
      %vm1684 = vcmp.ge.s32.totalorder %v493, 4294967293
      %vm1685 = vcmp.ge.s32.totalorder %v494, 4294967293
      %vm1686 = vcmp.ge.s32.totalorder %v495, 4294967293
      %vm1687 = vcmp.ge.s32.totalorder %v496, 4294967293
      %vm1688 = vcmp.ge.s32.totalorder %v497, 4294967293
      %vm1689 = vcmp.ge.s32.totalorder %v498, 4294967293
      %vm1690 = vcmp.lt.s32.totalorder %v483, 13
      %vm1691 = vcmp.lt.s32.totalorder %v484, 13
      %vm1692 = vcmp.lt.s32.totalorder %v485, 13
      %vm1693 = vcmp.lt.s32.totalorder %v486, 13
      %vm1694 = vcmp.lt.s32.totalorder %v487, 13
      %vm1695 = vcmp.lt.s32.totalorder %v488, 13
      %vm1696 = vcmp.lt.s32.totalorder %v489, 13
      %vm1697 = vcmp.lt.s32.totalorder %v490, 13
      %vm1698 = vcmp.lt.s32.totalorder %v491, 13
      %vm1699 = vcmp.lt.s32.totalorder %v492, 13
      %vm1700 = vcmp.lt.s32.totalorder %v493, 13
      %vm1701 = vcmp.lt.s32.totalorder %v494, 13
      %vm1702 = vcmp.lt.s32.totalorder %v495, 13
      %vm1703 = vcmp.lt.s32.totalorder %v496, 13
      %vm1704 = vcmp.lt.s32.totalorder %v497, 13
      %vm1705 = vcmp.lt.s32.totalorder %v498, 13
      %vm1706 = vmand %vm1674, %vm1690
      %vm1707 = vmand %vm1675, %vm1691
      %vm1708 = vmand %vm1676, %vm1692
      %vm1709 = vmand %vm1677, %vm1693
      %vm1710 = vmand %vm1678, %vm1694
      %vm1711 = vmand %vm1679, %vm1695
      %vm1712 = vmand %vm1680, %vm1696
      %vm1713 = vmand %vm1681, %vm1697
      %vm1714 = vmand %vm1682, %vm1698
      %vm1715 = vmand %vm1683, %vm1699
      %vm1716 = vmand %vm1684, %vm1700
      %vm1717 = vmand %vm1685, %vm1701
      %vm1718 = vmand %vm1686, %vm1702
      %vm1719 = vmand %vm1687, %vm1703
      %vm1720 = vmand %vm1688, %vm1704
      %vm1721 = vmand %vm1689, %vm1705
      %v1722 = vsel %vm1706, %v1672, 0.0
      %v1723 = vsel %vm1707, %v1671, 0.0
      %v1724 = vsel %vm1708, %v1670, 0.0
      %v1725 = vsel %vm1709, %v1669, 0.0
      %v1726 = vsel %vm1710, %v1668, 0.0
      %v1727 = vsel %vm1711, %v1667, 0.0
      %v1728 = vsel %vm1712, %v1666, 0.0
      %v1729 = vsel %vm1713, %v1665, 0.0
      %v1730 = vsel %vm1714, %v1664, 0.0
      %v1731 = vsel %vm1715, %v1663, 0.0
      %v1732 = vsel %vm1716, %v1662, 0.0
      %v1733 = vsel %vm1717, %v1661, 0.0
      %v1734 = vsel %vm1718, %v1660, 0.0
      %v1735 = vsel %vm1719, %v1659, 0.0
      %v1736 = vsel %vm1720, %v1658, 0.0
      %v1737 = vsel %vm1721, %v1673, 0.0
      %v1738 = vpack.c.bf16 %v1723, %v1722
      %v1739 = vpack.c.bf16 %v1725, %v1724
      %v1740 = vpack.c.bf16 %v1727, %v1726
      %v1741 = vpack.c.bf16 %v1729, %v1728
      %v1742 = vpack.c.bf16 %v1731, %v1730
      %v1743 = vpack.c.bf16 %v1733, %v1732
      %v1744 = vpack.c.bf16 %v1735, %v1734
      %v1745 = vpack.c.bf16 %v1737, %v1736
      %v1754 = vunpack.c.l.b16 %v1738
      %v1755 = vunpack.c.h.b16 %v1738
      %v1756 = vunpack.c.l.b16 %v1739
      %v1757 = vunpack.c.h.b16 %v1739
      %v1758 = vunpack.c.l.b16 %v1740
      %v1759 = vunpack.c.h.b16 %v1740
      %v1760 = vunpack.c.l.b16 %v1741
      %v1761 = vunpack.c.h.b16 %v1741
      %v1762 = vunpack.c.l.b16 %v1742
      %v1763 = vunpack.c.h.b16 %v1742
      %v1764 = vunpack.c.l.b16 %v1743
      %v1765 = vunpack.c.h.b16 %v1743
      %v1766 = vunpack.c.l.b16 %v1744
      %v1767 = vunpack.c.h.b16 %v1744
      %v1768 = vunpack.c.l.b16 %v1745
      %v1769 = vunpack.c.h.b16 %v1745
      %v1770 = vpack.c.b16 %v1754, %v1754
      %v1771 = vpack.c.b16 %v1755, %v1755
      %v1772 = vpack.c.b16 %v1756, %v1756
      %v1773 = vpack.c.b16 %v1757, %v1757
      %v1774 = vpack.c.b16 %v1758, %v1758
      %v1775 = vpack.c.b16 %v1759, %v1759
      %v1776 = vpack.c.b16 %v1760, %v1760
      %v1777 = vpack.c.b16 %v1761, %v1761
      %v1778 = vpack.c.b16 %v1762, %v1762
      %v1779 = vpack.c.b16 %v1763, %v1763
      %v1780 = vpack.c.b16 %v1764, %v1764
      %v1781 = vpack.c.b16 %v1765, %v1765
      %v1782 = vpack.c.b16 %v1766, %v1766
      %v1783 = vpack.c.b16 %v1767, %v1767
      %v1784 = vpack.c.b16 %v1768, %v1768
      %v1785 = vpack.c.b16 %v1769, %v1769
      %1802 = vst [vmem:[#allocation2 + $0x1c] sm:$0xf] %v1770
      %1803 = vst [vmem:[#allocation2 + $0x40] sm:$0xf] %v1771
      %1804 = vst [vmem:[#allocation2 + $0x64] sm:$0xf] %v1772
      %1805 = vst [vmem:[#allocation2 + $0x88] sm:$0xf] %v1773
      %1806 = vst [vmem:[#allocation2 + $0xac] sm:$0xf] %v1774
      %1807 = vst [vmem:[#allocation2 + $0xd0] sm:$0xf] %v1775
      %1808 = vst [vmem:[#allocation2 + $0xf4] sm:$0xf] %v1776
      %1809 = vst [vmem:[#allocation2 + $0x118] sm:$0xf] %v1777
      %1810 = vst [vmem:[#allocation2 + $0x13c] sm:$0xf] %v1778
      %1811 = vst [vmem:[#allocation2 + $0x160] sm:$0xf] %v1779
      %1812 = vst [vmem:[#allocation2 + $0x184] sm:$0xf] %v1780
      %1813 = vst [vmem:[#allocation2 + $0x1a8] sm:$0xf] %v1781
      %1814 = vst [vmem:[#allocation2 + $0x1cc] sm:$0xf] %v1782
      %1815 = vst [vmem:[#allocation2 + $0x1f0] sm:$0xf] %v1783
      %1816 = vst [vmem:[#allocation2 + $0x214] sm:$0xf] %v1784
      %1817 = vst [vmem:[#allocation2 + $0x238] sm:$0xf] %v1785
      %vm1818 = vcmp.ge.s32.totalorder %v483, 4294967292
      %vm1819 = vcmp.ge.s32.totalorder %v484, 4294967292
      %vm1820 = vcmp.ge.s32.totalorder %v485, 4294967292
      %vm1821 = vcmp.ge.s32.totalorder %v486, 4294967292
      %vm1822 = vcmp.ge.s32.totalorder %v487, 4294967292
      %vm1823 = vcmp.ge.s32.totalorder %v488, 4294967292
      %vm1824 = vcmp.ge.s32.totalorder %v489, 4294967292
      %vm1825 = vcmp.ge.s32.totalorder %v490, 4294967292
      %vm1826 = vcmp.ge.s32.totalorder %v491, 4294967292
      %vm1827 = vcmp.ge.s32.totalorder %v492, 4294967292
      %vm1828 = vcmp.ge.s32.totalorder %v493, 4294967292
      %vm1829 = vcmp.ge.s32.totalorder %v494, 4294967292
      %vm1830 = vcmp.ge.s32.totalorder %v495, 4294967292
      %vm1831 = vcmp.ge.s32.totalorder %v496, 4294967292
      %vm1832 = vcmp.ge.s32.totalorder %v497, 4294967292
      %vm1833 = vcmp.ge.s32.totalorder %v498, 4294967292
      %vm1834 = vcmp.lt.s32.totalorder %v483, 12
      %vm1835 = vcmp.lt.s32.totalorder %v484, 12
      %vm1836 = vcmp.lt.s32.totalorder %v485, 12
      %vm1837 = vcmp.lt.s32.totalorder %v486, 12
      %vm1838 = vcmp.lt.s32.totalorder %v487, 12
      %vm1839 = vcmp.lt.s32.totalorder %v488, 12
      %vm1840 = vcmp.lt.s32.totalorder %v489, 12
      %vm1841 = vcmp.lt.s32.totalorder %v490, 12
      %vm1842 = vcmp.lt.s32.totalorder %v491, 12
      %vm1843 = vcmp.lt.s32.totalorder %v492, 12
      %vm1844 = vcmp.lt.s32.totalorder %v493, 12
      %vm1845 = vcmp.lt.s32.totalorder %v494, 12
      %vm1846 = vcmp.lt.s32.totalorder %v495, 12
      %vm1847 = vcmp.lt.s32.totalorder %v496, 12
      %vm1848 = vcmp.lt.s32.totalorder %v497, 12
      %vm1849 = vcmp.lt.s32.totalorder %v498, 12
      %vm1850 = vmand %vm1818, %vm1834
      %vm1851 = vmand %vm1819, %vm1835
      %vm1852 = vmand %vm1820, %vm1836
      %vm1853 = vmand %vm1821, %vm1837
      %vm1854 = vmand %vm1822, %vm1838
      %vm1855 = vmand %vm1823, %vm1839
      %vm1856 = vmand %vm1824, %vm1840
      %vm1857 = vmand %vm1825, %vm1841
      %vm1858 = vmand %vm1826, %vm1842
      %vm1859 = vmand %vm1827, %vm1843
      %vm1860 = vmand %vm1828, %vm1844
      %vm1861 = vmand %vm1829, %vm1845
      %vm1862 = vmand %vm1830, %vm1846
      %vm1863 = vmand %vm1831, %vm1847
      %vm1864 = vmand %vm1832, %vm1848
      %vm1865 = vmand %vm1833, %vm1849
      %v1866 = vsel %vm1850, %v530, 0.0
      %v1867 = vsel %vm1851, %v529, 0.0
      %v1868 = vsel %vm1852, %v528, 0.0
      %v1869 = vsel %vm1853, %v527, 0.0
      %v1870 = vsel %vm1854, %v526, 0.0
      %v1871 = vsel %vm1855, %v525, 0.0
      %v1872 = vsel %vm1856, %v524, 0.0
      %v1873 = vsel %vm1857, %v523, 0.0
      %v1874 = vsel %vm1858, %v522, 0.0
      %v1875 = vsel %vm1859, %v521, 0.0
      %v1876 = vsel %vm1860, %v520, 0.0
      %v1877 = vsel %vm1861, %v519, 0.0
      %v1878 = vsel %vm1862, %v518, 0.0
      %v1879 = vsel %vm1863, %v517, 0.0
      %v1880 = vsel %vm1864, %v516, 0.0
      %v1881 = vsel %vm1865, %v531, 0.0
      %v1882 = vpack.c.bf16 %v1867, %v1866
      %v1883 = vpack.c.bf16 %v1869, %v1868
      %v1884 = vpack.c.bf16 %v1871, %v1870
      %v1885 = vpack.c.bf16 %v1873, %v1872
      %v1886 = vpack.c.bf16 %v1875, %v1874
      %v1887 = vpack.c.bf16 %v1877, %v1876
      %v1888 = vpack.c.bf16 %v1879, %v1878
      %v1889 = vpack.c.bf16 %v1881, %v1880
      %v1898 = vunpack.c.l.b16 %v1882
      %v1899 = vunpack.c.h.b16 %v1882
      %v1900 = vunpack.c.l.b16 %v1883
      %v1901 = vunpack.c.h.b16 %v1883
      %v1902 = vunpack.c.l.b16 %v1884
      %v1903 = vunpack.c.h.b16 %v1884
      %v1904 = vunpack.c.l.b16 %v1885
      %v1905 = vunpack.c.h.b16 %v1885
      %v1906 = vunpack.c.l.b16 %v1886
      %v1907 = vunpack.c.h.b16 %v1886
      %v1908 = vunpack.c.l.b16 %v1887
      %v1909 = vunpack.c.h.b16 %v1887
      %v1910 = vunpack.c.l.b16 %v1888
      %v1911 = vunpack.c.h.b16 %v1888
      %v1912 = vunpack.c.l.b16 %v1889
      %v1913 = vunpack.c.h.b16 %v1889
      %v1914 = vpack.c.b16 %v1898, %v1898
      %v1915 = vpack.c.b16 %v1899, %v1899
      %v1916 = vpack.c.b16 %v1900, %v1900
      %v1917 = vpack.c.b16 %v1901, %v1901
      %v1918 = vpack.c.b16 %v1902, %v1902
      %v1919 = vpack.c.b16 %v1903, %v1903
      %v1920 = vpack.c.b16 %v1904, %v1904
      %v1921 = vpack.c.b16 %v1905, %v1905
      %v1922 = vpack.c.b16 %v1906, %v1906
      %v1923 = vpack.c.b16 %v1907, %v1907
      %v1924 = vpack.c.b16 %v1908, %v1908
      %v1925 = vpack.c.b16 %v1909, %v1909
      %v1926 = vpack.c.b16 %v1910, %v1910
      %v1927 = vpack.c.b16 %v1911, %v1911
      %v1928 = vpack.c.b16 %v1912, %v1912
      %v1929 = vpack.c.b16 %v1913, %v1913
      %1946 = vst [vmem:[#allocation2 + $0x20] sm:$0xf] %v1914
      %1947 = vst [vmem:[#allocation2 + $0x44] sm:$0xf] %v1915
      %1948 = vst [vmem:[#allocation2 + $0x68] sm:$0xf] %v1916
      %1949 = vst [vmem:[#allocation2 + $0x8c] sm:$0xf] %v1917
      %1950 = vst [vmem:[#allocation2 + $0xb0] sm:$0xf] %v1918
      %1951 = vst [vmem:[#allocation2 + $0xd4] sm:$0xf] %v1919
      %1952 = vst [vmem:[#allocation2 + $0xf8] sm:$0xf] %v1920
      %1953 = vst [vmem:[#allocation2 + $0x11c] sm:$0xf] %v1921
      %1954 = vst [vmem:[#allocation2 + $0x140] sm:$0xf] %v1922
      %1955 = vst [vmem:[#allocation2 + $0x164] sm:$0xf] %v1923
      %1956 = vst [vmem:[#allocation2 + $0x188] sm:$0xf] %v1924
      %1957 = vst [vmem:[#allocation2 + $0x1ac] sm:$0xf] %v1925
      %1958 = vst [vmem:[#allocation2 + $0x1d0] sm:$0xf] %v1926
      %1959 = vst [vmem:[#allocation2 + $0x1f4] sm:$0xf] %v1927
      %1960 = vst [vmem:[#allocation2 + $0x218] sm:$0xf] %v1928
      %1961 = vst [vmem:[#allocation2 + $0x23c] sm:$0xf] %v1929
      %v1962 = vld [vmem:[#allocation2] sm:$0xff]
      %v1963 = vld [vmem:[#allocation2 + $0x8] sm:$0xff]
      %v1964 = vld [vmem:[#allocation2 + $0x10] sm:$0xff]
      %v1965 = vld [vmem:[#allocation2 + $0x18] sm:$0xff]
      %v1966 = vld [vmem:[#allocation2 + $0x20] sm:$0xf]
      %v1967 = vld [vmem:[#allocation2 + $0x24] sm:$0xff]
      %v1968 = vld [vmem:[#allocation2 + $0x2c] sm:$0xff]
      %v1969 = vld [vmem:[#allocation2 + $0x34] sm:$0xff]
      %v1970 = vld [vmem:[#allocation2 + $0x3c] sm:$0xff]
      %v1971 = vld [vmem:[#allocation2 + $0x44] sm:$0xf]
      %v1972 = vld [vmem:[#allocation2 + $0x48] sm:$0xff]
      %v1973 = vld [vmem:[#allocation2 + $0x50] sm:$0xff]
      %v1974 = vld [vmem:[#allocation2 + $0x58] sm:$0xff]
      %v1975 = vld [vmem:[#allocation2 + $0x60] sm:$0xff]
      %v1976 = vld [vmem:[#allocation2 + $0x68] sm:$0xf]
      %v1977 = vld [vmem:[#allocation2 + $0x6c] sm:$0xff]
      %v1978 = vld [vmem:[#allocation2 + $0x74] sm:$0xff]
      %v1979 = vld [vmem:[#allocation2 + $0x7c] sm:$0xff]
      %v1980 = vld [vmem:[#allocation2 + $0x84] sm:$0xff]
      %v1981 = vld [vmem:[#allocation2 + $0x8c] sm:$0xf]
      %v1982 = vld [vmem:[#allocation2 + $0x90] sm:$0xff]
      %v1983 = vld [vmem:[#allocation2 + $0x98] sm:$0xff]
      %v1984 = vld [vmem:[#allocation2 + $0xa0] sm:$0xff]
      %v1985 = vld [vmem:[#allocation2 + $0xa8] sm:$0xff]
      %v1986 = vld [vmem:[#allocation2 + $0xb0] sm:$0xf]
      %v1987 = vld [vmem:[#allocation2 + $0xb4] sm:$0xff]
      %v1988 = vld [vmem:[#allocation2 + $0xbc] sm:$0xff]
      %v1989 = vld [vmem:[#allocation2 + $0xc4] sm:$0xff]
      %v1990 = vld [vmem:[#allocation2 + $0xcc] sm:$0xff]
      %v1991 = vld [vmem:[#allocation2 + $0xd4] sm:$0xf]
      %v1992 = vld [vmem:[#allocation2 + $0xd8] sm:$0xff]
      %v1993 = vld [vmem:[#allocation2 + $0xe0] sm:$0xff]
      %v1994 = vld [vmem:[#allocation2 + $0xe8] sm:$0xff]
      %v1995 = vld [vmem:[#allocation2 + $0xf0] sm:$0xff]
      %v1996 = vld [vmem:[#allocation2 + $0xf8] sm:$0xf]
      %v1997 = vld [vmem:[#allocation2 + $0xfc] sm:$0xff]
      %v1998 = vld [vmem:[#allocation2 + $0x104] sm:$0xff]
      %v1999 = vld [vmem:[#allocation2 + $0x10c] sm:$0xff]
      %v2000 = vld [vmem:[#allocation2 + $0x114] sm:$0xff]
      %v2001 = vld [vmem:[#allocation2 + $0x11c] sm:$0xf]
      %v2002 = vld [vmem:[#allocation2 + $0x120] sm:$0xff]
      %v2003 = vld [vmem:[#allocation2 + $0x128] sm:$0xff]
      %v2004 = vld [vmem:[#allocation2 + $0x130] sm:$0xff]
      %v2005 = vld [vmem:[#allocation2 + $0x138] sm:$0xff]
      %v2006 = vld [vmem:[#allocation2 + $0x140] sm:$0xf]
      %v2007 = vld [vmem:[#allocation2 + $0x144] sm:$0xff]
      %v2008 = vld [vmem:[#allocation2 + $0x14c] sm:$0xff]
      %v2009 = vld [vmem:[#allocation2 + $0x154] sm:$0xff]
      %v2010 = vld [vmem:[#allocation2 + $0x15c] sm:$0xff]
      %v2011 = vld [vmem:[#allocation2 + $0x164] sm:$0xf]
      %v2012 = vld [vmem:[#allocation2 + $0x168] sm:$0xff]
      %v2013 = vld [vmem:[#allocation2 + $0x170] sm:$0xff]
      %v2014 = vld [vmem:[#allocation2 + $0x178] sm:$0xff]
      %v2015 = vld [vmem:[#allocation2 + $0x180] sm:$0xff]
      %v2016 = vld [vmem:[#allocation2 + $0x188] sm:$0xf]
      %v2017 = vld [vmem:[#allocation2 + $0x18c] sm:$0xff]
      %v2018 = vld [vmem:[#allocation2 + $0x194] sm:$0xff]
      %v2019 = vld [vmem:[#allocation2 + $0x19c] sm:$0xff]
      %v2020 = vld [vmem:[#allocation2 + $0x1a4] sm:$0xff]
      %v2021 = vld [vmem:[#allocation2 + $0x1ac] sm:$0xf]
      %v2022 = vld [vmem:[#allocation2 + $0x1b0] sm:$0xff]
      %v2023 = vld [vmem:[#allocation2 + $0x1b8] sm:$0xff]
      %v2024 = vld [vmem:[#allocation2 + $0x1c0] sm:$0xff]
      %v2025 = vld [vmem:[#allocation2 + $0x1c8] sm:$0xff]
      %v2026 = vld [vmem:[#allocation2 + $0x1d0] sm:$0xf]
      %v2027 = vld [vmem:[#allocation2 + $0x1d4] sm:$0xff]
      %v2028 = vld [vmem:[#allocation2 + $0x1dc] sm:$0xff]
      %v2029 = vld [vmem:[#allocation2 + $0x1e4] sm:$0xff]
      %v2030 = vld [vmem:[#allocation2 + $0x1ec] sm:$0xff]
      %v2031 = vld [vmem:[#allocation2 + $0x1f4] sm:$0xf]
      %v2032 = vld [vmem:[#allocation2 + $0x1f8] sm:$0xff]
      %v2033 = vld [vmem:[#allocation2 + $0x200] sm:$0xff]
      %v2034 = vld [vmem:[#allocation2 + $0x208] sm:$0xff]
      %v2035 = vld [vmem:[#allocation2 + $0x210] sm:$0xff]
      %v2036 = vld [vmem:[#allocation2 + $0x218] sm:$0xf]
      %v2037 = vld [vmem:[#allocation2 + $0x21c] sm:$0xff]
      %v2038 = vld [vmem:[#allocation2 + $0x224] sm:$0xff]
      %v2039 = vld [vmem:[#allocation2 + $0x22c] sm:$0xff]
      %v2040 = vld [vmem:[#allocation2 + $0x234] sm:$0xff]
      %v2041 = vld [vmem:[#allocation2 + $0x23c] sm:$0xf]
      %v2042 = vld [vmem:[%s1] sm:$0xf]
      %v2043 = vld [vmem:[%s1 + $0x4] sm:$0xf]
      %v2044 = vld [vmem:[%s1 + $0x8] sm:$0xf]
      %v2045 = vld [vmem:[%s1 + $0xc] sm:$0xf]
      %v2046 = vld [vmem:[%s1 + $0x10] sm:$0xf]
      %v2047 = vld [vmem:[%s1 + $0x14] sm:$0xf]
      %v2048 = vld [vmem:[%s1 + $0x18] sm:$0xf]
      %v2049 = vld [vmem:[%s1 + $0x1c] sm:$0xf]
      %v2050 = vld [vmem:[%s1 + $0x20] sm:$0xf]
      %v2051 = vld [vmem:[%s1 + $0x24] sm:$0xf]
      %v2052 = vld [vmem:[%s1 + $0x28] sm:$0xf]
      %v2053 = vld [vmem:[%s1 + $0x2c] sm:$0xf]
      %v2054 = vld [vmem:[%s1 + $0x30] sm:$0xf]
      %v2055 = vld [vmem:[%s1 + $0x34] sm:$0xf]
      %v2056 = vld [vmem:[%s1 + $0x38] sm:$0xf]
      %v2057 = vld [vmem:[%s1 + $0x3c] sm:$0xf]
      %v2058 = vld [vmem:[%s1 + $0x40] sm:$0xf]
      %v2059 = vld [vmem:[%s1 + $0x44] sm:$0xf]
      %v2060 = vld [vmem:[%s1 + $0x48] sm:$0xf]
      %v2061 = vld [vmem:[%s1 + $0x4c] sm:$0xf]
      %v2062 = vld [vmem:[%s1 + $0x50] sm:$0xf]
      %v2063 = vld [vmem:[%s1 + $0x54] sm:$0xf]
      %v2064 = vld [vmem:[%s1 + $0x58] sm:$0xf]
      %v2065 = vld [vmem:[%s1 + $0x5c] sm:$0xf]
      %v2066 = vld [vmem:[%s1 + $0x60] sm:$0xf]
      %v2067 = vld [vmem:[%s1 + $0x64] sm:$0xf]
      %v2068 = vld [vmem:[%s1 + $0x68] sm:$0xf]
      %v2069 = vld [vmem:[%s1 + $0x6c] sm:$0xf]
      %v2070 = vld [vmem:[%s1 + $0x70] sm:$0xf]
      %v2071 = vld [vmem:[%s1 + $0x74] sm:$0xf]
      %v2072 = vld [vmem:[%s1 + $0x78] sm:$0xf]
      %v2073 = vld [vmem:[%s1 + $0x7c] sm:$0xf]
      %v2074 = vld [vmem:[%s1 + $0x80] sm:$0xf]
      %v2075 = vld [vmem:[%s1 + $0x84] sm:$0xf]
      %v2076 = vld [vmem:[%s1 + $0x88] sm:$0xf]
      %v2077 = vld [vmem:[%s1 + $0x8c] sm:$0xf]
      %v2078 = vld [vmem:[%s1 + $0x90] sm:$0xf]
      %v2079 = vld [vmem:[%s1 + $0x94] sm:$0xf]
      %v2080 = vld [vmem:[%s1 + $0x98] sm:$0xf]
      %v2081 = vld [vmem:[%s1 + $0x9c] sm:$0xf]
      %v2082 = vld [vmem:[%s1 + $0xa0] sm:$0xf]
      %v2083 = vld [vmem:[%s1 + $0xa4] sm:$0xf]
      %v2084 = vld [vmem:[%s1 + $0xa8] sm:$0xf]
      %v2085 = vld [vmem:[%s1 + $0xac] sm:$0xf]
      %v2086 = vld [vmem:[%s1 + $0xb0] sm:$0xf]
      %v2087 = vld [vmem:[%s1 + $0xb4] sm:$0xf]
      %v2088 = vld [vmem:[%s1 + $0xb8] sm:$0xf]
      %v2089 = vld [vmem:[%s1 + $0xbc] sm:$0xf]
      %v2090 = vld [vmem:[%s1 + $0xc0] sm:$0xf]
      %v2091 = vld [vmem:[%s1 + $0xc4] sm:$0xf]
      %v2092 = vld [vmem:[%s1 + $0xc8] sm:$0xf]
      %v2093 = vld [vmem:[%s1 + $0xcc] sm:$0xf]
      %v2094 = vld [vmem:[%s1 + $0xd0] sm:$0xf]
      %v2095 = vld [vmem:[%s1 + $0xd4] sm:$0xf]
      %v2096 = vld [vmem:[%s1 + $0xd8] sm:$0xf]
      %v2097 = vld [vmem:[%s1 + $0xdc] sm:$0xf]
      %v2098 = vld [vmem:[%s1 + $0xe0] sm:$0xf]
      %v2099 = vld [vmem:[%s1 + $0xe4] sm:$0xf]
      %v2100 = vld [vmem:[%s1 + $0xe8] sm:$0xf]
      %v2101 = vld [vmem:[%s1 + $0xec] sm:$0xf]
      %v2102 = vld [vmem:[%s1 + $0xf0] sm:$0xf]
      %v2103 = vld [vmem:[%s1 + $0xf4] sm:$0xf]
      %v2104 = vld [vmem:[%s1 + $0xf8] sm:$0xf]
      %v2105 = vld [vmem:[%s1 + $0xfc] sm:$0xf]
      %v2106 = vld [vmem:[%s1 + $0x100] sm:$0xf]
      %v2107 = vld [vmem:[%s1 + $0x104] sm:$0xf]
      %v2108 = vld [vmem:[%s1 + $0x108] sm:$0xf]
      %v2109 = vld [vmem:[%s1 + $0x10c] sm:$0xf]
      %v2110 = vld [vmem:[%s1 + $0x110] sm:$0xf]
      %v2111 = vld [vmem:[%s1 + $0x114] sm:$0xf]
      %v2112 = vld [vmem:[%s1 + $0x118] sm:$0xf]
      %v2113 = vld [vmem:[%s1 + $0x11c] sm:$0xf]
      %v2114 = vld [vmem:[%s1 + $0x120] sm:$0xf]
      %v2115 = vld [vmem:[%s1 + $0x124] sm:$0xf]
      %v2116 = vld [vmem:[%s1 + $0x128] sm:$0xf]
      %v2117 = vld [vmem:[%s1 + $0x12c] sm:$0xf]
      %v2118 = vld [vmem:[%s1 + $0x130] sm:$0xf]
      %v2119 = vld [vmem:[%s1 + $0x134] sm:$0xf]
      %v2120 = vld [vmem:[%s1 + $0x138] sm:$0xf]
      %v2121 = vld [vmem:[%s1 + $0x13c] sm:$0xf]
      %v2122 = vld [vmem:[%s1 + $0x140] sm:$0xf]
      %v2123 = vld [vmem:[%s1 + $0x144] sm:$0xf]
      %v2124 = vld [vmem:[%s1 + $0x148] sm:$0xf]
      %v2125 = vld [vmem:[%s1 + $0x14c] sm:$0xf]
      %v2126 = vld [vmem:[%s1 + $0x150] sm:$0xf]
      %v2127 = vld [vmem:[%s1 + $0x154] sm:$0xf]
      %v2128 = vld [vmem:[%s1 + $0x158] sm:$0xf]
      %v2129 = vld [vmem:[%s1 + $0x15c] sm:$0xf]
      %v2130 = vld [vmem:[%s1 + $0x160] sm:$0xf]
      %v2131 = vld [vmem:[%s1 + $0x164] sm:$0xf]
      %v2132 = vld [vmem:[%s1 + $0x168] sm:$0xf]
      %v2133 = vld [vmem:[%s1 + $0x16c] sm:$0xf]
      %v2134 = vld [vmem:[%s1 + $0x170] sm:$0xf]
      %v2135 = vld [vmem:[%s1 + $0x174] sm:$0xf]
      %v2136 = vld [vmem:[%s1 + $0x178] sm:$0xf]
      %v2137 = vld [vmem:[%s1 + $0x17c] sm:$0xf]
      %v2138 = vld [vmem:[%s1 + $0x180] sm:$0xf]
      %v2139 = vld [vmem:[%s1 + $0x184] sm:$0xf]
      %v2140 = vld [vmem:[%s1 + $0x188] sm:$0xf]
      %v2141 = vld [vmem:[%s1 + $0x18c] sm:$0xf]
      %v2142 = vld [vmem:[%s1 + $0x190] sm:$0xf]
      %v2143 = vld [vmem:[%s1 + $0x194] sm:$0xf]
      %v2144 = vld [vmem:[%s1 + $0x198] sm:$0xf]
      %v2145 = vld [vmem:[%s1 + $0x19c] sm:$0xf]
      %v2146 = vld [vmem:[%s1 + $0x1a0] sm:$0xf]
      %v2147 = vld [vmem:[%s1 + $0x1a4] sm:$0xf]
      %v2148 = vld [vmem:[%s1 + $0x1a8] sm:$0xf]
      %v2149 = vld [vmem:[%s1 + $0x1ac] sm:$0xf]
      %v2150 = vld [vmem:[%s1 + $0x1b0] sm:$0xf]
      %v2151 = vld [vmem:[%s1 + $0x1b4] sm:$0xf]
      %v2152 = vld [vmem:[%s1 + $0x1b8] sm:$0xf]
      %v2153 = vld [vmem:[%s1 + $0x1bc] sm:$0xf]
      %v2154 = vld [vmem:[%s1 + $0x1c0] sm:$0xf]
      %v2155 = vld [vmem:[%s1 + $0x1c4] sm:$0xf]
      %v2156 = vld [vmem:[%s1 + $0x1c8] sm:$0xf]
      %v2157 = vld [vmem:[%s1 + $0x1cc] sm:$0xf]
      %v2158 = vld [vmem:[%s1 + $0x1d0] sm:$0xf]
      %v2159 = vld [vmem:[%s1 + $0x1d4] sm:$0xf]
      %v2160 = vld [vmem:[%s1 + $0x1d8] sm:$0xf]
      %v2161 = vld [vmem:[%s1 + $0x1dc] sm:$0xf]
      %v2162 = vld [vmem:[%s1 + $0x1e0] sm:$0xf]
      %v2163 = vld [vmem:[%s1 + $0x1e4] sm:$0xf]
      %v2164 = vld [vmem:[%s1 + $0x1e8] sm:$0xf]
      %v2165 = vld [vmem:[%s1 + $0x1ec] sm:$0xf]
      %v2166 = vld [vmem:[%s1 + $0x1f0] sm:$0xf]
      %v2167 = vld [vmem:[%s1 + $0x1f4] sm:$0xf]
      %v2168 = vld [vmem:[%s1 + $0x1f8] sm:$0xf]
      %v2169 = vld [vmem:[%s1 + $0x1fc] sm:$0xf]
      %v2170 = vld [vmem:[%s1 + $0x200] sm:$0xf]
      %v2171 = vld [vmem:[%s1 + $0x204] sm:$0xf]
      %v2172 = vld [vmem:[%s1 + $0x208] sm:$0xf]
      %v2173 = vld [vmem:[%s1 + $0x20c] sm:$0xf]
      %v2174 = vld [vmem:[%s1 + $0x210] sm:$0xf]
      %v2175 = vld [vmem:[%s1 + $0x214] sm:$0xf]
      %v2176 = vld [vmem:[%s1 + $0x218] sm:$0xf]
      %v2177 = vld [vmem:[%s1 + $0x21c] sm:$0xf]
      %v2178 = vld [vmem:[%s1 + $0x220] sm:$0xf]
      %v2179 = vld [vmem:[%s1 + $0x224] sm:$0xf]
      %v2180 = vld [vmem:[%s1 + $0x228] sm:$0xf]
      %v2181 = vld [vmem:[%s1 + $0x22c] sm:$0xf]
      %v2182 = vld [vmem:[%s1 + $0x230] sm:$0xf]
      %v2183 = vld [vmem:[%s1 + $0x234] sm:$0xf]
      %v2184 = vld [vmem:[%s1 + $0x238] sm:$0xf]
      %v2185 = vld [vmem:[%s1 + $0x23c] sm:$0xf]
      %v2266 = vunpack.c.l.b16 %v1962
      %v2267 = vunpack.c.h.b16 %v1962
      %v2268 = vunpack.c.l.b16 %v1963
      %v2269 = vunpack.c.h.b16 %v1963
      %v2270 = vunpack.c.l.b16 %v1964
      %v2271 = vunpack.c.h.b16 %v1964
      %v2272 = vunpack.c.l.b16 %v1965
      %v2273 = vunpack.c.h.b16 %v1965
      %v2274 = vunpack.c.l.b16 %v1966
      %v2275 = vunpack.c.l.b16 %v1967
      %v2276 = vunpack.c.h.b16 %v1967
      %v2277 = vunpack.c.l.b16 %v1968
      %v2278 = vunpack.c.h.b16 %v1968
      %v2279 = vunpack.c.l.b16 %v1969
      %v2280 = vunpack.c.h.b16 %v1969
      %v2281 = vunpack.c.l.b16 %v1970
      %v2282 = vunpack.c.h.b16 %v1970
      %v2283 = vunpack.c.l.b16 %v1971
      %v2284 = vunpack.c.l.b16 %v1972
      %v2285 = vunpack.c.h.b16 %v1972
      %v2286 = vunpack.c.l.b16 %v1973
      %v2287 = vunpack.c.h.b16 %v1973
      %v2288 = vunpack.c.l.b16 %v1974
      %v2289 = vunpack.c.h.b16 %v1974
      %v2290 = vunpack.c.l.b16 %v1975
      %v2291 = vunpack.c.h.b16 %v1975
      %v2292 = vunpack.c.l.b16 %v1976
      %v2293 = vunpack.c.l.b16 %v1977
      %v2294 = vunpack.c.h.b16 %v1977
      %v2295 = vunpack.c.l.b16 %v1978
      %v2296 = vunpack.c.h.b16 %v1978
      %v2297 = vunpack.c.l.b16 %v1979
      %v2298 = vunpack.c.h.b16 %v1979
      %v2299 = vunpack.c.l.b16 %v1980
      %v2300 = vunpack.c.h.b16 %v1980
      %v2301 = vunpack.c.l.b16 %v1981
      %v2302 = vunpack.c.l.b16 %v1982
      %v2303 = vunpack.c.h.b16 %v1982
      %v2304 = vunpack.c.l.b16 %v1983
      %v2305 = vunpack.c.h.b16 %v1983
      %v2306 = vunpack.c.l.b16 %v1984
      %v2307 = vunpack.c.h.b16 %v1984
      %v2308 = vunpack.c.l.b16 %v1985
      %v2309 = vunpack.c.h.b16 %v1985
      %v2310 = vunpack.c.l.b16 %v1986
      %v2311 = vunpack.c.l.b16 %v1987
      %v2312 = vunpack.c.h.b16 %v1987
      %v2313 = vunpack.c.l.b16 %v1988
      %v2314 = vunpack.c.h.b16 %v1988
      %v2315 = vunpack.c.l.b16 %v1989
      %v2316 = vunpack.c.h.b16 %v1989
      %v2317 = vunpack.c.l.b16 %v1990
      %v2318 = vunpack.c.h.b16 %v1990
      %v2319 = vunpack.c.l.b16 %v1991
      %v2320 = vunpack.c.l.b16 %v1992
      %v2321 = vunpack.c.h.b16 %v1992
      %v2322 = vunpack.c.l.b16 %v1993
      %v2323 = vunpack.c.h.b16 %v1993
      %v2324 = vunpack.c.l.b16 %v1994
      %v2325 = vunpack.c.h.b16 %v1994
      %v2326 = vunpack.c.l.b16 %v1995
      %v2327 = vunpack.c.h.b16 %v1995
      %v2328 = vunpack.c.l.b16 %v1996
      %v2329 = vunpack.c.l.b16 %v1997
      %v2330 = vunpack.c.h.b16 %v1997
      %v2331 = vunpack.c.l.b16 %v1998
      %v2332 = vunpack.c.h.b16 %v1998
      %v2333 = vunpack.c.l.b16 %v1999
      %v2334 = vunpack.c.h.b16 %v1999
      %v2335 = vunpack.c.l.b16 %v2000
      %v2336 = vunpack.c.h.b16 %v2000
      %v2337 = vunpack.c.l.b16 %v2001
      %v2338 = vunpack.c.l.b16 %v2002
      %v2339 = vunpack.c.h.b16 %v2002
      %v2340 = vunpack.c.l.b16 %v2003
      %v2341 = vunpack.c.h.b16 %v2003
      %v2342 = vunpack.c.l.b16 %v2004
      %v2343 = vunpack.c.h.b16 %v2004
      %v2344 = vunpack.c.l.b16 %v2005
      %v2345 = vunpack.c.h.b16 %v2005
      %v2346 = vunpack.c.l.b16 %v2006
      %v2347 = vunpack.c.l.b16 %v2007
      %v2348 = vunpack.c.h.b16 %v2007
      %v2349 = vunpack.c.l.b16 %v2008
      %v2350 = vunpack.c.h.b16 %v2008
      %v2351 = vunpack.c.l.b16 %v2009
      %v2352 = vunpack.c.h.b16 %v2009
      %v2353 = vunpack.c.l.b16 %v2010
      %v2354 = vunpack.c.h.b16 %v2010
      %v2355 = vunpack.c.l.b16 %v2011
      %v2356 = vunpack.c.l.b16 %v2012
      %v2357 = vunpack.c.h.b16 %v2012
      %v2358 = vunpack.c.l.b16 %v2013
      %v2359 = vunpack.c.h.b16 %v2013
      %v2360 = vunpack.c.l.b16 %v2014
      %v2361 = vunpack.c.h.b16 %v2014
      %v2362 = vunpack.c.l.b16 %v2015
      %v2363 = vunpack.c.h.b16 %v2015
      %v2364 = vunpack.c.l.b16 %v2016
      %v2365 = vunpack.c.l.b16 %v2017
      %v2366 = vunpack.c.h.b16 %v2017
      %v2367 = vunpack.c.l.b16 %v2018
      %v2368 = vunpack.c.h.b16 %v2018
      %v2369 = vunpack.c.l.b16 %v2019
      %v2370 = vunpack.c.h.b16 %v2019
      %v2371 = vunpack.c.l.b16 %v2020
      %v2372 = vunpack.c.h.b16 %v2020
      %v2373 = vunpack.c.l.b16 %v2021
      %v2374 = vunpack.c.l.b16 %v2022
      %v2375 = vunpack.c.h.b16 %v2022
      %v2376 = vunpack.c.l.b16 %v2023
      %v2377 = vunpack.c.h.b16 %v2023
      %v2378 = vunpack.c.l.b16 %v2024
      %v2379 = vunpack.c.h.b16 %v2024
      %v2380 = vunpack.c.l.b16 %v2025
      %v2381 = vunpack.c.h.b16 %v2025
      %v2382 = vunpack.c.l.b16 %v2026
      %v2383 = vunpack.c.l.b16 %v2027
      %v2384 = vunpack.c.h.b16 %v2027
      %v2385 = vunpack.c.l.b16 %v2028
      %v2386 = vunpack.c.h.b16 %v2028
      %v2387 = vunpack.c.l.b16 %v2029
      %v2388 = vunpack.c.h.b16 %v2029
      %v2389 = vunpack.c.l.b16 %v2030
      %v2390 = vunpack.c.h.b16 %v2030
      %v2391 = vunpack.c.l.b16 %v2031
      %v2392 = vunpack.c.l.b16 %v2032
      %v2393 = vunpack.c.h.b16 %v2032
      %v2394 = vunpack.c.l.b16 %v2033
      %v2395 = vunpack.c.h.b16 %v2033
      %v2396 = vunpack.c.l.b16 %v2034
      %v2397 = vunpack.c.h.b16 %v2034
      %v2398 = vunpack.c.l.b16 %v2035
      %v2399 = vunpack.c.h.b16 %v2035
      %v2400 = vunpack.c.l.b16 %v2036
      %v2401 = vunpack.c.l.b16 %v2037
      %v2402 = vunpack.c.h.b16 %v2037
      %v2403 = vunpack.c.l.b16 %v2038
      %v2404 = vunpack.c.h.b16 %v2038
      %v2405 = vunpack.c.l.b16 %v2039
      %v2406 = vunpack.c.h.b16 %v2039
      %v2407 = vunpack.c.l.b16 %v2040
      %v2408 = vunpack.c.h.b16 %v2040
      %v2409 = vunpack.c.l.b16 %v2041
      %v2410 = vpack.c.b16 %v2275, %v2266
      %v2411 = vpack.c.b16 %v2276, %v2267
      %v2412 = vpack.c.b16 %v2277, %v2268
      %v2413 = vpack.c.b16 %v2278, %v2269
      %v2414 = vpack.c.b16 %v2279, %v2270
      %v2415 = vpack.c.b16 %v2280, %v2271
      %v2416 = vpack.c.b16 %v2281, %v2272
      %v2417 = vpack.c.b16 %v2282, %v2273
      %v2418 = vpack.c.b16 %v2283, %v2274
      %v2419 = vpack.c.b16 %v2293, %v2284
      %v2420 = vpack.c.b16 %v2294, %v2285
      %v2421 = vpack.c.b16 %v2295, %v2286
      %v2422 = vpack.c.b16 %v2296, %v2287
      %v2423 = vpack.c.b16 %v2297, %v2288
      %v2424 = vpack.c.b16 %v2298, %v2289
      %v2425 = vpack.c.b16 %v2299, %v2290
      %v2426 = vpack.c.b16 %v2300, %v2291
      %v2427 = vpack.c.b16 %v2301, %v2292
      %v2428 = vpack.c.b16 %v2311, %v2302
      %v2429 = vpack.c.b16 %v2312, %v2303
      %v2430 = vpack.c.b16 %v2313, %v2304
      %v2431 = vpack.c.b16 %v2314, %v2305
      %v2432 = vpack.c.b16 %v2315, %v2306
      %v2433 = vpack.c.b16 %v2316, %v2307
      %v2434 = vpack.c.b16 %v2317, %v2308
      %v2435 = vpack.c.b16 %v2318, %v2309
      %v2436 = vpack.c.b16 %v2319, %v2310
      %v2437 = vpack.c.b16 %v2329, %v2320
      %v2438 = vpack.c.b16 %v2330, %v2321
      %v2439 = vpack.c.b16 %v2331, %v2322
      %v2440 = vpack.c.b16 %v2332, %v2323
      %v2441 = vpack.c.b16 %v2333, %v2324
      %v2442 = vpack.c.b16 %v2334, %v2325
      %v2443 = vpack.c.b16 %v2335, %v2326
      %v2444 = vpack.c.b16 %v2336, %v2327
      %v2445 = vpack.c.b16 %v2337, %v2328
      %v2446 = vpack.c.b16 %v2347, %v2338
      %v2447 = vpack.c.b16 %v2348, %v2339
      %v2448 = vpack.c.b16 %v2349, %v2340
      %v2449 = vpack.c.b16 %v2350, %v2341
      %v2450 = vpack.c.b16 %v2351, %v2342
      %v2451 = vpack.c.b16 %v2352, %v2343
      %v2452 = vpack.c.b16 %v2353, %v2344
      %v2453 = vpack.c.b16 %v2354, %v2345
      %v2454 = vpack.c.b16 %v2355, %v2346
      %v2455 = vpack.c.b16 %v2365, %v2356
      %v2456 = vpack.c.b16 %v2366, %v2357
      %v2457 = vpack.c.b16 %v2367, %v2358
      %v2458 = vpack.c.b16 %v2368, %v2359
      %v2459 = vpack.c.b16 %v2369, %v2360
      %v2460 = vpack.c.b16 %v2370, %v2361
      %v2461 = vpack.c.b16 %v2371, %v2362
      %v2462 = vpack.c.b16 %v2372, %v2363
      %v2463 = vpack.c.b16 %v2373, %v2364
      %v2464 = vpack.c.b16 %v2383, %v2374
      %v2465 = vpack.c.b16 %v2384, %v2375
      %v2466 = vpack.c.b16 %v2385, %v2376
      %v2467 = vpack.c.b16 %v2386, %v2377
      %v2468 = vpack.c.b16 %v2387, %v2378
      %v2469 = vpack.c.b16 %v2388, %v2379
      %v2470 = vpack.c.b16 %v2389, %v2380
      %v2471 = vpack.c.b16 %v2390, %v2381
      %v2472 = vpack.c.b16 %v2391, %v2382
      %v2473 = vpack.c.b16 %v2401, %v2392
      %v2474 = vpack.c.b16 %v2402, %v2393
      %v2475 = vpack.c.b16 %v2403, %v2394
      %v2476 = vpack.c.b16 %v2404, %v2395
      %v2477 = vpack.c.b16 %v2405, %v2396
      %v2478 = vpack.c.b16 %v2406, %v2397
      %v2479 = vpack.c.b16 %v2407, %v2398
      %v2480 = vpack.c.b16 %v2408, %v2399
      %v2481 = vpack.c.b16 %v2409, %v2400
      %v2698 = vunpack.c.l.b16 %v2042
      %v2699 = vunpack.c.l.b16 %v2043
      %v2700 = vunpack.c.l.b16 %v2044
      %v2701 = vunpack.c.l.b16 %v2045
      %v2702 = vunpack.c.l.b16 %v2046
      %v2703 = vunpack.c.l.b16 %v2047
      %v2704 = vunpack.c.l.b16 %v2048
      %v2705 = vunpack.c.l.b16 %v2049
      %v2706 = vunpack.c.l.b16 %v2050
      %v2707 = vunpack.c.l.b16 %v2051
      %v2708 = vunpack.c.l.b16 %v2052
      %v2709 = vunpack.c.l.b16 %v2053
      %v2710 = vunpack.c.l.b16 %v2054
      %v2711 = vunpack.c.l.b16 %v2055
      %v2712 = vunpack.c.l.b16 %v2056
      %v2713 = vunpack.c.l.b16 %v2057
      %v2714 = vunpack.c.l.b16 %v2058
      %v2715 = vunpack.c.l.b16 %v2059
      %v2716 = vunpack.c.l.b16 %v2060
      %v2717 = vunpack.c.l.b16 %v2061
      %v2718 = vunpack.c.l.b16 %v2062
      %v2719 = vunpack.c.l.b16 %v2063
      %v2720 = vunpack.c.l.b16 %v2064
      %v2721 = vunpack.c.l.b16 %v2065
      %v2722 = vunpack.c.l.b16 %v2066
      %v2723 = vunpack.c.l.b16 %v2067
      %v2724 = vunpack.c.l.b16 %v2068
      %v2725 = vunpack.c.l.b16 %v2069
      %v2726 = vunpack.c.l.b16 %v2070
      %v2727 = vunpack.c.l.b16 %v2071
      %v2728 = vunpack.c.l.b16 %v2072
      %v2729 = vunpack.c.l.b16 %v2073
      %v2730 = vunpack.c.l.b16 %v2074
      %v2731 = vunpack.c.l.b16 %v2075
      %v2732 = vunpack.c.l.b16 %v2076
      %v2733 = vunpack.c.l.b16 %v2077
      %v2734 = vunpack.c.l.b16 %v2078
      %v2735 = vunpack.c.l.b16 %v2079
      %v2736 = vunpack.c.l.b16 %v2080
      %v2737 = vunpack.c.l.b16 %v2081
      %v2738 = vunpack.c.l.b16 %v2082
      %v2739 = vunpack.c.l.b16 %v2083
      %v2740 = vunpack.c.l.b16 %v2084
      %v2741 = vunpack.c.l.b16 %v2085
      %v2742 = vunpack.c.l.b16 %v2086
      %v2743 = vunpack.c.l.b16 %v2087
      %v2744 = vunpack.c.l.b16 %v2088
      %v2745 = vunpack.c.l.b16 %v2089
      %v2746 = vunpack.c.l.b16 %v2090
      %v2747 = vunpack.c.l.b16 %v2091
      %v2748 = vunpack.c.l.b16 %v2092
      %v2749 = vunpack.c.l.b16 %v2093
      %v2750 = vunpack.c.l.b16 %v2094
      %v2751 = vunpack.c.l.b16 %v2095
      %v2752 = vunpack.c.l.b16 %v2096
      %v2753 = vunpack.c.l.b16 %v2097
      %v2754 = vunpack.c.l.b16 %v2098
      %v2755 = vunpack.c.l.b16 %v2099
      %v2756 = vunpack.c.l.b16 %v2100
      %v2757 = vunpack.c.l.b16 %v2101
      %v2758 = vunpack.c.l.b16 %v2102
      %v2759 = vunpack.c.l.b16 %v2103
      %v2760 = vunpack.c.l.b16 %v2104
      %v2761 = vunpack.c.l.b16 %v2105
      %v2762 = vunpack.c.l.b16 %v2106
      %v2763 = vunpack.c.l.b16 %v2107
      %v2764 = vunpack.c.l.b16 %v2108
      %v2765 = vunpack.c.l.b16 %v2109
      %v2766 = vunpack.c.l.b16 %v2110
      %v2767 = vunpack.c.l.b16 %v2111
      %v2768 = vunpack.c.l.b16 %v2112
      %v2769 = vunpack.c.l.b16 %v2113
      %v2770 = vunpack.c.l.b16 %v2114
      %v2771 = vunpack.c.l.b16 %v2115
      %v2772 = vunpack.c.l.b16 %v2116
      %v2773 = vunpack.c.l.b16 %v2117
      %v2774 = vunpack.c.l.b16 %v2118
      %v2775 = vunpack.c.l.b16 %v2119
      %v2776 = vunpack.c.l.b16 %v2120
      %v2777 = vunpack.c.l.b16 %v2121
      %v2778 = vunpack.c.l.b16 %v2122
      %v2779 = vunpack.c.l.b16 %v2123
      %v2780 = vunpack.c.l.b16 %v2124
      %v2781 = vunpack.c.l.b16 %v2125
      %v2782 = vunpack.c.l.b16 %v2126
      %v2783 = vunpack.c.l.b16 %v2127
      %v2784 = vunpack.c.l.b16 %v2128
      %v2785 = vunpack.c.l.b16 %v2129
      %v2786 = vunpack.c.l.b16 %v2130
      %v2787 = vunpack.c.l.b16 %v2131
      %v2788 = vunpack.c.l.b16 %v2132
      %v2789 = vunpack.c.l.b16 %v2133
      %v2790 = vunpack.c.l.b16 %v2134
      %v2791 = vunpack.c.l.b16 %v2135
      %v2792 = vunpack.c.l.b16 %v2136
      %v2793 = vunpack.c.l.b16 %v2137
      %v2794 = vunpack.c.l.b16 %v2138
      %v2795 = vunpack.c.l.b16 %v2139
      %v2796 = vunpack.c.l.b16 %v2140
      %v2797 = vunpack.c.l.b16 %v2141
      %v2798 = vunpack.c.l.b16 %v2142
      %v2799 = vunpack.c.l.b16 %v2143
      %v2800 = vunpack.c.l.b16 %v2144
      %v2801 = vunpack.c.l.b16 %v2145
      %v2802 = vunpack.c.l.b16 %v2146
      %v2803 = vunpack.c.l.b16 %v2147
      %v2804 = vunpack.c.l.b16 %v2148
      %v2805 = vunpack.c.l.b16 %v2149
      %v2806 = vunpack.c.l.b16 %v2150
      %v2807 = vunpack.c.l.b16 %v2151
      %v2808 = vunpack.c.l.b16 %v2152
      %v2809 = vunpack.c.l.b16 %v2153
      %v2810 = vunpack.c.l.b16 %v2154
      %v2811 = vunpack.c.l.b16 %v2155
      %v2812 = vunpack.c.l.b16 %v2156
      %v2813 = vunpack.c.l.b16 %v2157
      %v2814 = vunpack.c.l.b16 %v2158
      %v2815 = vunpack.c.l.b16 %v2159
      %v2816 = vunpack.c.l.b16 %v2160
      %v2817 = vunpack.c.l.b16 %v2161
      %v2818 = vunpack.c.l.b16 %v2162
      %v2819 = vunpack.c.l.b16 %v2163
      %v2820 = vunpack.c.l.b16 %v2164
      %v2821 = vunpack.c.l.b16 %v2165
      %v2822 = vunpack.c.l.b16 %v2166
      %v2823 = vunpack.c.l.b16 %v2167
      %v2824 = vunpack.c.l.b16 %v2168
      %v2825 = vunpack.c.l.b16 %v2169
      %v2826 = vunpack.c.l.b16 %v2170
      %v2827 = vunpack.c.l.b16 %v2171
      %v2828 = vunpack.c.l.b16 %v2172
      %v2829 = vunpack.c.l.b16 %v2173
      %v2830 = vunpack.c.l.b16 %v2174
      %v2831 = vunpack.c.l.b16 %v2175
      %v2832 = vunpack.c.l.b16 %v2176
      %v2833 = vunpack.c.l.b16 %v2177
      %v2834 = vunpack.c.l.b16 %v2178
      %v2835 = vunpack.c.l.b16 %v2179
      %v2836 = vunpack.c.l.b16 %v2180
      %v2837 = vunpack.c.l.b16 %v2181
      %v2838 = vunpack.c.l.b16 %v2182
      %v2839 = vunpack.c.l.b16 %v2183
      %v2840 = vunpack.c.l.b16 %v2184
      %v2841 = vunpack.c.l.b16 %v2185
      %v2842 = vpack.c.b16 %v2699, %v2698
      %v2843 = vpack.c.b16 %v2701, %v2700
      %v2844 = vpack.c.b16 %v2703, %v2702
      %v2845 = vpack.c.b16 %v2705, %v2704
      %v2846 = vpack.c.b16 %v2707, %v2706
      %v2847 = vpack.c.b16 %v2709, %v2708
      %v2848 = vpack.c.b16 %v2711, %v2710
      %v2849 = vpack.c.b16 %v2713, %v2712
      %v2850 = vpack.c.b16 %v2715, %v2714
      %v2851 = vpack.c.b16 %v2717, %v2716
      %v2852 = vpack.c.b16 %v2719, %v2718
      %v2853 = vpack.c.b16 %v2721, %v2720
      %v2854 = vpack.c.b16 %v2723, %v2722
      %v2855 = vpack.c.b16 %v2725, %v2724
      %v2856 = vpack.c.b16 %v2727, %v2726
      %v2857 = vpack.c.b16 %v2729, %v2728
      %v2858 = vpack.c.b16 %v2731, %v2730
      %v2859 = vpack.c.b16 %v2733, %v2732
      %v2860 = vpack.c.b16 %v2735, %v2734
      %v2861 = vpack.c.b16 %v2737, %v2736
      %v2862 = vpack.c.b16 %v2739, %v2738
      %v2863 = vpack.c.b16 %v2741, %v2740
      %v2864 = vpack.c.b16 %v2743, %v2742
      %v2865 = vpack.c.b16 %v2745, %v2744
      %v2866 = vpack.c.b16 %v2747, %v2746
      %v2867 = vpack.c.b16 %v2749, %v2748
      %v2868 = vpack.c.b16 %v2751, %v2750
      %v2869 = vpack.c.b16 %v2753, %v2752
      %v2870 = vpack.c.b16 %v2755, %v2754
      %v2871 = vpack.c.b16 %v2757, %v2756
      %v2872 = vpack.c.b16 %v2759, %v2758
      %v2873 = vpack.c.b16 %v2761, %v2760
      %v2874 = vpack.c.b16 %v2763, %v2762
      %v2875 = vpack.c.b16 %v2765, %v2764
      %v2876 = vpack.c.b16 %v2767, %v2766
      %v2877 = vpack.c.b16 %v2769, %v2768
      %v2878 = vpack.c.b16 %v2771, %v2770
      %v2879 = vpack.c.b16 %v2773, %v2772
      %v2880 = vpack.c.b16 %v2775, %v2774
      %v2881 = vpack.c.b16 %v2777, %v2776
      %v2882 = vpack.c.b16 %v2779, %v2778
      %v2883 = vpack.c.b16 %v2781, %v2780
      %v2884 = vpack.c.b16 %v2783, %v2782
      %v2885 = vpack.c.b16 %v2785, %v2784
      %v2886 = vpack.c.b16 %v2787, %v2786
      %v2887 = vpack.c.b16 %v2789, %v2788
      %v2888 = vpack.c.b16 %v2791, %v2790
      %v2889 = vpack.c.b16 %v2793, %v2792
      %v2890 = vpack.c.b16 %v2795, %v2794
      %v2891 = vpack.c.b16 %v2797, %v2796
      %v2892 = vpack.c.b16 %v2799, %v2798
      %v2893 = vpack.c.b16 %v2801, %v2800
      %v2894 = vpack.c.b16 %v2803, %v2802
      %v2895 = vpack.c.b16 %v2805, %v2804
      %v2896 = vpack.c.b16 %v2807, %v2806
      %v2897 = vpack.c.b16 %v2809, %v2808
      %v2898 = vpack.c.b16 %v2811, %v2810
      %v2899 = vpack.c.b16 %v2813, %v2812
      %v2900 = vpack.c.b16 %v2815, %v2814
      %v2901 = vpack.c.b16 %v2817, %v2816
      %v2902 = vpack.c.b16 %v2819, %v2818
      %v2903 = vpack.c.b16 %v2821, %v2820
      %v2904 = vpack.c.b16 %v2823, %v2822
      %v2905 = vpack.c.b16 %v2825, %v2824
      %v2906 = vpack.c.b16 %v2827, %v2826
      %v2907 = vpack.c.b16 %v2829, %v2828
      %v2908 = vpack.c.b16 %v2831, %v2830
      %v2909 = vpack.c.b16 %v2833, %v2832
      %v2910 = vpack.c.b16 %v2835, %v2834
      %v2911 = vpack.c.b16 %v2837, %v2836
      %v2912 = vpack.c.b16 %v2839, %v2838
      %v2913 = vpack.c.b16 %v2841, %v2840
      %2986 = vmatprep.subr.bf16.mxu0 0
      %2987 = vmatpush1.bf16.msra.mxu0 %v2849
      %2988 = vmatprep.subr.bf16.mxu0 0
      %2989 = vmatpush1.bf16.msra.mxu0 %v2848
      %2990 = vmatprep.subr.bf16.mxu0 0
      %2991 = vmatpush1.bf16.msra.mxu0 %v2847
      %2992 = vmatprep.subr.bf16.mxu0 0
      %2993 = vmatpush1.bf16.msra.mxu0 %v2846
      %2994 = vmatprep.subr.bf16.mxu0 0
      %2995 = vmatpush1.bf16.msra.mxu0 %v2845
      %2996 = vmatprep.subr.bf16.mxu0 0
      %2997 = vmatpush1.bf16.msra.mxu0 %v2844
      %2998 = vmatprep.subr.bf16.mxu0 0
      %2999 = vmatpush1.bf16.msra.mxu0 %v2843
      %3000 = vmatprep.subr.bf16.mxu0 0
      %3001 = vmatpush1.bf16.msra.mxu0 %v2842
      %3002 = vmatprep.subr.bf16.mxu0 0
      %3003 = vmatpush2.bf16.msra.mxu0 %v2857
      %3004 = vmatprep.subr.bf16.mxu0 0
      %3005 = vmatpush2.bf16.msra.mxu0 %v2856
      %3006 = vmatprep.subr.bf16.mxu0 0
      %3007 = vmatpush2.bf16.msra.mxu0 %v2855
      %3008 = vmatprep.subr.bf16.mxu0 0
      %3009 = vmatpush2.bf16.msra.mxu0 %v2854
      %3010 = vmatprep.subr.bf16.mxu0 0
      %3011 = vmatpush2.bf16.msra.mxu0 %v2853
      %3012 = vmatprep.subr.bf16.mxu0 0
      %3013 = vmatpush2.bf16.msra.mxu0 %v2852
      %3014 = vmatprep.subr.bf16.mxu0 0
      %3015 = vmatpush2.bf16.msra.mxu0 %v2851
      %3016 = vmatprep.subr.bf16.mxu0 0
      %3017 = vmatpush2.bf16.msra.mxu0 %v2850
      %3018 = vmatprep.mubr.bf16.mxu0 %v2411
      %3019 = vmatmul.mubr.bf16.gmra.mxu0 %v2410
      %v3020 = vpop.f32.mrf.mxu0
      %v3021 = vadd.f32 0.0, %v3020
      %v3022 = vpop.f32.mrf.mxu0
      %v3023 = vpop.f32.mrf.mxu0
      %v3024 = vadd.f32 0.0, %v3023
      %v3025 = vpop.f32.mrf.mxu0
      %3026 = vmatprep.mubr.bf16.mxu0 %v2420
      %3027 = vmatmul.mubr.bf16.gmra.mxu0 %v2419
      %v3028 = vpop.f32.mrf.mxu0
      %v3029 = vadd.f32 0.0, %v3028
      %v3030 = vpop.f32.mrf.mxu0
      %v3031 = vpop.f32.mrf.mxu0
      %v3032 = vadd.f32 0.0, %v3031
      %v3033 = vpop.f32.mrf.mxu0
      %3034 = vmatprep.mubr.bf16.mxu0 %v2429
      %3035 = vmatmul.mubr.bf16.gmra.mxu0 %v2428
      %v3036 = vpop.f32.mrf.mxu0
      %v3037 = vadd.f32 0.0, %v3036
      %v3038 = vpop.f32.mrf.mxu0
      %v3039 = vpop.f32.mrf.mxu0
      %v3040 = vadd.f32 0.0, %v3039
      %v3041 = vpop.f32.mrf.mxu0
      %3042 = vmatprep.mubr.bf16.mxu0 %v2438
      %3043 = vmatmul.mubr.bf16.gmra.mxu0 %v2437
      %v3044 = vpop.f32.mrf.mxu0
      %v3045 = vadd.f32 0.0, %v3044
      %v3046 = vpop.f32.mrf.mxu0
      %v3047 = vpop.f32.mrf.mxu0
      %v3048 = vadd.f32 0.0, %v3047
      %v3049 = vpop.f32.mrf.mxu0
      %3050 = vmatprep.mubr.bf16.mxu0 %v2447
      %3051 = vmatmul.mubr.bf16.gmra.mxu0 %v2446
      %v3052 = vpop.f32.mrf.mxu0
      %v3053 = vadd.f32 0.0, %v3052
      %v3054 = vpop.f32.mrf.mxu0
      %v3055 = vpop.f32.mrf.mxu0
      %v3056 = vadd.f32 0.0, %v3055
      %v3057 = vpop.f32.mrf.mxu0
      %3058 = vmatprep.mubr.bf16.mxu0 %v2456
      %3059 = vmatmul.mubr.bf16.gmra.mxu0 %v2455
      %v3060 = vpop.f32.mrf.mxu0
      %v3061 = vadd.f32 0.0, %v3060
      %v3062 = vpop.f32.mrf.mxu0
      %v3063 = vpop.f32.mrf.mxu0
      %v3064 = vadd.f32 0.0, %v3063
      %v3065 = vpop.f32.mrf.mxu0
      %3066 = vmatprep.mubr.bf16.mxu0 %v2465
      %3067 = vmatmul.mubr.bf16.gmra.mxu0 %v2464
      %v3068 = vpop.f32.mrf.mxu0
      %v3069 = vadd.f32 0.0, %v3068
      %v3070 = vpop.f32.mrf.mxu0
      %v3071 = vpop.f32.mrf.mxu0
      %v3072 = vadd.f32 0.0, %v3071
      %v3073 = vpop.f32.mrf.mxu0
      %3074 = vmatprep.mubr.bf16.mxu0 %v2474
      %3075 = vmatmul.mubr.bf16.gmra.mxu0 %v2473
      %v3076 = vpop.f32.mrf.mxu0
      %v3077 = vadd.f32 0.0, %v3076
      %v3078 = vpop.f32.mrf.mxu0
      %v3079 = vpop.f32.mrf.mxu0
      %v3080 = vadd.f32 0.0, %v3079
      %v3081 = vpop.f32.mrf.mxu0
      %3082 = vdwg.mxu0
      %3083 = vmatprep.subr.bf16.mxu0 0
      %3084 = vmatpush1.bf16.msra.mxu0 %v2865
      %3085 = vmatprep.subr.bf16.mxu0 0
      %3086 = vmatpush1.bf16.msra.mxu0 %v2864
      %3087 = vmatprep.subr.bf16.mxu0 0
      %3088 = vmatpush1.bf16.msra.mxu0 %v2863
      %3089 = vmatprep.subr.bf16.mxu0 0
      %3090 = vmatpush1.bf16.msra.mxu0 %v2862
      %3091 = vmatprep.subr.bf16.mxu0 0
      %3092 = vmatpush1.bf16.msra.mxu0 %v2861
      %3093 = vmatprep.subr.bf16.mxu0 0
      %3094 = vmatpush1.bf16.msra.mxu0 %v2860
      %3095 = vmatprep.subr.bf16.mxu0 0
      %3096 = vmatpush1.bf16.msra.mxu0 %v2859
      %3097 = vmatprep.subr.bf16.mxu0 0
      %3098 = vmatpush1.bf16.msra.mxu0 %v2858
      %3099 = vmatprep.subr.bf16.mxu0 0
      %3100 = vmatpush2.bf16.msra.mxu0 %v2873
      %3101 = vmatprep.subr.bf16.mxu0 0
      %3102 = vmatpush2.bf16.msra.mxu0 %v2872
      %3103 = vmatprep.subr.bf16.mxu0 0
      %3104 = vmatpush2.bf16.msra.mxu0 %v2871
      %3105 = vmatprep.subr.bf16.mxu0 0
      %3106 = vmatpush2.bf16.msra.mxu0 %v2870
      %3107 = vmatprep.subr.bf16.mxu0 0
      %3108 = vmatpush2.bf16.msra.mxu0 %v2869
      %3109 = vmatprep.subr.bf16.mxu0 0
      %3110 = vmatpush2.bf16.msra.mxu0 %v2868
      %3111 = vmatprep.subr.bf16.mxu0 0
      %3112 = vmatpush2.bf16.msra.mxu0 %v2867
      %3113 = vmatprep.subr.bf16.mxu0 0
      %3114 = vmatpush2.bf16.msra.mxu0 %v2866
      %3115 = vmatprep.mubr.bf16.mxu0 %v2413
      %3116 = vmatmul.mubr.bf16.gmra.mxu0 %v2412
      %v3117 = vpop.f32.mrf.mxu0
      %v3118 = vadd.f32 %v3021, %v3117
      %v3119 = vpop.f32.mrf.mxu0
      %v3120 = vpop.f32.mrf.mxu0
      %v3121 = vadd.f32 %v3024, %v3120
      %v3122 = vpop.f32.mrf.mxu0
      %3123 = vmatprep.mubr.bf16.mxu0 %v2422
      %3124 = vmatmul.mubr.bf16.gmra.mxu0 %v2421
      %v3125 = vpop.f32.mrf.mxu0
      %v3126 = vadd.f32 %v3029, %v3125
      %v3127 = vpop.f32.mrf.mxu0
      %v3128 = vpop.f32.mrf.mxu0
      %v3129 = vadd.f32 %v3032, %v3128
      %v3130 = vpop.f32.mrf.mxu0
      %3131 = vmatprep.mubr.bf16.mxu0 %v2431
      %3132 = vmatmul.mubr.bf16.gmra.mxu0 %v2430
      %v3133 = vpop.f32.mrf.mxu0
      %v3134 = vadd.f32 %v3037, %v3133
      %v3135 = vpop.f32.mrf.mxu0
      %v3136 = vpop.f32.mrf.mxu0
      %v3137 = vadd.f32 %v3040, %v3136
      %v3138 = vpop.f32.mrf.mxu0
      %3139 = vmatprep.mubr.bf16.mxu0 %v2440
      %3140 = vmatmul.mubr.bf16.gmra.mxu0 %v2439
      %v3141 = vpop.f32.mrf.mxu0
      %v3142 = vadd.f32 %v3045, %v3141
      %v3143 = vpop.f32.mrf.mxu0
      %v3144 = vpop.f32.mrf.mxu0
      %v3145 = vadd.f32 %v3048, %v3144
      %v3146 = vpop.f32.mrf.mxu0
      %3147 = vmatprep.mubr.bf16.mxu0 %v2449
      %3148 = vmatmul.mubr.bf16.gmra.mxu0 %v2448
      %v3149 = vpop.f32.mrf.mxu0
      %v3150 = vadd.f32 %v3053, %v3149
      %v3151 = vpop.f32.mrf.mxu0
      %v3152 = vpop.f32.mrf.mxu0
      %v3153 = vadd.f32 %v3056, %v3152
      %v3154 = vpop.f32.mrf.mxu0
      %3155 = vmatprep.mubr.bf16.mxu0 %v2458
      %3156 = vmatmul.mubr.bf16.gmra.mxu0 %v2457
      %v3157 = vpop.f32.mrf.mxu0
      %v3158 = vadd.f32 %v3061, %v3157
      %v3159 = vpop.f32.mrf.mxu0
      %v3160 = vpop.f32.mrf.mxu0
      %v3161 = vadd.f32 %v3064, %v3160
      %v3162 = vpop.f32.mrf.mxu0
      %3163 = vmatprep.mubr.bf16.mxu0 %v2467
      %3164 = vmatmul.mubr.bf16.gmra.mxu0 %v2466
      %v3165 = vpop.f32.mrf.mxu0
      %v3166 = vadd.f32 %v3069, %v3165
      %v3167 = vpop.f32.mrf.mxu0
      %v3168 = vpop.f32.mrf.mxu0
      %v3169 = vadd.f32 %v3072, %v3168
      %v3170 = vpop.f32.mrf.mxu0
      %3171 = vmatprep.mubr.bf16.mxu0 %v2476
      %3172 = vmatmul.mubr.bf16.gmra.mxu0 %v2475
      %v3173 = vpop.f32.mrf.mxu0
      %v3174 = vadd.f32 %v3077, %v3173
      %v3175 = vpop.f32.mrf.mxu0
      %v3176 = vpop.f32.mrf.mxu0
      %v3177 = vadd.f32 %v3080, %v3176
      %v3178 = vpop.f32.mrf.mxu0
      %3179 = vdwg.mxu0
      %3180 = vmatprep.subr.bf16.mxu0 0
      %3181 = vmatpush1.bf16.msra.mxu0 %v2881
      %3182 = vmatprep.subr.bf16.mxu0 0
      %3183 = vmatpush1.bf16.msra.mxu0 %v2880
      %3184 = vmatprep.subr.bf16.mxu0 0
      %3185 = vmatpush1.bf16.msra.mxu0 %v2879
      %3186 = vmatprep.subr.bf16.mxu0 0
      %3187 = vmatpush1.bf16.msra.mxu0 %v2878
      %3188 = vmatprep.subr.bf16.mxu0 0
      %3189 = vmatpush1.bf16.msra.mxu0 %v2877
      %3190 = vmatprep.subr.bf16.mxu0 0
      %3191 = vmatpush1.bf16.msra.mxu0 %v2876
      %3192 = vmatprep.subr.bf16.mxu0 0
      %3193 = vmatpush1.bf16.msra.mxu0 %v2875
      %3194 = vmatprep.subr.bf16.mxu0 0
      %3195 = vmatpush1.bf16.msra.mxu0 %v2874
      %3196 = vmatprep.subr.bf16.mxu0 0
      %3197 = vmatpush2.bf16.msra.mxu0 %v2889
      %3198 = vmatprep.subr.bf16.mxu0 0
      %3199 = vmatpush2.bf16.msra.mxu0 %v2888
      %3200 = vmatprep.subr.bf16.mxu0 0
      %3201 = vmatpush2.bf16.msra.mxu0 %v2887
      %3202 = vmatprep.subr.bf16.mxu0 0
      %3203 = vmatpush2.bf16.msra.mxu0 %v2886
      %3204 = vmatprep.subr.bf16.mxu0 0
      %3205 = vmatpush2.bf16.msra.mxu0 %v2885
      %3206 = vmatprep.subr.bf16.mxu0 0
      %3207 = vmatpush2.bf16.msra.mxu0 %v2884
      %3208 = vmatprep.subr.bf16.mxu0 0
      %3209 = vmatpush2.bf16.msra.mxu0 %v2883
      %3210 = vmatprep.subr.bf16.mxu0 0
      %3211 = vmatpush2.bf16.msra.mxu0 %v2882
      %3212 = vmatprep.mubr.bf16.mxu0 %v2415
      %3213 = vmatmul.mubr.bf16.gmra.mxu0 %v2414
      %v3214 = vpop.f32.mrf.mxu0
      %v3215 = vadd.f32 %v3118, %v3214
      %v3216 = vpop.f32.mrf.mxu0
      %v3217 = vpop.f32.mrf.mxu0
      %v3218 = vadd.f32 %v3121, %v3217
      %v3219 = vpop.f32.mrf.mxu0
      %3220 = vmatprep.mubr.bf16.mxu0 %v2424
      %3221 = vmatmul.mubr.bf16.gmra.mxu0 %v2423
      %v3222 = vpop.f32.mrf.mxu0
      %v3223 = vadd.f32 %v3126, %v3222
      %v3224 = vpop.f32.mrf.mxu0
      %v3225 = vpop.f32.mrf.mxu0
      %v3226 = vadd.f32 %v3129, %v3225
      %v3227 = vpop.f32.mrf.mxu0
      %3228 = vmatprep.mubr.bf16.mxu0 %v2433
      %3229 = vmatmul.mubr.bf16.gmra.mxu0 %v2432
      %v3230 = vpop.f32.mrf.mxu0
      %v3231 = vadd.f32 %v3134, %v3230
      %v3232 = vpop.f32.mrf.mxu0
      %v3233 = vpop.f32.mrf.mxu0
      %v3234 = vadd.f32 %v3137, %v3233
      %v3235 = vpop.f32.mrf.mxu0
      %3236 = vmatprep.mubr.bf16.mxu0 %v2442
      %3237 = vmatmul.mubr.bf16.gmra.mxu0 %v2441
      %v3238 = vpop.f32.mrf.mxu0
      %v3239 = vadd.f32 %v3142, %v3238
      %v3240 = vpop.f32.mrf.mxu0
      %v3241 = vpop.f32.mrf.mxu0
      %v3242 = vadd.f32 %v3145, %v3241
      %v3243 = vpop.f32.mrf.mxu0
      %3244 = vmatprep.mubr.bf16.mxu0 %v2451
      %3245 = vmatmul.mubr.bf16.gmra.mxu0 %v2450
      %v3246 = vpop.f32.mrf.mxu0
      %v3247 = vadd.f32 %v3150, %v3246
      %v3248 = vpop.f32.mrf.mxu0
      %v3249 = vpop.f32.mrf.mxu0
      %v3250 = vadd.f32 %v3153, %v3249
      %v3251 = vpop.f32.mrf.mxu0
      %3252 = vmatprep.mubr.bf16.mxu0 %v2460
      %3253 = vmatmul.mubr.bf16.gmra.mxu0 %v2459
      %v3254 = vpop.f32.mrf.mxu0
      %v3255 = vadd.f32 %v3158, %v3254
      %v3256 = vpop.f32.mrf.mxu0
      %v3257 = vpop.f32.mrf.mxu0
      %v3258 = vadd.f32 %v3161, %v3257
      %v3259 = vpop.f32.mrf.mxu0
      %3260 = vmatprep.mubr.bf16.mxu0 %v2469
      %3261 = vmatmul.mubr.bf16.gmra.mxu0 %v2468
      %v3262 = vpop.f32.mrf.mxu0
      %v3263 = vadd.f32 %v3166, %v3262
      %v3264 = vpop.f32.mrf.mxu0
      %v3265 = vpop.f32.mrf.mxu0
      %v3266 = vadd.f32 %v3169, %v3265
      %v3267 = vpop.f32.mrf.mxu0
      %3268 = vmatprep.mubr.bf16.mxu0 %v2478
      %3269 = vmatmul.mubr.bf16.gmra.mxu0 %v2477
      %v3270 = vpop.f32.mrf.mxu0
      %v3271 = vadd.f32 %v3174, %v3270
      %v3272 = vpop.f32.mrf.mxu0
      %v3273 = vpop.f32.mrf.mxu0
      %v3274 = vadd.f32 %v3177, %v3273
      %v3275 = vpop.f32.mrf.mxu0
      %3276 = vdwg.mxu0
      %3277 = vmatprep.subr.bf16.mxu0 0
      %3278 = vmatpush1.bf16.msra.mxu0 %v2897
      %3279 = vmatprep.subr.bf16.mxu0 0
      %3280 = vmatpush1.bf16.msra.mxu0 %v2896
      %3281 = vmatprep.subr.bf16.mxu0 0
      %3282 = vmatpush1.bf16.msra.mxu0 %v2895
      %3283 = vmatprep.subr.bf16.mxu0 0
      %3284 = vmatpush1.bf16.msra.mxu0 %v2894
      %3285 = vmatprep.subr.bf16.mxu0 0
      %3286 = vmatpush1.bf16.msra.mxu0 %v2893
      %3287 = vmatprep.subr.bf16.mxu0 0
      %3288 = vmatpush1.bf16.msra.mxu0 %v2892
      %3289 = vmatprep.subr.bf16.mxu0 0
      %3290 = vmatpush1.bf16.msra.mxu0 %v2891
      %3291 = vmatprep.subr.bf16.mxu0 0
      %3292 = vmatpush1.bf16.msra.mxu0 %v2890
      %3293 = vmatprep.subr.bf16.mxu0 0
      %3294 = vmatpush2.bf16.msra.mxu0 %v2905
      %3295 = vmatprep.subr.bf16.mxu0 0
      %3296 = vmatpush2.bf16.msra.mxu0 %v2904
      %3297 = vmatprep.subr.bf16.mxu0 0
      %3298 = vmatpush2.bf16.msra.mxu0 %v2903
      %3299 = vmatprep.subr.bf16.mxu0 0
      %3300 = vmatpush2.bf16.msra.mxu0 %v2902
      %3301 = vmatprep.subr.bf16.mxu0 0
      %3302 = vmatpush2.bf16.msra.mxu0 %v2901
      %3303 = vmatprep.subr.bf16.mxu0 0
      %3304 = vmatpush2.bf16.msra.mxu0 %v2900
      %3305 = vmatprep.subr.bf16.mxu0 0
      %3306 = vmatpush2.bf16.msra.mxu0 %v2899
      %3307 = vmatprep.subr.bf16.mxu0 0
      %3308 = vmatpush2.bf16.msra.mxu0 %v2898
      %3309 = vmatprep.mubr.bf16.mxu0 %v2417
      %3310 = vmatmul.mubr.bf16.gmra.mxu0 %v2416
      %v3311 = vpop.f32.mrf.mxu0
      %v3312 = vadd.f32 %v3215, %v3311
      %v3313 = vpop.f32.mrf.mxu0
      %v3314 = vpop.f32.mrf.mxu0
      %v3315 = vadd.f32 %v3218, %v3314
      %v3316 = vpop.f32.mrf.mxu0
      %3317 = vmatprep.mubr.bf16.mxu0 %v2426
      %3318 = vmatmul.mubr.bf16.gmra.mxu0 %v2425
      %v3319 = vpop.f32.mrf.mxu0
      %v3320 = vadd.f32 %v3223, %v3319
      %v3321 = vpop.f32.mrf.mxu0
      %v3322 = vpop.f32.mrf.mxu0
      %v3323 = vadd.f32 %v3226, %v3322
      %v3324 = vpop.f32.mrf.mxu0
      %3325 = vmatprep.mubr.bf16.mxu0 %v2435
      %3326 = vmatmul.mubr.bf16.gmra.mxu0 %v2434
      %v3327 = vpop.f32.mrf.mxu0
      %v3328 = vadd.f32 %v3231, %v3327
      %v3329 = vpop.f32.mrf.mxu0
      %v3330 = vpop.f32.mrf.mxu0
      %v3331 = vadd.f32 %v3234, %v3330
      %v3332 = vpop.f32.mrf.mxu0
      %3333 = vmatprep.mubr.bf16.mxu0 %v2444
      %3334 = vmatmul.mubr.bf16.gmra.mxu0 %v2443
      %v3335 = vpop.f32.mrf.mxu0
      %v3336 = vadd.f32 %v3239, %v3335
      %v3337 = vpop.f32.mrf.mxu0
      %v3338 = vpop.f32.mrf.mxu0
      %v3339 = vadd.f32 %v3242, %v3338
      %v3340 = vpop.f32.mrf.mxu0
      %3341 = vmatprep.mubr.bf16.mxu0 %v2453
      %3342 = vmatmul.mubr.bf16.gmra.mxu0 %v2452
      %v3343 = vpop.f32.mrf.mxu0
      %v3344 = vadd.f32 %v3247, %v3343
      %v3345 = vpop.f32.mrf.mxu0
      %v3346 = vpop.f32.mrf.mxu0
      %v3347 = vadd.f32 %v3250, %v3346
      %v3348 = vpop.f32.mrf.mxu0
      %3349 = vmatprep.mubr.bf16.mxu0 %v2462
      %3350 = vmatmul.mubr.bf16.gmra.mxu0 %v2461
      %v3351 = vpop.f32.mrf.mxu0
      %v3352 = vadd.f32 %v3255, %v3351
      %v3353 = vpop.f32.mrf.mxu0
      %v3354 = vpop.f32.mrf.mxu0
      %v3355 = vadd.f32 %v3258, %v3354
      %v3356 = vpop.f32.mrf.mxu0
      %3357 = vmatprep.mubr.bf16.mxu0 %v2471
      %3358 = vmatmul.mubr.bf16.gmra.mxu0 %v2470
      %v3359 = vpop.f32.mrf.mxu0
      %v3360 = vadd.f32 %v3263, %v3359
      %v3361 = vpop.f32.mrf.mxu0
      %v3362 = vpop.f32.mrf.mxu0
      %v3363 = vadd.f32 %v3266, %v3362
      %v3364 = vpop.f32.mrf.mxu0
      %3365 = vmatprep.mubr.bf16.mxu0 %v2480
      %3366 = vmatmul.mubr.bf16.gmra.mxu0 %v2479
      %v3367 = vpop.f32.mrf.mxu0
      %v3368 = vadd.f32 %v3271, %v3367
      %v3369 = vpop.f32.mrf.mxu0
      %v3370 = vpop.f32.mrf.mxu0
      %v3371 = vadd.f32 %v3274, %v3370
      %v3372 = vpop.f32.mrf.mxu0
      %3373 = vdwg.mxu0
      %3374 = vmatprep.subr.bf16.mxu0 0
      %3375 = vmatpush1.bf16.msra.mxu0 %v2913
      %3376 = vmatprep.subr.bf16.mxu0 0
      %3377 = vmatpush1.bf16.msra.mxu0 %v2912
      %3378 = vmatprep.subr.bf16.mxu0 0
      %3379 = vmatpush1.bf16.msra.mxu0 %v2911
      %3380 = vmatprep.subr.bf16.mxu0 0
      %3381 = vmatpush1.bf16.msra.mxu0 %v2910
      %3382 = vmatprep.subr.bf16.mxu0 0
      %3383 = vmatpush1.bf16.msra.mxu0 %v2909
      %3384 = vmatprep.subr.bf16.mxu0 0
      %3385 = vmatpush1.bf16.msra.mxu0 %v2908
      %3386 = vmatprep.subr.bf16.mxu0 0
      %3387 = vmatpush1.bf16.msra.mxu0 %v2907
      %3388 = vmatprep.subr.bf16.mxu0 0
      %3389 = vmatpush1.bf16.msra.mxu0 %v2906
      %3390 = vmatprep.subr.bf16.mxu0 0
      %3391 = vmatpush2.bf16.msra.mxu0 0
      %3392 = vmatprep.subr.bf16.mxu0 0
      %3393 = vmatpush2.bf16.msra.mxu0 0
      %3394 = vmatprep.subr.bf16.mxu0 0
      %3395 = vmatpush2.bf16.msra.mxu0 0
      %3396 = vmatprep.subr.bf16.mxu0 0
      %3397 = vmatpush2.bf16.msra.mxu0 0
      %3398 = vmatprep.subr.bf16.mxu0 0
      %3399 = vmatpush2.bf16.msra.mxu0 0
      %3400 = vmatprep.subr.bf16.mxu0 0
      %3401 = vmatpush2.bf16.msra.mxu0 0
      %3402 = vmatprep.subr.bf16.mxu0 0
      %3403 = vmatpush2.bf16.msra.mxu0 0
      %3404 = vmatprep.subr.bf16.mxu0 0
      %3405 = vmatpush2.bf16.msra.mxu0 0
      %3406 = vmatprep.mubr.bf16.mxu0 0
      %3407 = vmatmul.mubr.bf16.gmra.mxu0 %v2418
      %v3408 = vpop.f32.mrf.mxu0
      %v3409 = vadd.f32 %v3312, %v3408
      %v3410 = vpop.f32.mrf.mxu0
      %v3411 = vpop.f32.mrf.mxu0
      %v3412 = vadd.f32 %v3315, %v3411
      %v3413 = vpop.f32.mrf.mxu0
      %3414 = vmatprep.mubr.bf16.mxu0 0
      %3415 = vmatmul.mubr.bf16.gmra.mxu0 %v2427
      %v3416 = vpop.f32.mrf.mxu0
      %v3417 = vadd.f32 %v3320, %v3416
      %v3418 = vpop.f32.mrf.mxu0
      %v3419 = vpop.f32.mrf.mxu0
      %v3420 = vadd.f32 %v3323, %v3419
      %v3421 = vpop.f32.mrf.mxu0
      %3422 = vmatprep.mubr.bf16.mxu0 0
      %3423 = vmatmul.mubr.bf16.gmra.mxu0 %v2436
      %v3424 = vpop.f32.mrf.mxu0
      %v3425 = vadd.f32 %v3328, %v3424
      %v3426 = vpop.f32.mrf.mxu0
      %v3427 = vpop.f32.mrf.mxu0
      %v3428 = vadd.f32 %v3331, %v3427
      %v3429 = vpop.f32.mrf.mxu0
      %3430 = vmatprep.mubr.bf16.mxu0 0
      %3431 = vmatmul.mubr.bf16.gmra.mxu0 %v2445
      %v3432 = vpop.f32.mrf.mxu0
      %v3433 = vadd.f32 %v3336, %v3432
      %v3434 = vpop.f32.mrf.mxu0
      %v3435 = vpop.f32.mrf.mxu0
      %v3436 = vadd.f32 %v3339, %v3435
      %v3437 = vpop.f32.mrf.mxu0
      %3438 = vmatprep.mubr.bf16.mxu0 0
      %3439 = vmatmul.mubr.bf16.gmra.mxu0 %v2454
      %v3440 = vpop.f32.mrf.mxu0
      %v3441 = vadd.f32 %v3344, %v3440
      %v3442 = vpop.f32.mrf.mxu0
      %v3443 = vpop.f32.mrf.mxu0
      %v3444 = vadd.f32 %v3347, %v3443
      %v3445 = vpop.f32.mrf.mxu0
      %3446 = vmatprep.mubr.bf16.mxu0 0
      %3447 = vmatmul.mubr.bf16.gmra.mxu0 %v2463
      %v3448 = vpop.f32.mrf.mxu0
      %v3449 = vadd.f32 %v3352, %v3448
      %v3450 = vpop.f32.mrf.mxu0
      %v3451 = vpop.f32.mrf.mxu0
      %v3452 = vadd.f32 %v3355, %v3451
      %v3453 = vpop.f32.mrf.mxu0
      %3454 = vmatprep.mubr.bf16.mxu0 0
      %3455 = vmatmul.mubr.bf16.gmra.mxu0 %v2472
      %v3456 = vpop.f32.mrf.mxu0
      %v3457 = vadd.f32 %v3360, %v3456
      %v3458 = vpop.f32.mrf.mxu0
      %v3459 = vpop.f32.mrf.mxu0
      %v3460 = vadd.f32 %v3363, %v3459
      %v3461 = vpop.f32.mrf.mxu0
      %3462 = vmatprep.mubr.bf16.mxu0 0
      %3463 = vmatmul.mubr.bf16.gmra.mxu0 %v2481
      %v3464 = vpop.f32.mrf.mxu0
      %v3465 = vadd.f32 %v3368, %v3464
      %v3466 = vpop.f32.mrf.mxu0
      %v3467 = vpop.f32.mrf.mxu0
      %v3468 = vadd.f32 %v3371, %v3467
      %v3469 = vpop.f32.mrf.mxu0
      %3470 = vdwg.mxu0
      %v3471 = vld [vmem:[%s2] sm:$0x1]
      %v3473 = vlaneseq
      %v3474 = vshrl.u32 %v3473, 7
      %v3475 = vsub.s32 0, %v3474
      %v3476 = vrot.slane %v3471, %v3475
      %v3478 = vmul.f32 %v3409, %v3476
      %v3479 = vmul.f32 %v3412, %v3476
      %v3480 = vmul.f32 %v3417, %v3476
      %v3481 = vmul.f32 %v3420, %v3476
      %v3482 = vmul.f32 %v3425, %v3476
      %v3483 = vmul.f32 %v3428, %v3476
      %v3484 = vmul.f32 %v3433, %v3476
      %v3485 = vmul.f32 %v3436, %v3476
      %v3486 = vmul.f32 %v3441, %v3476
      %v3487 = vmul.f32 %v3444, %v3476
      %v3488 = vmul.f32 %v3449, %v3476
      %v3489 = vmul.f32 %v3452, %v3476
      %v3490 = vmul.f32 %v3457, %v3476
      %v3491 = vmul.f32 %v3460, %v3476
      %v3492 = vmul.f32 %v3465, %v3476
      %v3493 = vmul.f32 %v3468, %v3476
      %v3494 = vld [vmem:[%s3] sm:$0x1]
      %v3496 = vlaneseq
      %v3497 = vshrl.u32 %v3496, 7
      %v3498 = vsub.s32 0, %v3497
      %v3499 = vrot.slane %v3494, %v3498
      %v3501 = vadd.f32 %v3478, %v3499
      %v3502 = vadd.f32 %v3479, %v3499
      %v3503 = vadd.f32 %v3480, %v3499
      %v3504 = vadd.f32 %v3481, %v3499
      %v3505 = vadd.f32 %v3482, %v3499
      %v3506 = vadd.f32 %v3483, %v3499
      %v3507 = vadd.f32 %v3484, %v3499
      %v3508 = vadd.f32 %v3485, %v3499
      %v3509 = vadd.f32 %v3486, %v3499
      %v3510 = vadd.f32 %v3487, %v3499
      %v3511 = vadd.f32 %v3488, %v3499
      %v3512 = vadd.f32 %v3489, %v3499
      %v3513 = vadd.f32 %v3490, %v3499
      %v3514 = vadd.f32 %v3491, %v3499
      %v3515 = vadd.f32 %v3492, %v3499
      %v3516 = vadd.f32 %v3493, %v3499
      %v3517 = vxor.u32 %v3501, 2147483648
      %v3518 = vxor.u32 %v3502, 2147483648
      %v3519 = vxor.u32 %v3503, 2147483648
      %v3520 = vxor.u32 %v3504, 2147483648
      %v3521 = vxor.u32 %v3505, 2147483648
      %v3522 = vxor.u32 %v3506, 2147483648
      %v3523 = vxor.u32 %v3507, 2147483648
      %v3524 = vxor.u32 %v3508, 2147483648
      %v3525 = vxor.u32 %v3509, 2147483648
      %v3526 = vxor.u32 %v3510, 2147483648
      %v3527 = vxor.u32 %v3511, 2147483648
      %v3528 = vxor.u32 %v3512, 2147483648
      %v3529 = vxor.u32 %v3513, 2147483648
      %v3530 = vxor.u32 %v3514, 2147483648
      %v3531 = vxor.u32 %v3515, 2147483648
      %v3532 = vxor.u32 %v3516, 2147483648
      %v3533 = vmul.f32 %v3517, 1.442695
      %v3534 = vpow.pop %v3533
      %v3535 = vmul.f32 %v3518, 1.442695
      %v3536 = vpow.pop %v3535
      %v3537 = vmul.f32 %v3519, 1.442695
      %v3538 = vpow.pop %v3537
      %v3539 = vmul.f32 %v3520, 1.442695
      %v3540 = vpow.pop %v3539
      %v3541 = vmul.f32 %v3521, 1.442695
      %v3542 = vpow.pop %v3541
      %v3543 = vmul.f32 %v3522, 1.442695
      %v3544 = vpow.pop %v3543
      %v3545 = vmul.f32 %v3523, 1.442695
      %v3546 = vpow.pop %v3545
      %v3547 = vmul.f32 %v3524, 1.442695
      %v3548 = vpow.pop %v3547
      %v3549 = vmul.f32 %v3525, 1.442695
      %v3550 = vpow.pop %v3549
      %v3551 = vmul.f32 %v3526, 1.442695
      %v3552 = vpow.pop %v3551
      %v3553 = vmul.f32 %v3527, 1.442695
      %v3554 = vpow.pop %v3553
      %v3555 = vmul.f32 %v3528, 1.442695
      %v3556 = vpow.pop %v3555
      %v3557 = vmul.f32 %v3529, 1.442695
      %v3558 = vpow.pop %v3557
      %v3559 = vmul.f32 %v3530, 1.442695
      %v3560 = vpow.pop %v3559
      %v3561 = vmul.f32 %v3531, 1.442695
      %v3562 = vpow.pop %v3561
      %v3563 = vmul.f32 %v3532, 1.442695
      %v3564 = vpow.pop %v3563
      %v3565 = vadd.f32 %v3534, 1.0
      %v3566 = vadd.f32 %v3536, 1.0
      %v3567 = vadd.f32 %v3538, 1.0
      %v3568 = vadd.f32 %v3540, 1.0
      %v3569 = vadd.f32 %v3542, 1.0
      %v3570 = vadd.f32 %v3544, 1.0
      %v3571 = vadd.f32 %v3546, 1.0
      %v3572 = vadd.f32 %v3548, 1.0
      %v3573 = vadd.f32 %v3550, 1.0
      %v3574 = vadd.f32 %v3552, 1.0
      %v3575 = vadd.f32 %v3554, 1.0
      %v3576 = vadd.f32 %v3556, 1.0
      %v3577 = vadd.f32 %v3558, 1.0
      %v3578 = vadd.f32 %v3560, 1.0
      %v3579 = vadd.f32 %v3562, 1.0
      %v3580 = vadd.f32 %v3564, 1.0
      %v3581 = vrcp.pop %v3565
      %v3582 = vmul.f32 1.0, %v3581
      %v3583 = vrcp.pop %v3566
      %v3584 = vmul.f32 1.0, %v3583
      %v3585 = vrcp.pop %v3567
      %v3586 = vmul.f32 1.0, %v3585
      %v3587 = vrcp.pop %v3568
      %v3588 = vmul.f32 1.0, %v3587
      %v3589 = vrcp.pop %v3569
      %v3590 = vmul.f32 1.0, %v3589
      %v3591 = vrcp.pop %v3570
      %v3592 = vmul.f32 1.0, %v3591
      %v3593 = vrcp.pop %v3571
      %v3594 = vmul.f32 1.0, %v3593
      %v3595 = vrcp.pop %v3572
      %v3596 = vmul.f32 1.0, %v3595
      %v3597 = vrcp.pop %v3573
      %v3598 = vmul.f32 1.0, %v3597
      %v3599 = vrcp.pop %v3574
      %v3600 = vmul.f32 1.0, %v3599
      %v3601 = vrcp.pop %v3575
      %v3602 = vmul.f32 1.0, %v3601
      %v3603 = vrcp.pop %v3576
      %v3604 = vmul.f32 1.0, %v3603
      %v3605 = vrcp.pop %v3577
      %v3606 = vmul.f32 1.0, %v3605
      %v3607 = vrcp.pop %v3578
      %v3608 = vmul.f32 1.0, %v3607
      %v3609 = vrcp.pop %v3579
      %v3610 = vmul.f32 1.0, %v3609
      %v3611 = vrcp.pop %v3580
      %v3612 = vmul.f32 1.0, %v3611
      %v3613 = vmul.f32 %v3501, %v3582
      %v3614 = vmul.f32 %v3502, %v3584
      %v3615 = vmul.f32 %v3503, %v3586
      %v3616 = vmul.f32 %v3504, %v3588
      %v3617 = vmul.f32 %v3505, %v3590
      %v3618 = vmul.f32 %v3506, %v3592
      %v3619 = vmul.f32 %v3507, %v3594
      %v3620 = vmul.f32 %v3508, %v3596
      %v3621 = vmul.f32 %v3509, %v3598
      %v3622 = vmul.f32 %v3510, %v3600
      %v3623 = vmul.f32 %v3511, %v3602
      %v3624 = vmul.f32 %v3512, %v3604
      %v3625 = vmul.f32 %v3513, %v3606
      %v3626 = vmul.f32 %v3514, %v3608
      %v3627 = vmul.f32 %v3515, %v3610
      %v3628 = vmul.f32 %v3516, %v3612
      %v3629 = vpack.c.bf16 %v3614, %v3613
      %v3630 = vpack.c.bf16 %v3616, %v3615
      %v3631 = vpack.c.bf16 %v3618, %v3617
      %v3632 = vpack.c.bf16 %v3620, %v3619
      %v3633 = vpack.c.bf16 %v3622, %v3621
      %v3634 = vpack.c.bf16 %v3624, %v3623
      %v3635 = vpack.c.bf16 %v3626, %v3625
      %v3636 = vpack.c.bf16 %v3628, %v3627
      %v3645 = vunpack.c.l.b16 %v3629
      %v3646 = vunpack.c.h.b16 %v3629
      %v3647 = vunpack.c.l.b16 %v3630
      %v3648 = vunpack.c.h.b16 %v3630
      %v3649 = vunpack.c.l.b16 %v3631
      %v3650 = vunpack.c.h.b16 %v3631
      %v3651 = vunpack.c.l.b16 %v3632
      %v3652 = vunpack.c.h.b16 %v3632
      %v3653 = vunpack.c.l.b16 %v3633
      %v3654 = vunpack.c.h.b16 %v3633
      %v3655 = vunpack.c.l.b16 %v3634
      %v3656 = vunpack.c.h.b16 %v3634
      %v3657 = vunpack.c.l.b16 %v3635
      %v3658 = vunpack.c.h.b16 %v3635
      %v3659 = vunpack.c.l.b16 %v3636
      %v3660 = vunpack.c.h.b16 %v3636
      %v3661 = vpack.c.b16 %v3645, %v3645
      %v3662 = vpack.c.b16 %v3646, %v3646
      %v3663 = vpack.c.b16 %v3647, %v3647
      %v3664 = vpack.c.b16 %v3648, %v3648
      %v3665 = vpack.c.b16 %v3649, %v3649
      %v3666 = vpack.c.b16 %v3650, %v3650
      %v3667 = vpack.c.b16 %v3651, %v3651
      %v3668 = vpack.c.b16 %v3652, %v3652
      %v3669 = vpack.c.b16 %v3653, %v3653
      %v3670 = vpack.c.b16 %v3654, %v3654
      %v3671 = vpack.c.b16 %v3655, %v3655
      %v3672 = vpack.c.b16 %v3656, %v3656
      %v3673 = vpack.c.b16 %v3657, %v3657
      %v3674 = vpack.c.b16 %v3658, %v3658
      %v3675 = vpack.c.b16 %v3659, %v3659
      %v3676 = vpack.c.b16 %v3660, %v3660
      %3693 = vst [vmem:[%s268] sm:$0xf] %v3661
      %3694 = vst [vmem:[%s268 + $0x4] sm:$0xf] %v3662
      %3695 = vst [vmem:[%s268 + $0x8] sm:$0xf] %v3663
      %3696 = vst [vmem:[%s268 + $0xc] sm:$0xf] %v3664
      %3697 = vst [vmem:[%s268 + $0x10] sm:$0xf] %v3665
      %3698 = vst [vmem:[%s268 + $0x14] sm:$0xf] %v3666
      %3699 = vst [vmem:[%s268 + $0x18] sm:$0xf] %v3667
      %3700 = vst [vmem:[%s268 + $0x1c] sm:$0xf] %v3668
      %3701 = vst [vmem:[%s268 + $0x20] sm:$0xf] %v3669
      %3702 = vst [vmem:[%s268 + $0x24] sm:$0xf] %v3670
      %3703 = vst [vmem:[%s268 + $0x28] sm:$0xf] %v3671
      %3704 = vst [vmem:[%s268 + $0x2c] sm:$0xf] %v3672
      %3705 = vst [vmem:[%s268 + $0x30] sm:$0xf] %v3673
      %3706 = vst [vmem:[%s268 + $0x34] sm:$0xf] %v3674
      %3707 = vst [vmem:[%s268 + $0x38] sm:$0xf] %v3675
      %3708 = vst [vmem:[%s268 + $0x3c] sm:$0xf] %v3676
      %p3709 = scmp.eq.s32.totalorder %s22, 0
      // Predicated region
      $region37: #{temporal_attention_forward.2} parent=35 // pred_check
        %p3710 = pneg %p3709
      $region38: #{temporal_attention_forward.2} parent=35 // pred_check_branch
        %3712 = sbr.rel (%p3710) target = $region40
      $region39: #{temporal_attention_forward.2} parent=35 // pred_region
        %3713 = vst [vmem:[%s272] sm:$0x1] 0.0
      $region40: #{temporal_attention_forward.2} parent=35 // pred_fallthru
        _
      %v3714 = vld [vmem:[%s272] sm:$0x1]
      %v3715 = vadd.f32 %v3613, %v3614
      %v3716 = vadd.f32 %v3715, %v3615
      %v3717 = vadd.f32 %v3716, %v3616
      %v3718 = vadd.f32 %v3717, %v3617
      %v3719 = vadd.f32 %v3718, %v3618
      %v3720 = vadd.f32 %v3719, %v3619
      %v3721 = vadd.f32 %v3720, %v3620
      %v3722 = vadd.f32 %v3721, %v3621
      %v3723 = vadd.f32 %v3722, %v3622
      %v3724 = vadd.f32 %v3723, %v3623
      %v3725 = vadd.f32 %v3724, %v3624
      %v3726 = vadd.f32 %v3725, %v3625
      %v3727 = vadd.f32 %v3726, %v3626
      %v3728 = vadd.f32 %v3727, %v3627
      %v3729 = vadd.f32 %v3728, %v3628
      %v3730 = vrot.slane %v3729, 4
      %v3731 = vadd.f32 %v3729, %v3730
      %v3732 = vrot.slane %v3731, 2
      %v3733 = vadd.f32 %v3731, %v3732
      %v3734 = vrot.slane %v3733, 1
      %v3735 = vadd.f32 %v3733, %v3734
      %v3736 = vadd.f32 %v3714, %v3735
      %3737 = vst [vmem:[%s272] sm:$0x1] %v3736
      %s3738 = smul.u32 16, %s22
      %p3739 = scmp.lt.s32.totalorder %s21, 1
      %s3740 = scalar_select %p3739, %s21, 1
      %p3741 = scmp.lt.s32.totalorder %s3738, 31
      %s3742 = scalar_select %p3741, %s3738, 31
      %s3743 = smul.addr %s3740, 32
      %s3744 = sadd.s32 %s3742, %s3743
      %s3745 = smul.addr %s3744, 4
      %s3746 = scalar_lea.vmem %s4, %s3745
      %p3747 = scmp.lt.s32.totalorder %s21, 1
      %s3748 = scalar_select %p3747, %s21, 1
      %s3749 = scalar_lea.vmem %s5, %s3748
      // Predicated region
      $region41: #{temporal_attention_forward.2} parent=35 // pred_check
        %p3750 = pneg %p140
      $region42: #{temporal_attention_forward.2} parent=35 // pred_check_branch
        %3752 = sbr.rel (%p3750) target = $region44
      $region43: #{temporal_attention_forward.2} parent=35 // pred_region
        %s3753 = smul.u32 16, %s22
      $region44: #{temporal_attention_forward.2} parent=35 // pred_fallthru
        _
      // Predicated region
      $region45: #{temporal_attention_forward.2} parent=35 // pred_check
        %p3754 = pneg %p166
      $region46: #{temporal_attention_forward.2} parent=35 // pred_check_branch
        %3756 = sbr.rel (%p3754) target = $region48
      $region47: #{temporal_attention_forward.2} parent=35 // pred_region
        _
      $region48: #{temporal_attention_forward.2} parent=35 // pred_fallthru
        _
    $region36: #{temporal_attention_forward.2} parent=5 // pred_fallthru
      _
    %p3757 = scmp.le.s32.totalorder 2, %s12
    // Predicated region
    $region49: #{temporal_attention_forward.2} parent=5 // pred_check
      %p3758 = pneg %p3757
    $region50: #{temporal_attention_forward.2} parent=5 // pred_check_branch
      %3760 = sbr.rel (%p3758) target = $region52
    $region51: #{temporal_attention_forward.2} parent=5 // pred_region
      %s3761 = ssub.s32 %s12, 2
      // Predicated region
      $region53: #{temporal_attention_forward.2} parent=51 // pred_check
        %p3762 = pneg %p146
      $region54: #{temporal_attention_forward.2} parent=51 // pred_check_branch
        %3764 = sbr.rel (%p3762) target = $region56
      $region55: #{temporal_attention_forward.2} parent=51 // pred_region
        %s3765 = smul.u32 16, %s24
        %p3766 = scmp.lt.s32.totalorder %s23, 1
        %s3767 = scalar_select %p3766, %s23, 1
        %p3768 = scmp.lt.s32.totalorder %s3765, 31
        %s3769 = scalar_select %p3768, %s3765, 31
        %s3770 = smul.addr %s3767, 32
        %s3771 = sadd.s32 %s3769, %s3770
        %s3772 = smul.addr %s3771, 4
        %s3773 = scalar_lea.vmem %s4, %s3772
      $region56: #{temporal_attention_forward.2} parent=51 // pred_fallthru
        _
      // Predicated region
      $region57: #{temporal_attention_forward.2} parent=51 // pred_check
        %p3774 = pneg %p172
      $region58: #{temporal_attention_forward.2} parent=51 // pred_check_branch
        %3776 = sbr.rel (%p3774) target = $region60
      $region59: #{temporal_attention_forward.2} parent=51 // pred_region
        %p3777 = scmp.lt.s32.totalorder %s23, 1
        %s3778 = scalar_select %p3777, %s23, 1
        %s3779 = scalar_lea.vmem %s5, %s3778
      $region60: #{temporal_attention_forward.2} parent=51 // pred_fallthru
        _
    $region52: #{temporal_attention_forward.2} parent=5 // pred_fallthru
      _
  $region6: #{temporal_attention_forward.2} parent=0 // loop_footer
    %s16 = sadd.s32 1, %s12
  $region7: #{temporal_attention_forward.2} parent=0 // loop_footer_branch
    %11 = sbr.rel target = $region3
  $region8: #{temporal_attention_forward.2} parent=0 // loop_exit
    _

</llo_original>
